<compile_context>
chip_gen: v7x
topology: tpu7x:2x2x1
jax: 0.10.0
libtpu: 0.0.40
codegen_flags: <defaults>
</compile_context>

<pallas_src>
import functools

import numpy as np
import jax
import jax.numpy as jnp
from jax.experimental import pallas as pl
from jax.experimental.pallas import tpu as pltpu

# ---------------- problem configuration (consistent with the module) --------
ACTION_SIZE = 8
DETER_SIZE = 16
STOCH_SIZE = 16
HORIZON = 8                       # H (max_len of pos enc == horizon)
HIDDEN = 32                       # dim_feedforward
NUM_LAYERS = 2
NUM_HEADS = 5                     # nn.TransformerEncoderLayer(..., nhead=5)
EMBED = DETER_SIZE + STOCH_SIZE + ACTION_SIZE   # 40, divisible by 5
BATCH = 64                        # seq_len * batch_size
LN_EPS = 1e-5

B_BLOCK = 32                      # trajectories per grid step -> 256 lanes


def _up(v, m):
    return -(-v // m) * m


# bf16 weight-slab row offsets: every section starts on a 16-row (bf16 sublane
# tile) boundary so in-kernel row slices are tile aligned.
OFF_WIN = 0                                   # fused QKV  (3E rows)
OFF_WOUT = _up(3 * EMBED, 16)                 # out-proj   (E rows)              = 128
OFF_W1 = _up(OFF_WOUT + EMBED, 16)            # FFN lin1   (E rows, hidden pad)  = 176
OFF_W2 = _up(OFF_W1 + EMBED, 16)              # FFN lin2   (E rows)              = 224
OFF_FC = _up(OFF_W2 + EMBED, 16)              # final fc   (E rows, layer 0)     = 272
W_ROWS = _up(OFF_FC + EMBED, 16)              # total slab rows                  = 320

# f32 bias / LayerNorm-param slab row offsets (8-row aligned, stored as (.,1)).
OFF_BIN = 0                                   # fused QKV bias (3E)
OFF_BOUT = _up(OFF_BIN + 3 * EMBED, 8)        # 120
OFF_B1 = _up(OFF_BOUT + EMBED, 8)             # 160
OFF_B2 = _up(OFF_B1 + EMBED, 8)               # 200
OFF_N1W = _up(OFF_B2 + EMBED, 8)              # 240
OFF_N1B = _up(OFF_N1W + EMBED, 8)             # 280
OFF_N2W = _up(OFF_N1B + EMBED, 8)             # 320
OFF_N2B = _up(OFF_N2W + EMBED, 8)             # 360
OFF_FCB = _up(OFF_N2B + EMBED, 8)             # 400
B_ROWS = _up(OFF_FCB + EMBED, 8)              # 440


def _ln_feat(x, w, b, eps=LN_EPS):
    """LayerNorm over the feature axis (rows) of an (E, lanes) f32 tile."""
    mu = jnp.mean(x, axis=0, keepdims=True)
    var = jnp.mean((x - mu) ** 2, axis=0, keepdims=True)
    return (x - mu) * jax.lax.rsqrt(var + eps) * w + b


def _traj_kernel(x_ref, w_ref, b_ref, o_ref, *, H, E, nh, n_layers):
    HB = x_ref.shape[-1]           # H * B_BLK lanes (multiple of 128)
    bblk = HB // H
    hd = E // nh

    xt = x_ref[0]                  # (E, HB) f32, lanes ordered h*bblk + b

    for l in range(n_layers):      # static unroll (n_layers = 2)
        xb = xt.astype(jnp.bfloat16)

        # ----- fused QKV projection: (3E, E) @ (E, HB) -> (3E, HB) f32 ------
        qkv = jnp.dot(w_ref[l, OFF_WIN:OFF_WIN + 3 * E, :], xb,
                      preferred_element_type=jnp.float32)
        qkv = qkv + b_ref[l, OFF_BIN:OFF_BIN + 3 * E, :]
        # tile-aligned row slices (offsets 0 / E / 2E, multiples of 8);
        # 1/sqrt(hd) is folded into the Q rows host-side.
        q_t = qkv[0:E]
        k_t = qkv[E:2 * E]
        v_t = qkv[2 * E:3 * E]

        # heads live on contiguous row groups of hd=8 -> free reshape
        qn = q_t.reshape(nh, hd, HB)

        # ----- scores: lane-rolled keys, VPU multiply + hd sublane reduce ---
        # kd[:, h*bblk+b] = k_t[:, ((h-d) mod H)*bblk + b]; over d = 0..H-1 this
        # enumerates every key of the same trajectory exactly once.
        s_list = []
        for d in range(H):
            kd = k_t if d == 0 else pltpu.roll(k_t, shift=d * bblk, axis=1)
            s_list.append(jnp.sum(qn * kd.reshape(nh, hd, HB), axis=1))  # (nh, HB)

        # ----- softmax over the H key-offset slices (f32) -------------------
        m = s_list[0]
        for d in range(1, H):
            m = jnp.maximum(m, s_list[d])
        p_list = [jnp.exp(s - m) for s in s_list]
        den = p_list[0]
        for d in range(1, H):
            den = den + p_list[d]
        # approx reciprocal runs on the EUP; use approx=False for bit-closer
        # parity with an f32 reference if needed.
        inv = pl.reciprocal(den, approx=True)                   # (nh, HB)

        # ----- context: broadcast-multiply-accumulate over key offsets ------
        ctx = jnp.zeros((nh, hd, HB), jnp.float32)
        for d in range(H):
            vd = v_t if d == 0 else pltpu.roll(v_t, shift=d * bblk, axis=1)
            ctx = ctx + p_list[d][:, None, :] * vd.reshape(nh, hd, HB)
        ctx = (ctx * inv[:, None, :]).reshape(E, HB)            # concat heads

        # ----- out-projection + residual + norm1 (post-norm) ----------------
        attn = jnp.dot(w_ref[l, OFF_WOUT:OFF_WOUT + E, :],
                       ctx.astype(jnp.bfloat16),
                       preferred_element_type=jnp.float32)
        attn = attn + b_ref[l, OFF_BOUT:OFF_BOUT + E, :]
        xt = _ln_feat(xt + attn,
                      b_ref[l, OFF_N1W:OFF_N1W + E, :],
                      b_ref[l, OFF_N1B:OFF_N1B + E, :])

        # ----- feed-forward (ReLU); hidden dim zero-padded to E host-side ---
        hid = jnp.dot(w_ref[l, OFF_W1:OFF_W1 + E, :], xt.astype(jnp.bfloat16),
                      preferred_element_type=jnp.float32)
        hid = jnp.maximum(hid + b_ref[l, OFF_B1:OFF_B1 + E, :], 0.0)
        ff = jnp.dot(w_ref[l, OFF_W2:OFF_W2 + E, :], hid.astype(jnp.bfloat16),
                     preferred_element_type=jnp.float32)
        ff = ff + b_ref[l, OFF_B2:OFF_B2 + E, :]
        xt = _ln_feat(xt + ff,
                      b_ref[l, OFF_N2W:OFF_N2W + E, :],
                      b_ref[l, OFF_N2B:OFF_N2B + E, :])

    # ----- seq-to-one: mean over horizon via lane rolls, then final Linear --
    acc = xt
    for d in range(1, H):
        acc = acc + pltpu.roll(xt, shift=d * bblk, axis=1)
    m_t = acc[:, 0:bblk] * (1.0 / H)                            # (E, bblk)

    out = jnp.dot(w_ref[0, OFF_FC:OFF_FC + E, :], m_t.astype(jnp.bfloat16),
                  preferred_element_type=jnp.float32)
    out = out + b_ref[0, OFF_FCB:OFF_FCB + E, :]
    o_ref[0] = out.astype(o_ref.dtype)


def trajectory_synthesizer_att(x, params, *, b_block=B_BLOCK):
    """x: (H, B, E) float32  ->  (B, E) float32 (eval-mode forward)."""
    H, B, E = x.shape
    L = params['in_proj_w'].shape[0]
    hidden = params['lin1_w'].shape[1]
    nh = NUM_HEADS
    hd = E // nh
    assert E == EMBED and E % nh == 0 and E % 8 == 0 and hidden <= E
    assert (H * b_block) % 128 == 0          # keep the lane axis tile-dense

    n_blk = -(-B // b_block)
    b_pad = n_blk * b_block

    # positional encoding + pack into lane-dense feature-major blocks:
    #   xt[j, e, h*b_block + b] = (x + pos)[h, j*b_block + b, e]
    xp = x + params['pos_table'][:H][:, None, :]
    if b_pad != B:
        xp = jnp.concatenate(
            [xp, jnp.zeros((H, b_pad - B, E), xp.dtype)], axis=1)
    xt = (xp.reshape(H, n_blk, b_block, E)
            .transpose(1, 3, 0, 2)
            .reshape(n_blk, E, H * b_block))

    # ---- one bf16 weight slab per layer (16-row aligned sections) ----------
    scale = 1.0 / float(np.sqrt(hd))
    qscale = jnp.concatenate([jnp.full((E,), scale, jnp.float32),
                              jnp.ones((2 * E,), jnp.float32)])
    w_in = params['in_proj_w'] * qscale[None, :, None]      # (L, 3E, E)
    b_in = params['in_proj_b'] * qscale[None, :]            # (L, 3E)

    w1p = jnp.zeros((L, E, E), jnp.float32).at[:, :hidden, :].set(params['lin1_w'])
    w2p = jnp.zeros((L, E, E), jnp.float32).at[:, :, :hidden].set(params['lin2_w'])
    b1p = jnp.zeros((L, E), jnp.float32).at[:, :hidden].set(params['lin1_b'])

    wslab = jnp.zeros((L, W_ROWS, E), jnp.float32)
    wslab = wslab.at[:, OFF_WIN:OFF_WIN + 3 * E].set(w_in)
    wslab = wslab.at[:, OFF_WOUT:OFF_WOUT + E].set(params['out_proj_w'])
    wslab = wslab.at[:, OFF_W1:OFF_W1 + E].set(w1p)
    wslab = wslab.at[:, OFF_W2:OFF_W2 + E].set(w2p)
    wslab = wslab.at[0, OFF_FC:OFF_FC + E].set(params['fc_w'])
    wslab = wslab.astype(jnp.bfloat16)

    # ---- one f32 bias / LayerNorm-param column slab -------------------------
    bslab = jnp.zeros((L, B_ROWS), jnp.float32)
    bslab = bslab.at[:, OFF_BIN:OFF_BIN + 3 * E].set(b_in)
    bslab = bslab.at[:, OFF_BOUT:OFF_BOUT + E].set(params['out_proj_b'])
    bslab = bslab.at[:, OFF_B1:OFF_B1 + E].set(b1p)
    bslab = bslab.at[:, OFF_B2:OFF_B2 + E].set(params['lin2_b'])
    bslab = bslab.at[:, OFF_N1W:OFF_N1W + E].set(params['norm1_w'])
    bslab = bslab.at[:, OFF_N1B:OFF_N1B + E].set(params['norm1_b'])
    bslab = bslab.at[:, OFF_N2W:OFF_N2W + E].set(params['norm2_w'])
    bslab = bslab.at[:, OFF_N2B:OFF_N2B + E].set(params['norm2_b'])
    bslab = bslab.at[0, OFF_FCB:OFF_FCB + E].set(params['fc_b'])
    bslab = bslab[..., None]                                 # (L, B_ROWS, 1)

    kernel = functools.partial(_traj_kernel, H=H, E=E, nh=nh, n_layers=L)
    out_t = pl.pallas_call(
        kernel,
        out_shape=jax.ShapeDtypeStruct((n_blk, E, b_block), jnp.float32),
        grid=(n_blk,),
        in_specs=[
            # per-step activation block (pipelined by BlockSpec)
            pl.BlockSpec((1, E, H * b_block), lambda j: (j, 0, 0)),
            # weights / biases: constant index_map -> DMA'd once, VMEM resident
            pl.BlockSpec((L, W_ROWS, E), lambda j: (0, 0, 0)),
            pl.BlockSpec((L, B_ROWS, 1), lambda j: (0, 0, 0)),
        ],
        out_specs=pl.BlockSpec((1, E, b_block), lambda j: (j, 0, 0)),
        compiler_params=pltpu.CompilerParams(
            # independent trajectory blocks -> shard across both v7x TensorCores
            dimension_semantics=("parallel",),
            # explicit, conservative VMEM budget (actual use is < 2 MiB)
            vmem_limit_bytes=32 * 1024 * 1024,
        ),
    )(xt, wslab, bslab)

    # (n_blk, E, b_block) -> (B, E); drop the zero-padded trajectories.
    out = out_t.transpose(0, 2, 1).reshape(b_pad, E)
    return out[:B]


# ---------------- deterministic parameter construction ----------------------
def make_sinusoid_table(max_len, d_hid):
    pos = np.arange(max_len, dtype=np.float64)[:, None]
    j = np.arange(d_hid, dtype=np.float64)[None, :]
    angle = pos / np.power(10000.0, 2.0 * np.floor(j / 2.0) / d_hid)
    table = np.where((np.arange(d_hid)[None, :] % 2) == 0,
                     np.sin(angle), np.cos(angle))
    return jnp.asarray(table, dtype=jnp.float32)


def make_params(key, E, hidden, L, H):
    ks = jax.random.split(key, 10)
    s = 0.02
    return {
        'pos_table':  make_sinusoid_table(H, E),
        'in_proj_w':  s * jax.random.normal(ks[0], (L, 3 * E, E), jnp.float32),
        'in_proj_b':  s * jax.random.normal(ks[1], (L, 3 * E), jnp.float32),
        'out_proj_w': s * jax.random.normal(ks[2], (L, E, E), jnp.float32),
        'out_proj_b': s * jax.random.normal(ks[3], (L, E), jnp.float32),
        'lin1_w':     s * jax.random.normal(ks[4], (L, hidden, E), jnp.float32),
        'lin1_b':     s * jax.random.normal(ks[5], (L, hidden), jnp.float32),
        'lin2_w':     s * jax.random.normal(ks[6], (L, E, hidden), jnp.float32),
        'lin2_b':     s * jax.random.normal(ks[7], (L, E), jnp.float32),
        'norm1_w':    jnp.ones((L, E), jnp.float32),
        'norm1_b':    jnp.zeros((L, E), jnp.float32),
        'norm2_w':    jnp.ones((L, E), jnp.float32),
        'norm2_b':    jnp.zeros((L, E), jnp.float32),
        'fc_w':       s * jax.random.normal(ks[8], (E, E), jnp.float32),
        'fc_b':       s * jax.random.normal(ks[9], (E,), jnp.float32),
    }


if __name__ == "__main__":
    key = jax.random.PRNGKey(0)
    k_x, k_p = jax.random.split(key)

    # model_state: (horizon, seq_len*batch_size, deter+stoch+action)
    x = jax.random.normal(k_x, (HORIZON, BATCH, EMBED), dtype=jnp.float32)
    params = make_params(k_p, EMBED, HIDDEN, NUM_LAYERS, HORIZON)

    out = jax.jit(trajectory_synthesizer_att)(x, params)
    out = jax.block_until_ready(out)
    assert out.shape == (BATCH, EMBED) and out.dtype == jnp.float32
    assert bool(jnp.all(jnp.isfinite(out)))
    print("KERNEL_OK")
</pallas_src>

<mosaic_0001>
module attributes {stable_mosaic.version = 11 : i64} {
  func.func @_traj_kernel(%arg0: i32, %arg1: memref<1x40x256xf32, #tpu.memory_space<vmem>>, %arg2: memref<2x320x40xbf16, #tpu.memory_space<vmem>>, %arg3: memref<2x440x1xf32, #tpu.memory_space<vmem>>, %arg4: memref<1x40x32xf32, #tpu.memory_space<vmem>>) attributes {dimension_semantics = [#tpu.dimension_semantics<parallel>], iteration_bounds = array<i64: 2>, scalar_prefetch = 0 : i64, scratch_operands = 0 : i64, tpu.core_type = #tpu.core_type<tc>, window_params = [{transform_indices = @transform_0, window_bounds = array<i64: 1, 40, 256>}, {pipeline_mode = #tpu.pipeline_mode<synchronous>, transform_indices = @transform_1, window_bounds = array<i64: 2, 320, 40>}, {pipeline_mode = #tpu.pipeline_mode<synchronous>, transform_indices = @transform_2, window_bounds = array<i64: 2, 440, 1>}, {transform_indices = @transform_3, window_bounds = array<i64: 1, 40, 32>}]} {
    %c0 = arith.constant 0 : index
    %c0_0 = arith.constant 0 : index
    %c0_1 = arith.constant 0 : index
    %0 = vector.load %arg1[%c0, %c0_0, %c0_1] : memref<1x40x256xf32, #tpu.memory_space<vmem>>, vector<1x40x256xf32>
    %1 = vector.shape_cast %0 : vector<1x40x256xf32> to vector<40x256xf32>
    %2 = arith.truncf %1 : vector<40x256xf32> to vector<40x256xbf16>
    %c0_2 = arith.constant 0 : index
    %c0_3 = arith.constant 0 : index
    %c0_4 = arith.constant 0 : index
    %3 = vector.load %arg2[%c0_2, %c0_3, %c0_4] : memref<2x320x40xbf16, #tpu.memory_space<vmem>>, vector<1x120x40xbf16>
    %4 = vector.shape_cast %3 : vector<1x120x40xbf16> to vector<120x40xbf16>
    %cst = arith.constant dense<0.000000e+00> : vector<120x256xf32>
    %5 = tpu.matmul %4, %2, %cst {dimension_numbers = #tpu.dot_dimension_numbers<[1], [0], [0], [1], [0, 0, 1, 1], [], []>} : vector<120x40xbf16>, vector<40x256xbf16>, vector<120x256xf32> -> vector<120x256xf32>
    %c0_5 = arith.constant 0 : index
    %c0_6 = arith.constant 0 : index
    %c0_7 = arith.constant 0 : index
    %6 = vector.load %arg3[%c0_5, %c0_6, %c0_7] : memref<2x440x1xf32, #tpu.memory_space<vmem>>, vector<1x120x1xf32>
    %7 = vector.shape_cast %6 : vector<1x120x1xf32> to vector<120x1xf32>
    %8 = vector.broadcast %7 : vector<120x1xf32> to vector<120x256xf32>
    %9 = arith.addf %5, %8 : vector<120x256xf32>
    %10 = vector.extract_strided_slice %9 {offsets = [0, 0], sizes = [40, 256], strides = [1, 1]} : vector<120x256xf32> to vector<40x256xf32>
    %11 = vector.extract_strided_slice %9 {offsets = [40, 0], sizes = [40, 256], strides = [1, 1]} : vector<120x256xf32> to vector<40x256xf32>
    %12 = vector.extract_strided_slice %9 {offsets = [80, 0], sizes = [40, 256], strides = [1, 1]} : vector<120x256xf32> to vector<40x256xf32>
    %13 = vector.shape_cast %10 : vector<40x256xf32> to vector<5x8x256xf32>
    %14 = vector.shape_cast %11 : vector<40x256xf32> to vector<5x8x256xf32>
    %15 = arith.mulf %13, %14 : vector<5x8x256xf32>
    %cst_8 = arith.constant dense<0.000000e+00> : vector<5x256xf32>
    %16 = vector.multi_reduction <add>, %15, %cst_8 [1] : vector<5x8x256xf32> to vector<5x256xf32>
    %c32_i32 = arith.constant 32 : i32
    %17 = tpu.dynamic_rotate %11 by %c32_i32 dim 1 : vector<40x256xf32>, i32 -> vector<40x256xf32>
    %18 = vector.shape_cast %17 : vector<40x256xf32> to vector<5x8x256xf32>
    %19 = arith.mulf %13, %18 : vector<5x8x256xf32>
    %cst_9 = arith.constant dense<0.000000e+00> : vector<5x256xf32>
    %20 = vector.multi_reduction <add>, %19, %cst_9 [1] : vector<5x8x256xf32> to vector<5x256xf32>
    %c64_i32 = arith.constant 64 : i32
    %21 = tpu.dynamic_rotate %11 by %c64_i32 dim 1 : vector<40x256xf32>, i32 -> vector<40x256xf32>
    %22 = vector.shape_cast %21 : vector<40x256xf32> to vector<5x8x256xf32>
    %23 = arith.mulf %13, %22 : vector<5x8x256xf32>
    %cst_10 = arith.constant dense<0.000000e+00> : vector<5x256xf32>
    %24 = vector.multi_reduction <add>, %23, %cst_10 [1] : vector<5x8x256xf32> to vector<5x256xf32>
    %c96_i32 = arith.constant 96 : i32
    %25 = tpu.dynamic_rotate %11 by %c96_i32 dim 1 : vector<40x256xf32>, i32 -> vector<40x256xf32>
    %26 = vector.shape_cast %25 : vector<40x256xf32> to vector<5x8x256xf32>
    %27 = arith.mulf %13, %26 : vector<5x8x256xf32>
    %cst_11 = arith.constant dense<0.000000e+00> : vector<5x256xf32>
    %28 = vector.multi_reduction <add>, %27, %cst_11 [1] : vector<5x8x256xf32> to vector<5x256xf32>
    %c128_i32 = arith.constant 128 : i32
    %29 = tpu.dynamic_rotate %11 by %c128_i32 dim 1 : vector<40x256xf32>, i32 -> vector<40x256xf32>
    %30 = vector.shape_cast %29 : vector<40x256xf32> to vector<5x8x256xf32>
    %31 = arith.mulf %13, %30 : vector<5x8x256xf32>
    %cst_12 = arith.constant dense<0.000000e+00> : vector<5x256xf32>
    %32 = vector.multi_reduction <add>, %31, %cst_12 [1] : vector<5x8x256xf32> to vector<5x256xf32>
    %c160_i32 = arith.constant 160 : i32
    %33 = tpu.dynamic_rotate %11 by %c160_i32 dim 1 : vector<40x256xf32>, i32 -> vector<40x256xf32>
    %34 = vector.shape_cast %33 : vector<40x256xf32> to vector<5x8x256xf32>
    %35 = arith.mulf %13, %34 : vector<5x8x256xf32>
    %cst_13 = arith.constant dense<0.000000e+00> : vector<5x256xf32>
    %36 = vector.multi_reduction <add>, %35, %cst_13 [1] : vector<5x8x256xf32> to vector<5x256xf32>
    %c192_i32 = arith.constant 192 : i32
    %37 = tpu.dynamic_rotate %11 by %c192_i32 dim 1 : vector<40x256xf32>, i32 -> vector<40x256xf32>
    %38 = vector.shape_cast %37 : vector<40x256xf32> to vector<5x8x256xf32>
    %39 = arith.mulf %13, %38 : vector<5x8x256xf32>
    %cst_14 = arith.constant dense<0.000000e+00> : vector<5x256xf32>
    %40 = vector.multi_reduction <add>, %39, %cst_14 [1] : vector<5x8x256xf32> to vector<5x256xf32>
    %c224_i32 = arith.constant 224 : i32
    %41 = tpu.dynamic_rotate %11 by %c224_i32 dim 1 : vector<40x256xf32>, i32 -> vector<40x256xf32>
    %42 = vector.shape_cast %41 : vector<40x256xf32> to vector<5x8x256xf32>
    %43 = arith.mulf %13, %42 : vector<5x8x256xf32>
    %cst_15 = arith.constant dense<0.000000e+00> : vector<5x256xf32>
    %44 = vector.multi_reduction <add>, %43, %cst_15 [1] : vector<5x8x256xf32> to vector<5x256xf32>
    %45 = arith.maximumf %16, %20 : vector<5x256xf32>
    %46 = arith.maximumf %45, %24 : vector<5x256xf32>
    %47 = arith.maximumf %46, %28 : vector<5x256xf32>
    %48 = arith.maximumf %47, %32 : vector<5x256xf32>
    %49 = arith.maximumf %48, %36 : vector<5x256xf32>
    %50 = arith.maximumf %49, %40 : vector<5x256xf32>
    %51 = arith.maximumf %50, %44 : vector<5x256xf32>
    %52 = arith.subf %16, %51 : vector<5x256xf32>
    %53 = math.exp %52 : vector<5x256xf32>
    %54 = arith.subf %20, %51 : vector<5x256xf32>
    %55 = math.exp %54 : vector<5x256xf32>
    %56 = arith.subf %24, %51 : vector<5x256xf32>
    %57 = math.exp %56 : vector<5x256xf32>
    %58 = arith.subf %28, %51 : vector<5x256xf32>
    %59 = math.exp %58 : vector<5x256xf32>
    %60 = arith.subf %32, %51 : vector<5x256xf32>
    %61 = math.exp %60 : vector<5x256xf32>
    %62 = arith.subf %36, %51 : vector<5x256xf32>
    %63 = math.exp %62 : vector<5x256xf32>
    %64 = arith.subf %40, %51 : vector<5x256xf32>
    %65 = math.exp %64 : vector<5x256xf32>
    %66 = arith.subf %44, %51 : vector<5x256xf32>
    %67 = math.exp %66 : vector<5x256xf32>
    %68 = arith.addf %53, %55 : vector<5x256xf32>
    %69 = arith.addf %68, %57 : vector<5x256xf32>
    %70 = arith.addf %69, %59 : vector<5x256xf32>
    %71 = arith.addf %70, %61 : vector<5x256xf32>
    %72 = arith.addf %71, %63 : vector<5x256xf32>
    %73 = arith.addf %72, %65 : vector<5x256xf32>
    %74 = arith.addf %73, %67 : vector<5x256xf32>
    %75 = tpu.reciprocal %74 {approx = true} : vector<5x256xf32> -> vector<5x256xf32>
    %cst_16 = arith.constant 0.000000e+00 : f32
    %76 = vector.broadcast %cst_16 : f32 to vector<5x8x256xf32>
    %77 = vector.shape_cast %53 : vector<5x256xf32> to vector<5x1x256xf32>
    %78 = vector.shape_cast %12 : vector<40x256xf32> to vector<5x8x256xf32>
    %79 = vector.broadcast %77 : vector<5x1x256xf32> to vector<5x8x256xf32>
    %80 = arith.mulf %79, %78 : vector<5x8x256xf32>
    %81 = arith.addf %76, %80 : vector<5x8x256xf32>
    %c32_i32_17 = arith.constant 32 : i32
    %82 = tpu.dynamic_rotate %12 by %c32_i32_17 dim 1 : vector<40x256xf32>, i32 -> vector<40x256xf32>
    %83 = vector.shape_cast %55 : vector<5x256xf32> to vector<5x1x256xf32>
    %84 = vector.shape_cast %82 : vector<40x256xf32> to vector<5x8x256xf32>
    %85 = vector.broadcast %83 : vector<5x1x256xf32> to vector<5x8x256xf32>
    %86 = arith.mulf %85, %84 : vector<5x8x256xf32>
    %87 = arith.addf %81, %86 : vector<5x8x256xf32>
    %c64_i32_18 = arith.constant 64 : i32
    %88 = tpu.dynamic_rotate %12 by %c64_i32_18 dim 1 : vector<40x256xf32>, i32 -> vector<40x256xf32>
    %89 = vector.shape_cast %57 : vector<5x256xf32> to vector<5x1x256xf32>
    %90 = vector.shape_cast %88 : vector<40x256xf32> to vector<5x8x256xf32>
    %91 = vector.broadcast %89 : vector<5x1x256xf32> to vector<5x8x256xf32>
    %92 = arith.mulf %91, %90 : vector<5x8x256xf32>
    %93 = arith.addf %87, %92 : vector<5x8x256xf32>
    %c96_i32_19 = arith.constant 96 : i32
    %94 = tpu.dynamic_rotate %12 by %c96_i32_19 dim 1 : vector<40x256xf32>, i32 -> vector<40x256xf32>
    %95 = vector.shape_cast %59 : vector<5x256xf32> to vector<5x1x256xf32>
    %96 = vector.shape_cast %94 : vector<40x256xf32> to vector<5x8x256xf32>
    %97 = vector.broadcast %95 : vector<5x1x256xf32> to vector<5x8x256xf32>
    %98 = arith.mulf %97, %96 : vector<5x8x256xf32>
    %99 = arith.addf %93, %98 : vector<5x8x256xf32>
    %c128_i32_20 = arith.constant 128 : i32
    %100 = tpu.dynamic_rotate %12 by %c128_i32_20 dim 1 : vector<40x256xf32>, i32 -> vector<40x256xf32>
    %101 = vector.shape_cast %61 : vector<5x256xf32> to vector<5x1x256xf32>
    %102 = vector.shape_cast %100 : vector<40x256xf32> to vector<5x8x256xf32>
    %103 = vector.broadcast %101 : vector<5x1x256xf32> to vector<5x8x256xf32>
    %104 = arith.mulf %103, %102 : vector<5x8x256xf32>
    %105 = arith.addf %99, %104 : vector<5x8x256xf32>
    %c160_i32_21 = arith.constant 160 : i32
    %106 = tpu.dynamic_rotate %12 by %c160_i32_21 dim 1 : vector<40x256xf32>, i32 -> vector<40x256xf32>
    %107 = vector.shape_cast %63 : vector<5x256xf32> to vector<5x1x256xf32>
    %108 = vector.shape_cast %106 : vector<40x256xf32> to vector<5x8x256xf32>
    %109 = vector.broadcast %107 : vector<5x1x256xf32> to vector<5x8x256xf32>
    %110 = arith.mulf %109, %108 : vector<5x8x256xf32>
    %111 = arith.addf %105, %110 : vector<5x8x256xf32>
    %c192_i32_22 = arith.constant 192 : i32
    %112 = tpu.dynamic_rotate %12 by %c192_i32_22 dim 1 : vector<40x256xf32>, i32 -> vector<40x256xf32>
    %113 = vector.shape_cast %65 : vector<5x256xf32> to vector<5x1x256xf32>
    %114 = vector.shape_cast %112 : vector<40x256xf32> to vector<5x8x256xf32>
    %115 = vector.broadcast %113 : vector<5x1x256xf32> to vector<5x8x256xf32>
    %116 = arith.mulf %115, %114 : vector<5x8x256xf32>
    %117 = arith.addf %111, %116 : vector<5x8x256xf32>
    %c224_i32_23 = arith.constant 224 : i32
    %118 = tpu.dynamic_rotate %12 by %c224_i32_23 dim 1 : vector<40x256xf32>, i32 -> vector<40x256xf32>
    %119 = vector.shape_cast %67 : vector<5x256xf32> to vector<5x1x256xf32>
    %120 = vector.shape_cast %118 : vector<40x256xf32> to vector<5x8x256xf32>
    %121 = vector.broadcast %119 : vector<5x1x256xf32> to vector<5x8x256xf32>
    %122 = arith.mulf %121, %120 : vector<5x8x256xf32>
    %123 = arith.addf %117, %122 : vector<5x8x256xf32>
    %124 = vector.shape_cast %75 : vector<5x256xf32> to vector<5x1x256xf32>
    %125 = vector.broadcast %124 : vector<5x1x256xf32> to vector<5x8x256xf32>
    %126 = arith.mulf %123, %125 : vector<5x8x256xf32>
    %127 = vector.shape_cast %126 : vector<5x8x256xf32> to vector<40x256xf32>
    %c0_24 = arith.constant 0 : index
    %c128 = arith.constant 128 : index
    %c0_25 = arith.constant 0 : index
    %128 = vector.load %arg2[%c0_24, %c128, %c0_25] : memref<2x320x40xbf16, #tpu.memory_space<vmem>>, vector<1x40x40xbf16>
    %129 = vector.shape_cast %128 : vector<1x40x40xbf16> to vector<40x40xbf16>
    %130 = arith.truncf %127 : vector<40x256xf32> to vector<40x256xbf16>
    %cst_26 = arith.constant dense<0.000000e+00> : vector<40x256xf32>
    %131 = tpu.matmul %129, %130, %cst_26 {dimension_numbers = #tpu.dot_dimension_numbers<[1], [0], [0], [1], [0, 0, 1, 1], [], []>} : vector<40x40xbf16>, vector<40x256xbf16>, vector<40x256xf32> -> vector<40x256xf32>
    %c0_27 = arith.constant 0 : index
    %c120 = arith.constant 120 : index
    %c0_28 = arith.constant 0 : index
    %132 = vector.load %arg3[%c0_27, %c120, %c0_28] : memref<2x440x1xf32, #tpu.memory_space<vmem>>, vector<1x40x1xf32>
    %133 = vector.shape_cast %132 : vector<1x40x1xf32> to vector<40x1xf32>
    %134 = vector.broadcast %133 : vector<40x1xf32> to vector<40x256xf32>
    %135 = arith.addf %131, %134 : vector<40x256xf32>
    %136 = arith.addf %1, %135 : vector<40x256xf32>
    %c0_29 = arith.constant 0 : index
    %c240 = arith.constant 240 : index
    %c0_30 = arith.constant 0 : index
    %137 = vector.load %arg3[%c0_29, %c240, %c0_30] : memref<2x440x1xf32, #tpu.memory_space<vmem>>, vector<1x40x1xf32>
    %138 = vector.shape_cast %137 : vector<1x40x1xf32> to vector<40x1xf32>
    %c0_31 = arith.constant 0 : index
    %c280 = arith.constant 280 : index
    %c0_32 = arith.constant 0 : index
    %139 = vector.load %arg3[%c0_31, %c280, %c0_32] : memref<2x440x1xf32, #tpu.memory_space<vmem>>, vector<1x40x1xf32>
    %140 = vector.shape_cast %139 : vector<1x40x1xf32> to vector<40x1xf32>
    %cst_33 = arith.constant dense<0.000000e+00> : vector<256xf32>
    %141 = vector.multi_reduction <add>, %136, %cst_33 [0] : vector<40x256xf32> to vector<256xf32>
    %142 = vector.shape_cast %141 : vector<256xf32> to vector<1x256xf32>
    %cst_34 = arith.constant 4.000000e+01 : f32
    %143 = vector.broadcast %cst_34 : f32 to vector<1x256xf32>
    %144 = arith.divf %142, %143 : vector<1x256xf32>
    %145 = vector.broadcast %144 : vector<1x256xf32> to vector<40x256xf32>
    %146 = arith.subf %136, %145 : vector<40x256xf32>
    %147 = arith.mulf %146, %146 : vector<40x256xf32>
    %cst_35 = arith.constant dense<0.000000e+00> : vector<256xf32>
    %148 = vector.multi_reduction <add>, %147, %cst_35 [0] : vector<40x256xf32> to vector<256xf32>
    %149 = vector.shape_cast %148 : vector<256xf32> to vector<1x256xf32>
    %cst_36 = arith.constant 4.000000e+01 : f32
    %150 = vector.broadcast %cst_36 : f32 to vector<1x256xf32>
    %151 = arith.divf %149, %150 : vector<1x256xf32>
    %152 = vector.broadcast %144 : vector<1x256xf32> to vector<40x256xf32>
    %153 = arith.subf %136, %152 : vector<40x256xf32>
    %cst_37 = arith.constant 9.99999974E-6 : f32
    %154 = vector.broadcast %cst_37 : f32 to vector<1x256xf32>
    %155 = arith.addf %151, %154 : vector<1x256xf32>
    %156 = math.rsqrt %155 : vector<1x256xf32>
    %157 = vector.broadcast %156 : vector<1x256xf32> to vector<40x256xf32>
    %158 = arith.mulf %153, %157 : vector<40x256xf32>
    %159 = vector.broadcast %138 : vector<40x1xf32> to vector<40x256xf32>
    %160 = arith.mulf %158, %159 : vector<40x256xf32>
    %161 = vector.broadcast %140 : vector<40x1xf32> to vector<40x256xf32>
    %162 = arith.addf %160, %161 : vector<40x256xf32>
    %c0_38 = arith.constant 0 : index
    %c176 = arith.constant 176 : index
    %c0_39 = arith.constant 0 : index
    %163 = vector.load %arg2[%c0_38, %c176, %c0_39] : memref<2x320x40xbf16, #tpu.memory_space<vmem>>, vector<1x40x40xbf16>
    %164 = vector.shape_cast %163 : vector<1x40x40xbf16> to vector<40x40xbf16>
    %165 = arith.truncf %162 : vector<40x256xf32> to vector<40x256xbf16>
    %cst_40 = arith.constant dense<0.000000e+00> : vector<40x256xf32>
    %166 = tpu.matmul %164, %165, %cst_40 {dimension_numbers = #tpu.dot_dimension_numbers<[1], [0], [0], [1], [0, 0, 1, 1], [], []>} : vector<40x40xbf16>, vector<40x256xbf16>, vector<40x256xf32> -> vector<40x256xf32>
    %c0_41 = arith.constant 0 : index
    %c160 = arith.constant 160 : index
    %c0_42 = arith.constant 0 : index
    %167 = vector.load %arg3[%c0_41, %c160, %c0_42] : memref<2x440x1xf32, #tpu.memory_space<vmem>>, vector<1x40x1xf32>
    %168 = vector.shape_cast %167 : vector<1x40x1xf32> to vector<40x1xf32>
    %169 = vector.broadcast %168 : vector<40x1xf32> to vector<40x256xf32>
    %170 = arith.addf %166, %169 : vector<40x256xf32>
    %cst_43 = arith.constant 0.000000e+00 : f32
    %171 = vector.broadcast %cst_43 : f32 to vector<40x256xf32>
    %172 = arith.maximumf %170, %171 : vector<40x256xf32>
    %c0_44 = arith.constant 0 : index
    %c224 = arith.constant 224 : index
    %c0_45 = arith.constant 0 : index
    %173 = vector.load %arg2[%c0_44, %c224, %c0_45] : memref<2x320x40xbf16, #tpu.memory_space<vmem>>, vector<1x40x40xbf16>
    %174 = vector.shape_cast %173 : vector<1x40x40xbf16> to vector<40x40xbf16>
    %175 = arith.truncf %172 : vector<40x256xf32> to vector<40x256xbf16>
    %cst_46 = arith.constant dense<0.000000e+00> : vector<40x256xf32>
    %176 = tpu.matmul %174, %175, %cst_46 {dimension_numbers = #tpu.dot_dimension_numbers<[1], [0], [0], [1], [0, 0, 1, 1], [], []>} : vector<40x40xbf16>, vector<40x256xbf16>, vector<40x256xf32> -> vector<40x256xf32>
    %c0_47 = arith.constant 0 : index
    %c200 = arith.constant 200 : index
    %c0_48 = arith.constant 0 : index
    %177 = vector.load %arg3[%c0_47, %c200, %c0_48] : memref<2x440x1xf32, #tpu.memory_space<vmem>>, vector<1x40x1xf32>
    %178 = vector.shape_cast %177 : vector<1x40x1xf32> to vector<40x1xf32>
    %179 = vector.broadcast %178 : vector<40x1xf32> to vector<40x256xf32>
    %180 = arith.addf %176, %179 : vector<40x256xf32>
    %181 = arith.addf %162, %180 : vector<40x256xf32>
    %c0_49 = arith.constant 0 : index
    %c320 = arith.constant 320 : index
    %c0_50 = arith.constant 0 : index
    %182 = vector.load %arg3[%c0_49, %c320, %c0_50] : memref<2x440x1xf32, #tpu.memory_space<vmem>>, vector<1x40x1xf32>
    %183 = vector.shape_cast %182 : vector<1x40x1xf32> to vector<40x1xf32>
    %c0_51 = arith.constant 0 : index
    %c360 = arith.constant 360 : index
    %c0_52 = arith.constant 0 : index
    %184 = vector.load %arg3[%c0_51, %c360, %c0_52] : memref<2x440x1xf32, #tpu.memory_space<vmem>>, vector<1x40x1xf32>
    %185 = vector.shape_cast %184 : vector<1x40x1xf32> to vector<40x1xf32>
    %cst_53 = arith.constant dense<0.000000e+00> : vector<256xf32>
    %186 = vector.multi_reduction <add>, %181, %cst_53 [0] : vector<40x256xf32> to vector<256xf32>
    %187 = vector.shape_cast %186 : vector<256xf32> to vector<1x256xf32>
    %cst_54 = arith.constant 4.000000e+01 : f32
    %188 = vector.broadcast %cst_54 : f32 to vector<1x256xf32>
    %189 = arith.divf %187, %188 : vector<1x256xf32>
    %190 = vector.broadcast %189 : vector<1x256xf32> to vector<40x256xf32>
    %191 = arith.subf %181, %190 : vector<40x256xf32>
    %192 = arith.mulf %191, %191 : vector<40x256xf32>
    %cst_55 = arith.constant dense<0.000000e+00> : vector<256xf32>
    %193 = vector.multi_reduction <add>, %192, %cst_55 [0] : vector<40x256xf32> to vector<256xf32>
    %194 = vector.shape_cast %193 : vector<256xf32> to vector<1x256xf32>
    %cst_56 = arith.constant 4.000000e+01 : f32
    %195 = vector.broadcast %cst_56 : f32 to vector<1x256xf32>
    %196 = arith.divf %194, %195 : vector<1x256xf32>
    %197 = vector.broadcast %189 : vector<1x256xf32> to vector<40x256xf32>
    %198 = arith.subf %181, %197 : vector<40x256xf32>
    %cst_57 = arith.constant 9.99999974E-6 : f32
    %199 = vector.broadcast %cst_57 : f32 to vector<1x256xf32>
    %200 = arith.addf %196, %199 : vector<1x256xf32>
    %201 = math.rsqrt %200 : vector<1x256xf32>
    %202 = vector.broadcast %201 : vector<1x256xf32> to vector<40x256xf32>
    %203 = arith.mulf %198, %202 : vector<40x256xf32>
    %204 = vector.broadcast %183 : vector<40x1xf32> to vector<40x256xf32>
    %205 = arith.mulf %203, %204 : vector<40x256xf32>
    %206 = vector.broadcast %185 : vector<40x1xf32> to vector<40x256xf32>
    %207 = arith.addf %205, %206 : vector<40x256xf32>
    %208 = arith.truncf %207 : vector<40x256xf32> to vector<40x256xbf16>
    %c1 = arith.constant 1 : index
    %c0_58 = arith.constant 0 : index
    %c0_59 = arith.constant 0 : index
    %209 = vector.load %arg2[%c1, %c0_58, %c0_59] : memref<2x320x40xbf16, #tpu.memory_space<vmem>>, vector<1x120x40xbf16>
    %210 = vector.shape_cast %209 : vector<1x120x40xbf16> to vector<120x40xbf16>
    %cst_60 = arith.constant dense<0.000000e+00> : vector<120x256xf32>
    %211 = tpu.matmul %210, %208, %cst_60 {dimension_numbers = #tpu.dot_dimension_numbers<[1], [0], [0], [1], [0, 0, 1, 1], [], []>} : vector<120x40xbf16>, vector<40x256xbf16>, vector<120x256xf32> -> vector<120x256xf32>
    %c1_61 = arith.constant 1 : index
    %c0_62 = arith.constant 0 : index
    %c0_63 = arith.constant 0 : index
    %212 = vector.load %arg3[%c1_61, %c0_62, %c0_63] : memref<2x440x1xf32, #tpu.memory_space<vmem>>, vector<1x120x1xf32>
    %213 = vector.shape_cast %212 : vector<1x120x1xf32> to vector<120x1xf32>
    %214 = vector.broadcast %213 : vector<120x1xf32> to vector<120x256xf32>
    %215 = arith.addf %211, %214 : vector<120x256xf32>
    %216 = vector.extract_strided_slice %215 {offsets = [0, 0], sizes = [40, 256], strides = [1, 1]} : vector<120x256xf32> to vector<40x256xf32>
    %217 = vector.extract_strided_slice %215 {offsets = [40, 0], sizes = [40, 256], strides = [1, 1]} : vector<120x256xf32> to vector<40x256xf32>
    %218 = vector.extract_strided_slice %215 {offsets = [80, 0], sizes = [40, 256], strides = [1, 1]} : vector<120x256xf32> to vector<40x256xf32>
    %219 = vector.shape_cast %216 : vector<40x256xf32> to vector<5x8x256xf32>
    %220 = vector.shape_cast %217 : vector<40x256xf32> to vector<5x8x256xf32>
    %221 = arith.mulf %219, %220 : vector<5x8x256xf32>
    %cst_64 = arith.constant dense<0.000000e+00> : vector<5x256xf32>
    %222 = vector.multi_reduction <add>, %221, %cst_64 [1] : vector<5x8x256xf32> to vector<5x256xf32>
    %c32_i32_65 = arith.constant 32 : i32
    %223 = tpu.dynamic_rotate %217 by %c32_i32_65 dim 1 : vector<40x256xf32>, i32 -> vector<40x256xf32>
    %224 = vector.shape_cast %223 : vector<40x256xf32> to vector<5x8x256xf32>
    %225 = arith.mulf %219, %224 : vector<5x8x256xf32>
    %cst_66 = arith.constant dense<0.000000e+00> : vector<5x256xf32>
    %226 = vector.multi_reduction <add>, %225, %cst_66 [1] : vector<5x8x256xf32> to vector<5x256xf32>
    %c64_i32_67 = arith.constant 64 : i32
    %227 = tpu.dynamic_rotate %217 by %c64_i32_67 dim 1 : vector<40x256xf32>, i32 -> vector<40x256xf32>
    %228 = vector.shape_cast %227 : vector<40x256xf32> to vector<5x8x256xf32>
    %229 = arith.mulf %219, %228 : vector<5x8x256xf32>
    %cst_68 = arith.constant dense<0.000000e+00> : vector<5x256xf32>
    %230 = vector.multi_reduction <add>, %229, %cst_68 [1] : vector<5x8x256xf32> to vector<5x256xf32>
    %c96_i32_69 = arith.constant 96 : i32
    %231 = tpu.dynamic_rotate %217 by %c96_i32_69 dim 1 : vector<40x256xf32>, i32 -> vector<40x256xf32>
    %232 = vector.shape_cast %231 : vector<40x256xf32> to vector<5x8x256xf32>
    %233 = arith.mulf %219, %232 : vector<5x8x256xf32>
    %cst_70 = arith.constant dense<0.000000e+00> : vector<5x256xf32>
    %234 = vector.multi_reduction <add>, %233, %cst_70 [1] : vector<5x8x256xf32> to vector<5x256xf32>
    %c128_i32_71 = arith.constant 128 : i32
    %235 = tpu.dynamic_rotate %217 by %c128_i32_71 dim 1 : vector<40x256xf32>, i32 -> vector<40x256xf32>
    %236 = vector.shape_cast %235 : vector<40x256xf32> to vector<5x8x256xf32>
    %237 = arith.mulf %219, %236 : vector<5x8x256xf32>
    %cst_72 = arith.constant dense<0.000000e+00> : vector<5x256xf32>
    %238 = vector.multi_reduction <add>, %237, %cst_72 [1] : vector<5x8x256xf32> to vector<5x256xf32>
    %c160_i32_73 = arith.constant 160 : i32
    %239 = tpu.dynamic_rotate %217 by %c160_i32_73 dim 1 : vector<40x256xf32>, i32 -> vector<40x256xf32>
    %240 = vector.shape_cast %239 : vector<40x256xf32> to vector<5x8x256xf32>
    %241 = arith.mulf %219, %240 : vector<5x8x256xf32>
    %cst_74 = arith.constant dense<0.000000e+00> : vector<5x256xf32>
    %242 = vector.multi_reduction <add>, %241, %cst_74 [1] : vector<5x8x256xf32> to vector<5x256xf32>
    %c192_i32_75 = arith.constant 192 : i32
    %243 = tpu.dynamic_rotate %217 by %c192_i32_75 dim 1 : vector<40x256xf32>, i32 -> vector<40x256xf32>
    %244 = vector.shape_cast %243 : vector<40x256xf32> to vector<5x8x256xf32>
    %245 = arith.mulf %219, %244 : vector<5x8x256xf32>
    %cst_76 = arith.constant dense<0.000000e+00> : vector<5x256xf32>
    %246 = vector.multi_reduction <add>, %245, %cst_76 [1] : vector<5x8x256xf32> to vector<5x256xf32>
    %c224_i32_77 = arith.constant 224 : i32
    %247 = tpu.dynamic_rotate %217 by %c224_i32_77 dim 1 : vector<40x256xf32>, i32 -> vector<40x256xf32>
    %248 = vector.shape_cast %247 : vector<40x256xf32> to vector<5x8x256xf32>
    %249 = arith.mulf %219, %248 : vector<5x8x256xf32>
    %cst_78 = arith.constant dense<0.000000e+00> : vector<5x256xf32>
    %250 = vector.multi_reduction <add>, %249, %cst_78 [1] : vector<5x8x256xf32> to vector<5x256xf32>
    %251 = arith.maximumf %222, %226 : vector<5x256xf32>
    %252 = arith.maximumf %251, %230 : vector<5x256xf32>
    %253 = arith.maximumf %252, %234 : vector<5x256xf32>
    %254 = arith.maximumf %253, %238 : vector<5x256xf32>
    %255 = arith.maximumf %254, %242 : vector<5x256xf32>
    %256 = arith.maximumf %255, %246 : vector<5x256xf32>
    %257 = arith.maximumf %256, %250 : vector<5x256xf32>
    %258 = arith.subf %222, %257 : vector<5x256xf32>
    %259 = math.exp %258 : vector<5x256xf32>
    %260 = arith.subf %226, %257 : vector<5x256xf32>
    %261 = math.exp %260 : vector<5x256xf32>
    %262 = arith.subf %230, %257 : vector<5x256xf32>
    %263 = math.exp %262 : vector<5x256xf32>
    %264 = arith.subf %234, %257 : vector<5x256xf32>
    %265 = math.exp %264 : vector<5x256xf32>
    %266 = arith.subf %238, %257 : vector<5x256xf32>
    %267 = math.exp %266 : vector<5x256xf32>
    %268 = arith.subf %242, %257 : vector<5x256xf32>
    %269 = math.exp %268 : vector<5x256xf32>
    %270 = arith.subf %246, %257 : vector<5x256xf32>
    %271 = math.exp %270 : vector<5x256xf32>
    %272 = arith.subf %250, %257 : vector<5x256xf32>
    %273 = math.exp %272 : vector<5x256xf32>
    %274 = arith.addf %259, %261 : vector<5x256xf32>
    %275 = arith.addf %274, %263 : vector<5x256xf32>
    %276 = arith.addf %275, %265 : vector<5x256xf32>
    %277 = arith.addf %276, %267 : vector<5x256xf32>
    %278 = arith.addf %277, %269 : vector<5x256xf32>
    %279 = arith.addf %278, %271 : vector<5x256xf32>
    %280 = arith.addf %279, %273 : vector<5x256xf32>
    %281 = tpu.reciprocal %280 {approx = true} : vector<5x256xf32> -> vector<5x256xf32>
    %cst_79 = arith.constant 0.000000e+00 : f32
    %282 = vector.broadcast %cst_79 : f32 to vector<5x8x256xf32>
    %283 = vector.shape_cast %259 : vector<5x256xf32> to vector<5x1x256xf32>
    %284 = vector.shape_cast %218 : vector<40x256xf32> to vector<5x8x256xf32>
    %285 = vector.broadcast %283 : vector<5x1x256xf32> to vector<5x8x256xf32>
    %286 = arith.mulf %285, %284 : vector<5x8x256xf32>
    %287 = arith.addf %282, %286 : vector<5x8x256xf32>
    %c32_i32_80 = arith.constant 32 : i32
    %288 = tpu.dynamic_rotate %218 by %c32_i32_80 dim 1 : vector<40x256xf32>, i32 -> vector<40x256xf32>
    %289 = vector.shape_cast %261 : vector<5x256xf32> to vector<5x1x256xf32>
    %290 = vector.shape_cast %288 : vector<40x256xf32> to vector<5x8x256xf32>
    %291 = vector.broadcast %289 : vector<5x1x256xf32> to vector<5x8x256xf32>
    %292 = arith.mulf %291, %290 : vector<5x8x256xf32>
    %293 = arith.addf %287, %292 : vector<5x8x256xf32>
    %c64_i32_81 = arith.constant 64 : i32
    %294 = tpu.dynamic_rotate %218 by %c64_i32_81 dim 1 : vector<40x256xf32>, i32 -> vector<40x256xf32>
    %295 = vector.shape_cast %263 : vector<5x256xf32> to vector<5x1x256xf32>
    %296 = vector.shape_cast %294 : vector<40x256xf32> to vector<5x8x256xf32>
    %297 = vector.broadcast %295 : vector<5x1x256xf32> to vector<5x8x256xf32>
    %298 = arith.mulf %297, %296 : vector<5x8x256xf32>
    %299 = arith.addf %293, %298 : vector<5x8x256xf32>
    %c96_i32_82 = arith.constant 96 : i32
    %300 = tpu.dynamic_rotate %218 by %c96_i32_82 dim 1 : vector<40x256xf32>, i32 -> vector<40x256xf32>
    %301 = vector.shape_cast %265 : vector<5x256xf32> to vector<5x1x256xf32>
    %302 = vector.shape_cast %300 : vector<40x256xf32> to vector<5x8x256xf32>
    %303 = vector.broadcast %301 : vector<5x1x256xf32> to vector<5x8x256xf32>
    %304 = arith.mulf %303, %302 : vector<5x8x256xf32>
    %305 = arith.addf %299, %304 : vector<5x8x256xf32>
    %c128_i32_83 = arith.constant 128 : i32
    %306 = tpu.dynamic_rotate %218 by %c128_i32_83 dim 1 : vector<40x256xf32>, i32 -> vector<40x256xf32>
    %307 = vector.shape_cast %267 : vector<5x256xf32> to vector<5x1x256xf32>
    %308 = vector.shape_cast %306 : vector<40x256xf32> to vector<5x8x256xf32>
    %309 = vector.broadcast %307 : vector<5x1x256xf32> to vector<5x8x256xf32>
    %310 = arith.mulf %309, %308 : vector<5x8x256xf32>
    %311 = arith.addf %305, %310 : vector<5x8x256xf32>
    %c160_i32_84 = arith.constant 160 : i32
    %312 = tpu.dynamic_rotate %218 by %c160_i32_84 dim 1 : vector<40x256xf32>, i32 -> vector<40x256xf32>
    %313 = vector.shape_cast %269 : vector<5x256xf32> to vector<5x1x256xf32>
    %314 = vector.shape_cast %312 : vector<40x256xf32> to vector<5x8x256xf32>
    %315 = vector.broadcast %313 : vector<5x1x256xf32> to vector<5x8x256xf32>
    %316 = arith.mulf %315, %314 : vector<5x8x256xf32>
    %317 = arith.addf %311, %316 : vector<5x8x256xf32>
    %c192_i32_85 = arith.constant 192 : i32
    %318 = tpu.dynamic_rotate %218 by %c192_i32_85 dim 1 : vector<40x256xf32>, i32 -> vector<40x256xf32>
    %319 = vector.shape_cast %271 : vector<5x256xf32> to vector<5x1x256xf32>
    %320 = vector.shape_cast %318 : vector<40x256xf32> to vector<5x8x256xf32>
    %321 = vector.broadcast %319 : vector<5x1x256xf32> to vector<5x8x256xf32>
    %322 = arith.mulf %321, %320 : vector<5x8x256xf32>
    %323 = arith.addf %317, %322 : vector<5x8x256xf32>
    %c224_i32_86 = arith.constant 224 : i32
    %324 = tpu.dynamic_rotate %218 by %c224_i32_86 dim 1 : vector<40x256xf32>, i32 -> vector<40x256xf32>
    %325 = vector.shape_cast %273 : vector<5x256xf32> to vector<5x1x256xf32>
    %326 = vector.shape_cast %324 : vector<40x256xf32> to vector<5x8x256xf32>
    %327 = vector.broadcast %325 : vector<5x1x256xf32> to vector<5x8x256xf32>
    %328 = arith.mulf %327, %326 : vector<5x8x256xf32>
    %329 = arith.addf %323, %328 : vector<5x8x256xf32>
    %330 = vector.shape_cast %281 : vector<5x256xf32> to vector<5x1x256xf32>
    %331 = vector.broadcast %330 : vector<5x1x256xf32> to vector<5x8x256xf32>
    %332 = arith.mulf %329, %331 : vector<5x8x256xf32>
    %333 = vector.shape_cast %332 : vector<5x8x256xf32> to vector<40x256xf32>
    %c1_87 = arith.constant 1 : index
    %c128_88 = arith.constant 128 : index
    %c0_89 = arith.constant 0 : index
    %334 = vector.load %arg2[%c1_87, %c128_88, %c0_89] : memref<2x320x40xbf16, #tpu.memory_space<vmem>>, vector<1x40x40xbf16>
    %335 = vector.shape_cast %334 : vector<1x40x40xbf16> to vector<40x40xbf16>
    %336 = arith.truncf %333 : vector<40x256xf32> to vector<40x256xbf16>
    %cst_90 = arith.constant dense<0.000000e+00> : vector<40x256xf32>
    %337 = tpu.matmul %335, %336, %cst_90 {dimension_numbers = #tpu.dot_dimension_numbers<[1], [0], [0], [1], [0, 0, 1, 1], [], []>} : vector<40x40xbf16>, vector<40x256xbf16>, vector<40x256xf32> -> vector<40x256xf32>
    %c1_91 = arith.constant 1 : index
    %c120_92 = arith.constant 120 : index
    %c0_93 = arith.constant 0 : index
    %338 = vector.load %arg3[%c1_91, %c120_92, %c0_93] : memref<2x440x1xf32, #tpu.memory_space<vmem>>, vector<1x40x1xf32>
    %339 = vector.shape_cast %338 : vector<1x40x1xf32> to vector<40x1xf32>
    %340 = vector.broadcast %339 : vector<40x1xf32> to vector<40x256xf32>
    %341 = arith.addf %337, %340 : vector<40x256xf32>
    %342 = arith.addf %207, %341 : vector<40x256xf32>
    %c1_94 = arith.constant 1 : index
    %c240_95 = arith.constant 240 : index
    %c0_96 = arith.constant 0 : index
    %343 = vector.load %arg3[%c1_94, %c240_95, %c0_96] : memref<2x440x1xf32, #tpu.memory_space<vmem>>, vector<1x40x1xf32>
    %344 = vector.shape_cast %343 : vector<1x40x1xf32> to vector<40x1xf32>
    %c1_97 = arith.constant 1 : index
    %c280_98 = arith.constant 280 : index
    %c0_99 = arith.constant 0 : index
    %345 = vector.load %arg3[%c1_97, %c280_98, %c0_99] : memref<2x440x1xf32, #tpu.memory_space<vmem>>, vector<1x40x1xf32>
    %346 = vector.shape_cast %345 : vector<1x40x1xf32> to vector<40x1xf32>
    %cst_100 = arith.constant dense<0.000000e+00> : vector<256xf32>
    %347 = vector.multi_reduction <add>, %342, %cst_100 [0] : vector<40x256xf32> to vector<256xf32>
    %348 = vector.shape_cast %347 : vector<256xf32> to vector<1x256xf32>
    %cst_101 = arith.constant 4.000000e+01 : f32
    %349 = vector.broadcast %cst_101 : f32 to vector<1x256xf32>
    %350 = arith.divf %348, %349 : vector<1x256xf32>
    %351 = vector.broadcast %350 : vector<1x256xf32> to vector<40x256xf32>
    %352 = arith.subf %342, %351 : vector<40x256xf32>
    %353 = arith.mulf %352, %352 : vector<40x256xf32>
    %cst_102 = arith.constant dense<0.000000e+00> : vector<256xf32>
    %354 = vector.multi_reduction <add>, %353, %cst_102 [0] : vector<40x256xf32> to vector<256xf32>
    %355 = vector.shape_cast %354 : vector<256xf32> to vector<1x256xf32>
    %cst_103 = arith.constant 4.000000e+01 : f32
    %356 = vector.broadcast %cst_103 : f32 to vector<1x256xf32>
    %357 = arith.divf %355, %356 : vector<1x256xf32>
    %358 = vector.broadcast %350 : vector<1x256xf32> to vector<40x256xf32>
    %359 = arith.subf %342, %358 : vector<40x256xf32>
    %cst_104 = arith.constant 9.99999974E-6 : f32
    %360 = vector.broadcast %cst_104 : f32 to vector<1x256xf32>
    %361 = arith.addf %357, %360 : vector<1x256xf32>
    %362 = math.rsqrt %361 : vector<1x256xf32>
    %363 = vector.broadcast %362 : vector<1x256xf32> to vector<40x256xf32>
    %364 = arith.mulf %359, %363 : vector<40x256xf32>
    %365 = vector.broadcast %344 : vector<40x1xf32> to vector<40x256xf32>
    %366 = arith.mulf %364, %365 : vector<40x256xf32>
    %367 = vector.broadcast %346 : vector<40x1xf32> to vector<40x256xf32>
    %368 = arith.addf %366, %367 : vector<40x256xf32>
    %c1_105 = arith.constant 1 : index
    %c176_106 = arith.constant 176 : index
    %c0_107 = arith.constant 0 : index
    %369 = vector.load %arg2[%c1_105, %c176_106, %c0_107] : memref<2x320x40xbf16, #tpu.memory_space<vmem>>, vector<1x40x40xbf16>
    %370 = vector.shape_cast %369 : vector<1x40x40xbf16> to vector<40x40xbf16>
    %371 = arith.truncf %368 : vector<40x256xf32> to vector<40x256xbf16>
    %cst_108 = arith.constant dense<0.000000e+00> : vector<40x256xf32>
    %372 = tpu.matmul %370, %371, %cst_108 {dimension_numbers = #tpu.dot_dimension_numbers<[1], [0], [0], [1], [0, 0, 1, 1], [], []>} : vector<40x40xbf16>, vector<40x256xbf16>, vector<40x256xf32> -> vector<40x256xf32>
    %c1_109 = arith.constant 1 : index
    %c160_110 = arith.constant 160 : index
    %c0_111 = arith.constant 0 : index
    %373 = vector.load %arg3[%c1_109, %c160_110, %c0_111] : memref<2x440x1xf32, #tpu.memory_space<vmem>>, vector<1x40x1xf32>
    %374 = vector.shape_cast %373 : vector<1x40x1xf32> to vector<40x1xf32>
    %375 = vector.broadcast %374 : vector<40x1xf32> to vector<40x256xf32>
    %376 = arith.addf %372, %375 : vector<40x256xf32>
    %cst_112 = arith.constant 0.000000e+00 : f32
    %377 = vector.broadcast %cst_112 : f32 to vector<40x256xf32>
    %378 = arith.maximumf %376, %377 : vector<40x256xf32>
    %c1_113 = arith.constant 1 : index
    %c224_114 = arith.constant 224 : index
    %c0_115 = arith.constant 0 : index
    %379 = vector.load %arg2[%c1_113, %c224_114, %c0_115] : memref<2x320x40xbf16, #tpu.memory_space<vmem>>, vector<1x40x40xbf16>
    %380 = vector.shape_cast %379 : vector<1x40x40xbf16> to vector<40x40xbf16>
    %381 = arith.truncf %378 : vector<40x256xf32> to vector<40x256xbf16>
    %cst_116 = arith.constant dense<0.000000e+00> : vector<40x256xf32>
    %382 = tpu.matmul %380, %381, %cst_116 {dimension_numbers = #tpu.dot_dimension_numbers<[1], [0], [0], [1], [0, 0, 1, 1], [], []>} : vector<40x40xbf16>, vector<40x256xbf16>, vector<40x256xf32> -> vector<40x256xf32>
    %c1_117 = arith.constant 1 : index
    %c200_118 = arith.constant 200 : index
    %c0_119 = arith.constant 0 : index
    %383 = vector.load %arg3[%c1_117, %c200_118, %c0_119] : memref<2x440x1xf32, #tpu.memory_space<vmem>>, vector<1x40x1xf32>
    %384 = vector.shape_cast %383 : vector<1x40x1xf32> to vector<40x1xf32>
    %385 = vector.broadcast %384 : vector<40x1xf32> to vector<40x256xf32>
    %386 = arith.addf %382, %385 : vector<40x256xf32>
    %387 = arith.addf %368, %386 : vector<40x256xf32>
    %c1_120 = arith.constant 1 : index
    %c320_121 = arith.constant 320 : index
    %c0_122 = arith.constant 0 : index
    %388 = vector.load %arg3[%c1_120, %c320_121, %c0_122] : memref<2x440x1xf32, #tpu.memory_space<vmem>>, vector<1x40x1xf32>
    %389 = vector.shape_cast %388 : vector<1x40x1xf32> to vector<40x1xf32>
    %c1_123 = arith.constant 1 : index
    %c360_124 = arith.constant 360 : index
    %c0_125 = arith.constant 0 : index
    %390 = vector.load %arg3[%c1_123, %c360_124, %c0_125] : memref<2x440x1xf32, #tpu.memory_space<vmem>>, vector<1x40x1xf32>
    %391 = vector.shape_cast %390 : vector<1x40x1xf32> to vector<40x1xf32>
    %cst_126 = arith.constant dense<0.000000e+00> : vector<256xf32>
    %392 = vector.multi_reduction <add>, %387, %cst_126 [0] : vector<40x256xf32> to vector<256xf32>
    %393 = vector.shape_cast %392 : vector<256xf32> to vector<1x256xf32>
    %cst_127 = arith.constant 4.000000e+01 : f32
    %394 = vector.broadcast %cst_127 : f32 to vector<1x256xf32>
    %395 = arith.divf %393, %394 : vector<1x256xf32>
    %396 = vector.broadcast %395 : vector<1x256xf32> to vector<40x256xf32>
    %397 = arith.subf %387, %396 : vector<40x256xf32>
    %398 = arith.mulf %397, %397 : vector<40x256xf32>
    %cst_128 = arith.constant dense<0.000000e+00> : vector<256xf32>
    %399 = vector.multi_reduction <add>, %398, %cst_128 [0] : vector<40x256xf32> to vector<256xf32>
    %400 = vector.shape_cast %399 : vector<256xf32> to vector<1x256xf32>
    %cst_129 = arith.constant 4.000000e+01 : f32
    %401 = vector.broadcast %cst_129 : f32 to vector<1x256xf32>
    %402 = arith.divf %400, %401 : vector<1x256xf32>
    %403 = vector.broadcast %395 : vector<1x256xf32> to vector<40x256xf32>
    %404 = arith.subf %387, %403 : vector<40x256xf32>
    %cst_130 = arith.constant 9.99999974E-6 : f32
    %405 = vector.broadcast %cst_130 : f32 to vector<1x256xf32>
    %406 = arith.addf %402, %405 : vector<1x256xf32>
    %407 = math.rsqrt %406 : vector<1x256xf32>
    %408 = vector.broadcast %407 : vector<1x256xf32> to vector<40x256xf32>
    %409 = arith.mulf %404, %408 : vector<40x256xf32>
    %410 = vector.broadcast %389 : vector<40x1xf32> to vector<40x256xf32>
    %411 = arith.mulf %409, %410 : vector<40x256xf32>
    %412 = vector.broadcast %391 : vector<40x1xf32> to vector<40x256xf32>
    %413 = arith.addf %411, %412 : vector<40x256xf32>
    %c32_i32_131 = arith.constant 32 : i32
    %414 = tpu.dynamic_rotate %413 by %c32_i32_131 dim 1 : vector<40x256xf32>, i32 -> vector<40x256xf32>
    %415 = arith.addf %413, %414 : vector<40x256xf32>
    %c64_i32_132 = arith.constant 64 : i32
    %416 = tpu.dynamic_rotate %413 by %c64_i32_132 dim 1 : vector<40x256xf32>, i32 -> vector<40x256xf32>
    %417 = arith.addf %415, %416 : vector<40x256xf32>
    %c96_i32_133 = arith.constant 96 : i32
    %418 = tpu.dynamic_rotate %413 by %c96_i32_133 dim 1 : vector<40x256xf32>, i32 -> vector<40x256xf32>
    %419 = arith.addf %417, %418 : vector<40x256xf32>
    %c128_i32_134 = arith.constant 128 : i32
    %420 = tpu.dynamic_rotate %413 by %c128_i32_134 dim 1 : vector<40x256xf32>, i32 -> vector<40x256xf32>
    %421 = arith.addf %419, %420 : vector<40x256xf32>
    %c160_i32_135 = arith.constant 160 : i32
    %422 = tpu.dynamic_rotate %413 by %c160_i32_135 dim 1 : vector<40x256xf32>, i32 -> vector<40x256xf32>
    %423 = arith.addf %421, %422 : vector<40x256xf32>
    %c192_i32_136 = arith.constant 192 : i32
    %424 = tpu.dynamic_rotate %413 by %c192_i32_136 dim 1 : vector<40x256xf32>, i32 -> vector<40x256xf32>
    %425 = arith.addf %423, %424 : vector<40x256xf32>
    %c224_i32_137 = arith.constant 224 : i32
    %426 = tpu.dynamic_rotate %413 by %c224_i32_137 dim 1 : vector<40x256xf32>, i32 -> vector<40x256xf32>
    %427 = arith.addf %425, %426 : vector<40x256xf32>
    %428 = vector.extract_strided_slice %427 {offsets = [0, 0], sizes = [40, 32], strides = [1, 1]} : vector<40x256xf32> to vector<40x32xf32>
    %cst_138 = arith.constant 1.250000e-01 : f32
    %429 = vector.broadcast %cst_138 : f32 to vector<40x32xf32>
    %430 = arith.mulf %428, %429 : vector<40x32xf32>
    %c0_139 = arith.constant 0 : index
    %c272 = arith.constant 272 : index
    %c0_140 = arith.constant 0 : index
    %431 = vector.load %arg2[%c0_139, %c272, %c0_140] : memref<2x320x40xbf16, #tpu.memory_space<vmem>>, vector<1x40x40xbf16>
    %432 = vector.shape_cast %431 : vector<1x40x40xbf16> to vector<40x40xbf16>
    %433 = arith.truncf %430 : vector<40x32xf32> to vector<40x32xbf16>
    %cst_141 = arith.constant dense<0.000000e+00> : vector<40x32xf32>
    %434 = tpu.matmul %432, %433, %cst_141 {dimension_numbers = #tpu.dot_dimension_numbers<[1], [0], [0], [1], [0, 0, 1, 1], [], []>} : vector<40x40xbf16>, vector<40x32xbf16>, vector<40x32xf32> -> vector<40x32xf32>
    %c0_142 = arith.constant 0 : index
    %c400 = arith.constant 400 : index
    %c0_143 = arith.constant 0 : index
    %435 = vector.load %arg3[%c0_142, %c400, %c0_143] : memref<2x440x1xf32, #tpu.memory_space<vmem>>, vector<1x40x1xf32>
    %436 = vector.shape_cast %435 : vector<1x40x1xf32> to vector<40x1xf32>
    %437 = vector.broadcast %436 : vector<40x1xf32> to vector<40x32xf32>
    %438 = arith.addf %434, %437 : vector<40x32xf32>
    %c0_144 = arith.constant 0 : index
    %c0_145 = arith.constant 0 : index
    %c0_146 = arith.constant 0 : index
    %439 = vector.load %arg4[%c0_144, %c0_145, %c0_146] : memref<1x40x32xf32, #tpu.memory_space<vmem>>, vector<1x40x32xf32>
    %440 = vector.shape_cast %439 : vector<1x40x32xf32> to vector<40x32xf32>
    %441 = vector.shape_cast %438 : vector<40x32xf32> to vector<1x40x32xf32>
    tpu.vector_store %arg4[%c0_144, %c0_145, %c0_146], %441 {strides = array<i32>} : memref<1x40x32xf32, #tpu.memory_space<vmem>>, vector<1x40x32xf32>,
    return
  }
  func.func @transform_0(%arg0: i32) -> (i32, i32, i32) {
    %c0_i32 = arith.constant 0 : i32
    %c0_i32_0 = arith.constant 0 : i32
    %c0_i32_1 = arith.constant 0 : i32
    return %arg0, %c0_i32, %c0_i32_0 : i32, i32, i32
  }
  func.func @transform_1(%arg0: i32) -> (i32, i32, i32) {
    %c0_i32 = arith.constant 0 : i32
    %c0_i32_0 = arith.constant 0 : i32
    %c0_i32_1 = arith.constant 0 : i32
    %c0_i32_2 = arith.constant 0 : i32
    return %c0_i32, %c0_i32_0, %c0_i32_1 : i32, i32, i32
  }
  func.func @transform_2(%arg0: i32) -> (i32, i32, i32) {
    %c0_i32 = arith.constant 0 : i32
    %c0_i32_0 = arith.constant 0 : i32
    %c0_i32_1 = arith.constant 0 : i32
    %c0_i32_2 = arith.constant 0 : i32
    return %c0_i32, %c0_i32_0, %c0_i32_1 : i32, i32, i32
  }
  func.func @transform_3(%arg0: i32) -> (i32, i32, i32) {
    %c0_i32 = arith.constant 0 : i32
    %c0_i32_0 = arith.constant 0 : i32
    %c0_i32_1 = arith.constant 0 : i32
    return %arg0, %c0_i32, %c0_i32_0 : i32, i32, i32
  }
}

</mosaic_0001>

<llo_original>
// kernel: trajectory_synthesizer_att.1
$region0: #{trajectory_synthesizer_att.1}
  #allocation0 [shape = 'u32[]', space=smem, size = 0x4, offset = 0x4, fixed_abs, tag = 'smem constant byte address 0x4 - core index']
  #allocation1 [shape = 'u32[144,128]{1,0:T(1,128)}', space=vmem, size = 0x12000, scoped, tag = 'internal scratch']
  %s0 = inlined_call_operand.vmem [shape: f32[2,40,256], index: 0, kind: input, shape index: {}]
  %s1 = inlined_call_operand.vmem [shape: bf16[2,320,40], index: 1, kind: input, shape index: {}]
  %s2 = inlined_call_operand.vmem [shape: f32[2,440,1], index: 2, kind: input, shape index: {}]
  %s3 = inlined_call_operand.vmem [shape: f32[2,40,32], index: 3, kind: output, shape index: {}]
  %s4 = sld [smem:[#allocation0]]
  $region45: #{trajectory_synthesizer_att.1} parent=0
    _
  %s6 = ssub.s32 1, %s4
  %s7 = scalar_select 0, %s6, %s4
  loop: start=0, step=1, limit=4
  $region2: #{trajectory_synthesizer_att.1} parent=0 // loop_pre_header
    _
  $region3: #{trajectory_synthesizer_att.1} parent=0 // loop_header
    %s9 = sphi 0, %s13
    %p10 = scmp.ge.s32.totalorder %s9, 4
    %s19 = sphi 0, %s21
    %s22 = sphi 0, %s19
    %s23 = sphi 0, %s22
    %s39 = sphi 0, %s23
    %s43 = sphi 0, %s43
    %s45 = sphi 0, %s43
    %s46 = sphi 0, %s45
    %s60 = sphi 0, %s46
    %s64 = sphi 0, %s64
    %s66 = sphi 0, %s64
    %s67 = sphi 0, %s66
    %s81 = sphi 0, %s67
    %s87 = sphi 0, %s89
    %s90 = sphi 0, %s87
    %s91 = sphi 0, %s90
    %s107 = sphi 0, %s91
  $region4: #{trajectory_synthesizer_att.1} parent=0 // loop_header_branch
    %12 = sbr.rel (%p10) target = $region8
  $region5: #{trajectory_synthesizer_att.1} parent=0 // loop_body
    %s14 = ssub.s32 %s9, 1
    %s15 = ssub.s32 %s9, 2
    %s16 = sadd.s32 %s9, 1
    %s17 = ssub.s32 %s9, %s16
    %p18 = scmp.eq.s32.totalorder %s17, 0
    %s20 = sadd.s32 %s19, 1
    %s21 = scalar_select %p18, %s19, %s20
    %p24 = pneg %p18
    %p25 = scmp.eq.s32.totalorder %s9, 1
    %p26 = por %p24, %p25
    %p27 = scmp.ne.s32.totalorder %s19, %s22
    %p28 = scmp.eq.s32.totalorder %s9, 0
    %p29 = por %p27, %p28
    %p30 = scmp.ne.s32.totalorder %s19, %s22
    %p31 = scmp.eq.s32.totalorder %s14, 1
    %p32 = por %p30, %p31
    %p33 = scmp.ne.s32.totalorder %s22, %s23
    %p34 = scmp.eq.s32.totalorder %s14, 0
    %p35 = por %p33, %p34
    %p36 = scmp.ne.s32.totalorder %s22, %s23
    %p37 = scmp.eq.s32.totalorder %s15, 1
    %p38 = por %p36, %p37
    %p40 = scmp.ne.s32.totalorder %s23, %s39
    %p41 = scmp.eq.s32.totalorder %s15, 0
    %p42 = por %p40, %p41
    %s44 = sadd.s32 %s43, 1
    %p47 = scmp.eq.s32.totalorder %s9, 1
    %p48 = scmp.ne.s32.totalorder %s43, %s45
    %p49 = scmp.eq.s32.totalorder %s9, 0
    %p50 = por %p48, %p49
    %p51 = scmp.ne.s32.totalorder %s43, %s45
    %p52 = scmp.eq.s32.totalorder %s14, 1
    %p53 = por %p51, %p52
    %p54 = scmp.ne.s32.totalorder %s45, %s46
    %p55 = scmp.eq.s32.totalorder %s14, 0
    %p56 = por %p54, %p55
    %p57 = scmp.ne.s32.totalorder %s45, %s46
    %p58 = scmp.eq.s32.totalorder %s15, 1
    %p59 = por %p57, %p58
    %p61 = scmp.ne.s32.totalorder %s46, %s60
    %p62 = scmp.eq.s32.totalorder %s15, 0
    %p63 = por %p61, %p62
    %s65 = sadd.s32 %s64, 1
    %p68 = scmp.eq.s32.totalorder %s9, 1
    %p69 = scmp.ne.s32.totalorder %s64, %s66
    %p70 = scmp.eq.s32.totalorder %s9, 0
    %p71 = por %p69, %p70
    %p72 = scmp.ne.s32.totalorder %s64, %s66
    %p73 = scmp.eq.s32.totalorder %s14, 1
    %p74 = por %p72, %p73
    %p75 = scmp.ne.s32.totalorder %s66, %s67
    %p76 = scmp.eq.s32.totalorder %s14, 0
    %p77 = por %p75, %p76
    %p78 = scmp.ne.s32.totalorder %s66, %s67
    %p79 = scmp.eq.s32.totalorder %s15, 1
    %p80 = por %p78, %p79
    %p82 = scmp.ne.s32.totalorder %s67, %s81
    %p83 = scmp.eq.s32.totalorder %s15, 0
    %p84 = por %p82, %p83
    %s85 = ssub.s32 %s9, %s16
    %p86 = scmp.eq.s32.totalorder %s85, 0
    %s88 = sadd.s32 %s87, 1
    %s89 = scalar_select %p86, %s87, %s88
    %p92 = pneg %p86
    %p93 = scmp.eq.s32.totalorder %s9, 1
    %p94 = por %p92, %p93
    %p95 = scmp.ne.s32.totalorder %s87, %s90
    %p96 = scmp.eq.s32.totalorder %s9, 0
    %p97 = por %p95, %p96
    %p98 = scmp.ne.s32.totalorder %s87, %s90
    %p99 = scmp.eq.s32.totalorder %s14, 1
    %p100 = por %p98, %p99
    %p101 = scmp.ne.s32.totalorder %s90, %s91
    %p102 = scmp.eq.s32.totalorder %s14, 0
    %p103 = por %p101, %p102
    %p104 = scmp.ne.s32.totalorder %s90, %s91
    %p105 = scmp.eq.s32.totalorder %s15, 1
    %p106 = por %p104, %p105
    %p108 = scmp.ne.s32.totalorder %s91, %s107
    %p109 = scmp.eq.s32.totalorder %s15, 0
    %p110 = por %p108, %p109
    %p111 = scmp.le.s32.totalorder 1, %s9
    %p112 = scmp.lt.s32.totalorder %s9, 3
    %p113 = pnand %p111, %p112
    %p114 = pneg %p113
    // Predicated region
    $region9: #{trajectory_synthesizer_att.1} parent=5 // pred_check
      _
    $region10: #{trajectory_synthesizer_att.1} parent=5 // pred_check_branch
      %116 = sbr.rel (%p113) target = $region12
    $region11: #{trajectory_synthesizer_att.1} parent=5 // pred_region
      %s117 = ssub.s32 %s9, 1
      // Predicated region
      $region13: #{trajectory_synthesizer_att.1} parent=11 // pred_check
        %p118 = pneg %p56
      $region14: #{trajectory_synthesizer_att.1} parent=11 // pred_check_branch
        %120 = sbr.rel (%p118) target = $region16
      $region15: #{trajectory_synthesizer_att.1} parent=11 // pred_region
        _
      $region16: #{trajectory_synthesizer_att.1} parent=11 // pred_fallthru
        _
      // Predicated region
      $region17: #{trajectory_synthesizer_att.1} parent=11 // pred_check
        %p121 = pneg %p77
      $region18: #{trajectory_synthesizer_att.1} parent=11 // pred_check_branch
        %123 = sbr.rel (%p121) target = $region20
      $region19: #{trajectory_synthesizer_att.1} parent=11 // pred_region
        _
      $region20: #{trajectory_synthesizer_att.1} parent=11 // pred_fallthru
        _
    $region12: #{trajectory_synthesizer_att.1} parent=5 // pred_fallthru
      _
    %p124 = scmp.lt.s32.totalorder %s9, 2
    // Predicated region
    $region21: #{trajectory_synthesizer_att.1} parent=5 // pred_check
      %p125 = pneg %p124
    $region22: #{trajectory_synthesizer_att.1} parent=5 // pred_check_branch
      %127 = sbr.rel (%p125) target = $region24
    $region23: #{trajectory_synthesizer_att.1} parent=5 // pred_region
      // Predicated region
      $region25: #{trajectory_synthesizer_att.1} parent=23 // pred_check
        %p128 = pneg %p29
      $region26: #{trajectory_synthesizer_att.1} parent=23 // pred_check_branch
        %130 = sbr.rel (%p128) target = $region28
      $region27: #{trajectory_synthesizer_att.1} parent=23 // pred_region
        %p131 = scmp.lt.s32.totalorder %s9, 1
        %s132 = scalar_select %p131, %s9, 1
        %s133 = smul.addr %s132, 10
        %s134 = smul.addr %s133, 8
        %s135 = scalar_lea.vmem %s0, %s134
      $region28: #{trajectory_synthesizer_att.1} parent=23 // pred_fallthru
        _
    $region24: #{trajectory_synthesizer_att.1} parent=5 // pred_fallthru
      _
    %p136 = scmp.le.s32.totalorder 1, %s9
    %p137 = scmp.lt.s32.totalorder %s9, 3
    %p138 = pnand %p136, %p137
    %p139 = pneg %p138
    // Predicated region
    $region29: #{trajectory_synthesizer_att.1} parent=5 // pred_check
      _
    $region30: #{trajectory_synthesizer_att.1} parent=5 // pred_check_branch
      %141 = sbr.rel (%p138) target = $region32
    $region31: #{trajectory_synthesizer_att.1} parent=5 // pred_region
      %s142 = ssub.s32 %s9, 1
      %p143 = scmp.lt.s32.totalorder %s14, 1
      %s144 = scalar_select %p143, %s14, 1
      %s145 = smul.addr %s144, 10
      %s146 = smul.addr %s145, 8
      %s147 = scalar_lea.vmem %s0, %s146
      %p148 = pneg %p35
      %p149 = pneg %p32
      %p150 = pneg %p56
      %p151 = pneg %p53
      %p152 = pneg %p77
      %p153 = pneg %p74
      %p154 = pneg %p103
      %p155 = pneg %p100
      %p156 = scmp.lt.s32.totalorder %s14, 1
      %s157 = scalar_select %p156, %s14, 1
      %s158 = smul.addr %s157, 5
      %s159 = smul.addr %s158, 8
      %s160 = scalar_lea.vmem %s3, %s159
      %p161 = scmp.lt.s32.totalorder %s14, 1
      %s162 = scalar_select %p161, %s14, 1
      %s163 = smul.addr %s162, 10
      %s164 = smul.addr %s163, 8
      %s165 = scalar_lea.vmem %s0, %s164
      %p166 = scmp.lt.s32.totalorder %s14, 1
      %s167 = scalar_select %p166, %s14, 1
      %s168 = smul.addr %s167, 5
      %s169 = smul.addr %s168, 8
      %s170 = scalar_lea.vmem %s3, %s169
      %v172 = vld [vmem:[%s165] sm:$0xff]
      %v173 = vld [vmem:[%s165 + $0x8] sm:$0xff]
      %v174 = vld [vmem:[%s165 + $0x10] sm:$0xff]
      %v175 = vld [vmem:[%s165 + $0x18] sm:$0xff]
      %v176 = vld [vmem:[%s165 + $0x20] sm:$0xff]
      %v177 = vld [vmem:[%s165 + $0x28] sm:$0xff]
      %v178 = vld [vmem:[%s165 + $0x30] sm:$0xff]
      %v179 = vld [vmem:[%s165 + $0x38] sm:$0xff]
      %v180 = vld [vmem:[%s165 + $0x40] sm:$0xff]
      %v181 = vld [vmem:[%s165 + $0x48] sm:$0xff]
      %v182 = vpack.c.bf16 %v174, %v172
      %v183 = vpack.c.bf16 %v175, %v173
      %v184 = vpack.c.bf16 %v178, %v176
      %v185 = vpack.c.bf16 %v179, %v177
      %v186 = vpack.c.bf16 %v180, %v180
      %v187 = vpack.c.bf16 %v181, %v181
      %v188 = vld [vmem:[%s1] sm:$0xf]
      %v189 = vld [vmem:[%s1 + $0x4] sm:$0xf]
      %v190 = vld [vmem:[%s1 + $0x8] sm:$0xf]
      %v191 = vld [vmem:[%s1 + $0xc] sm:$0xf]
      %v192 = vld [vmem:[%s1 + $0x10] sm:$0xf]
      %v193 = vld [vmem:[%s1 + $0x14] sm:$0xf]
      %v194 = vld [vmem:[%s1 + $0x18] sm:$0xf]
      %v195 = vld [vmem:[%s1 + $0x1c] sm:$0xf]
      %v196 = vld [vmem:[%s1 + $0x20] sm:$0xf]
      %v197 = vld [vmem:[%s1 + $0x24] sm:$0xf]
      %v198 = vld [vmem:[%s1 + $0x28] sm:$0xf]
      %v199 = vld [vmem:[%s1 + $0x2c] sm:$0xf]
      %v200 = vld [vmem:[%s1 + $0x30] sm:$0xf]
      %v201 = vld [vmem:[%s1 + $0x34] sm:$0xf]
      %v202 = vld [vmem:[%s1 + $0x38] sm:$0xf]
      %v203 = vld [vmem:[%s2] sm:$0xff]
      %v204 = vld [vmem:[%s2 + $0x8] sm:$0xff]
      %v205 = vld [vmem:[%s2 + $0x10] sm:$0xff]
      %v206 = vld [vmem:[%s2 + $0x18] sm:$0xff]
      %v207 = vld [vmem:[%s2 + $0x20] sm:$0xff]
      %v208 = vld [vmem:[%s2 + $0x28] sm:$0xff]
      %v209 = vld [vmem:[%s2 + $0x30] sm:$0xff]
      %v210 = vld [vmem:[%s2 + $0x38] sm:$0xff]
      %v211 = vld [vmem:[%s2 + $0x40] sm:$0xff]
      %v212 = vld [vmem:[%s2 + $0x48] sm:$0xff]
      %v213 = vld [vmem:[%s2 + $0x50] sm:$0xff]
      %v214 = vld [vmem:[%s2 + $0x58] sm:$0xff]
      %v215 = vld [vmem:[%s2 + $0x60] sm:$0xff]
      %v216 = vld [vmem:[%s2 + $0x68] sm:$0xff]
      %v217 = vld [vmem:[%s2 + $0x70] sm:$0xff]
      %219 = vset.pattern.permute.xlu0 0
      %220 = vperm.xlu0 %219, %v203
      %v221 = vpop.permute.xlu0 %220
      %224 = vset.pattern.permute.xlu0 0
      %225 = vperm.xlu0 %224, %v204
      %v226 = vpop.permute.xlu0 %225
      %229 = vset.pattern.permute.xlu0 0
      %230 = vperm.xlu0 %229, %v205
      %v231 = vpop.permute.xlu0 %230
      %234 = vset.pattern.permute.xlu0 0
      %235 = vperm.xlu0 %234, %v206
      %v236 = vpop.permute.xlu0 %235
      %239 = vset.pattern.permute.xlu0 0
      %240 = vperm.xlu0 %239, %v207
      %v241 = vpop.permute.xlu0 %240
      %244 = vset.pattern.permute.xlu0 0
      %245 = vperm.xlu0 %244, %v208
      %v246 = vpop.permute.xlu0 %245
      %249 = vset.pattern.permute.xlu0 0
      %250 = vperm.xlu0 %249, %v209
      %v251 = vpop.permute.xlu0 %250
      %254 = vset.pattern.permute.xlu0 0
      %255 = vperm.xlu0 %254, %v210
      %v256 = vpop.permute.xlu0 %255
      %259 = vset.pattern.permute.xlu0 0
      %260 = vperm.xlu0 %259, %v211
      %v261 = vpop.permute.xlu0 %260
      %264 = vset.pattern.permute.xlu0 0
      %265 = vperm.xlu0 %264, %v212
      %v266 = vpop.permute.xlu0 %265
      %269 = vset.pattern.permute.xlu0 0
      %270 = vperm.xlu0 %269, %v213
      %v271 = vpop.permute.xlu0 %270
      %274 = vset.pattern.permute.xlu0 0
      %275 = vperm.xlu0 %274, %v214
      %v276 = vpop.permute.xlu0 %275
      %279 = vset.pattern.permute.xlu0 0
      %280 = vperm.xlu0 %279, %v215
      %v281 = vpop.permute.xlu0 %280
      %284 = vset.pattern.permute.xlu0 0
      %285 = vperm.xlu0 %284, %v216
      %v286 = vpop.permute.xlu0 %285
      %289 = vset.pattern.permute.xlu0 0
      %290 = vperm.xlu0 %289, %v217
      %v291 = vpop.permute.xlu0 %290
      %v308 = vunpack.c.l.b16 %v188
      %v309 = vunpack.c.l.b16 %v189
      %v310 = vunpack.c.l.b16 %v190
      %v311 = vunpack.c.l.b16 %v191
      %v312 = vunpack.c.l.b16 %v192
      %v313 = vunpack.c.l.b16 %v193
      %v314 = vunpack.c.l.b16 %v194
      %v315 = vunpack.c.l.b16 %v195
      %v316 = vunpack.c.l.b16 %v196
      %v317 = vunpack.c.l.b16 %v197
      %v318 = vunpack.c.l.b16 %v198
      %v319 = vunpack.c.l.b16 %v199
      %v320 = vunpack.c.l.b16 %v200
      %v321 = vunpack.c.l.b16 %v201
      %v322 = vunpack.c.l.b16 %v202
      %v323 = vpack.c.b16 %v309, %v308
      %v324 = vpack.c.b16 %v311, %v310
      %v325 = vpack.c.b16 %v313, %v312
      %v326 = vpack.c.b16 %v315, %v314
      %v327 = vpack.c.b16 %v317, %v316
      %v328 = vpack.c.b16 %v319, %v318
      %v329 = vpack.c.b16 %v321, %v320
      %v330 = vpack.c.b16 %v322, %v322
      %vm331 = vcmask 326656
      %v333 = vsel %vm331, %v323, 0
      %v336 = vsel %vm331, %v324, 0
      %v339 = vsel %vm331, %v325, 0
      %v342 = vsel %vm331, %v326, 0
      %v345 = vsel %vm331, %v327, 0
      %v348 = vsel %vm331, %v328, 0
      %v351 = vsel %vm331, %v329, 0
      %v354 = vsel %vm331, %v330, 0
      %vm356 = vcmask 1043456
      %v358 = vsel %vm356, %v186, 0
      %v361 = vsel %vm356, %v187, 0
      %363 = vmatprep.subr.bf16.mxu0 %v183
      %364 = vmatpush1.bf16.msra.mxu0 %v182
      %365 = vmatprep.subr.bf16.mxu0 %v185
      %366 = vmatpush1.bf16.msra.mxu0 %v184
      %367 = vmatprep.subr.bf16.mxu0 %v361
      %368 = vmatpush1.bf16.msra.mxu0 %v358
      %369 = vmatprep.subr.bf16.mxu0 0
      %370 = vmatpush1.bf16.msra.mxu0 0
      %371 = vmatprep.subr.bf16.mxu0 0
      %372 = vmatpush1.bf16.msra.mxu0 0
      %373 = vmatprep.subr.bf16.mxu0 0
      %374 = vmatpush1.bf16.msra.mxu0 0
      %375 = vmatprep.subr.bf16.mxu0 0
      %376 = vmatpush1.bf16.msra.mxu0 0
      %377 = vmatprep.subr.bf16.mxu0 0
      %378 = vmatpush1.bf16.msra.mxu0 0
      %379 = vmatprep.subr.bf16.mxu0 0
      %380 = vmatpush1.bf16.msra.mxu0 0
      %381 = vmatprep.subr.bf16.mxu0 0
      %382 = vmatpush1.bf16.msra.mxu0 0
      %383 = vmatprep.subr.bf16.mxu0 0
      %384 = vmatpush1.bf16.msra.mxu0 0
      %385 = vmatprep.subr.bf16.mxu0 0
      %386 = vmatpush1.bf16.msra.mxu0 0
      %387 = vmatprep.subr.bf16.mxu0 0
      %388 = vmatpush1.bf16.msra.mxu0 0
      %389 = vmatprep.subr.bf16.mxu0 0
      %390 = vmatpush1.bf16.msra.mxu0 0
      %391 = vmatprep.subr.bf16.mxu0 0
      %392 = vmatpush1.bf16.msra.mxu0 0
      %393 = vmatprep.subr.bf16.mxu0 0
      %394 = vmatpush1.bf16.msra.mxu0 0
      %395 = vmatprep.mubr.bf16.mxu0 0
      %396 = vmatmul.mubr.bf16.gmra.mrb[0].mxu0 %v333
      %v397 = vpop.f32.mrb[0].mxu0
      %v398 = vadd.f32 %v221, %v397
      %v399 = vpop.f32.mrb[0].mxu0
      %v400 = vadd.f32 %v221, %v399
      %v401 = vpop.f32.mrb[0].mxu0
      %v402 = vadd.f32 %v226, %v401
      %v403 = vpop.f32.mrb[0].mxu0
      %v404 = vadd.f32 %v226, %v403
      %405 = vmatprep.mubr.bf16.mxu0 0
      %406 = vmatmul.mubr.bf16.gmra.mrb[0].mxu0 %v336
      %v407 = vpop.f32.mrb[0].mxu0
      %v408 = vadd.f32 %v231, %v407
      %v409 = vpop.f32.mrb[0].mxu0
      %v410 = vadd.f32 %v231, %v409
      %v411 = vpop.f32.mrb[0].mxu0
      %v412 = vadd.f32 %v236, %v411
      %v413 = vpop.f32.mrb[0].mxu0
      %v414 = vadd.f32 %v236, %v413
      %415 = vmatprep.mubr.bf16.mxu0 0
      %416 = vmatmul.mubr.bf16.gmra.mrb[0].mxu0 %v339
      %v417 = vpop.f32.mrb[0].mxu0
      %v418 = vadd.f32 %v241, %v417
      %v419 = vpop.f32.mrb[0].mxu0
      %v420 = vadd.f32 %v241, %v419
      %v421 = vpop.f32.mrb[0].mxu0
      %v422 = vadd.f32 %v246, %v421
      %v423 = vpop.f32.mrb[0].mxu0
      %v424 = vadd.f32 %v246, %v423
      %425 = vmatprep.mubr.bf16.mxu0 0
      %426 = vmatmul.mubr.bf16.gmra.mrb[0].mxu0 %v342
      %v427 = vpop.f32.mrb[0].mxu0
      %v428 = vadd.f32 %v251, %v427
      %v429 = vpop.f32.mrb[0].mxu0
      %v430 = vadd.f32 %v251, %v429
      %v431 = vpop.f32.mrb[0].mxu0
      %v432 = vadd.f32 %v256, %v431
      %v433 = vpop.f32.mrb[0].mxu0
      %v434 = vadd.f32 %v256, %v433
      %435 = vmatprep.mubr.bf16.mxu0 0
      %436 = vmatmul.mubr.bf16.gmra.mrb[0].mxu0 %v345
      %v437 = vpop.f32.mrb[0].mxu0
      %v438 = vadd.f32 %v261, %v437
      %v439 = vpop.f32.mrb[0].mxu0
      %v440 = vadd.f32 %v261, %v439
      %v441 = vpop.f32.mrb[0].mxu0
      %v442 = vadd.f32 %v266, %v441
      %v443 = vpop.f32.mrb[0].mxu0
      %v444 = vadd.f32 %v266, %v443
      %445 = vmatprep.mubr.bf16.mxu0 0
      %446 = vmatmul.mubr.bf16.gmra.mrb[0].mxu0 %v348
      %v447 = vpop.f32.mrb[0].mxu0
      %v448 = vadd.f32 %v271, %v447
      %v449 = vpop.f32.mrb[0].mxu0
      %v450 = vadd.f32 %v271, %v449
      %v451 = vpop.f32.mrb[0].mxu0
      %v452 = vadd.f32 %v276, %v451
      %v453 = vpop.f32.mrb[0].mxu0
      %v454 = vadd.f32 %v276, %v453
      %455 = vmatprep.mubr.bf16.mxu0 0
      %456 = vmatmul.mubr.bf16.gmra.mrb[0].mxu0 %v351
      %v457 = vpop.f32.mrb[0].mxu0
      %v458 = vadd.f32 %v281, %v457
      %v459 = vpop.f32.mrb[0].mxu0
      %v460 = vadd.f32 %v281, %v459
      %v461 = vpop.f32.mrb[0].mxu0
      %v462 = vadd.f32 %v286, %v461
      %v463 = vpop.f32.mrb[0].mxu0
      %v464 = vadd.f32 %v286, %v463
      %465 = vmatprep.mubr.bf16.mxu0 0
      %466 = vmatmul.mubr.bf16.gmra.mrb[0].mxu0 %v354
      %v467 = vpop.f32.mrb[0].mxu0
      %v468 = vadd.f32 %v291, %v467
      %v469 = vpop.f32.mrb[0].mxu0
      %v470 = vadd.f32 %v291, %v469
      %v471 = vpop.f32.mrb[0].mxu0
      %v472 = vpop.f32.mrb[0].mxu0
      %473 = vdwg.mxu0
      %v474 = vmul.f32 %v398, %v422
      %v475 = vmul.f32 %v400, %v424
      %v476 = vmul.f32 %v402, %v428
      %v477 = vmul.f32 %v404, %v430
      %v478 = vmul.f32 %v408, %v432
      %v479 = vmul.f32 %v410, %v434
      %v480 = vmul.f32 %v412, %v438
      %v481 = vmul.f32 %v414, %v440
      %v482 = vmul.f32 %v418, %v442
      %v483 = vmul.f32 %v420, %v444
      %v484 = vrot.slane %v474, 4
      %v485 = vadd.f32 %v474, %v484
      %v486 = vrot.slane %v485, 2
      %v487 = vadd.f32 %v485, %v486
      %v488 = vrot.slane %v487, 1
      %v489 = vadd.f32 %v487, %v488
      %v490 = vrot.slane %v475, 4
      %v491 = vadd.f32 %v475, %v490
      %v492 = vrot.slane %v491, 2
      %v493 = vadd.f32 %v491, %v492
      %v494 = vrot.slane %v493, 1
      %v495 = vadd.f32 %v493, %v494
      %v496 = vrot.slane %v476, 4
      %v497 = vadd.f32 %v476, %v496
      %v498 = vrot.slane %v497, 2
      %v499 = vadd.f32 %v497, %v498
      %v500 = vrot.slane %v499, 1
      %v501 = vadd.f32 %v499, %v500
      %v502 = vrot.slane %v477, 4
      %v503 = vadd.f32 %v477, %v502
      %v504 = vrot.slane %v503, 2
      %v505 = vadd.f32 %v503, %v504
      %v506 = vrot.slane %v505, 1
      %v507 = vadd.f32 %v505, %v506
      %v508 = vrot.slane %v478, 4
      %v509 = vadd.f32 %v478, %v508
      %v510 = vrot.slane %v509, 2
      %v511 = vadd.f32 %v509, %v510
      %v512 = vrot.slane %v511, 1
      %v513 = vadd.f32 %v511, %v512
      %v514 = vrot.slane %v479, 4
      %v515 = vadd.f32 %v479, %v514
      %v516 = vrot.slane %v515, 2
      %v517 = vadd.f32 %v515, %v516
      %v518 = vrot.slane %v517, 1
      %v519 = vadd.f32 %v517, %v518
      %v520 = vrot.slane %v480, 4
      %v521 = vadd.f32 %v480, %v520
      %v522 = vrot.slane %v521, 2
      %v523 = vadd.f32 %v521, %v522
      %v524 = vrot.slane %v523, 1
      %v525 = vadd.f32 %v523, %v524
      %v526 = vrot.slane %v481, 4
      %v527 = vadd.f32 %v481, %v526
      %v528 = vrot.slane %v527, 2
      %v529 = vadd.f32 %v527, %v528
      %v530 = vrot.slane %v529, 1
      %v531 = vadd.f32 %v529, %v530
      %v532 = vrot.slane %v482, 4
      %v533 = vadd.f32 %v482, %v532
      %v534 = vrot.slane %v533, 2
      %v535 = vadd.f32 %v533, %v534
      %v536 = vrot.slane %v535, 1
      %v537 = vadd.f32 %v535, %v536
      %v538 = vrot.slane %v483, 4
      %v539 = vadd.f32 %v483, %v538
      %v540 = vrot.slane %v539, 2
      %v541 = vadd.f32 %v539, %v540
      %v542 = vrot.slane %v541, 1
      %v543 = vadd.f32 %v541, %v542
      %544 = vrot.lane.b32.xlu0 %v422, 32
      %v545 = vpop.permute.xlu0 %544
      %546 = vrot.lane.b32.xlu0 %v428, 32
      %v547 = vpop.permute.xlu0 %546
      %548 = vrot.lane.b32.xlu0 %v432, 32
      %v549 = vpop.permute.xlu0 %548
      %550 = vrot.lane.b32.xlu0 %v438, 32
      %v551 = vpop.permute.xlu0 %550
      %552 = vrot.lane.b32.xlu0 %v442, 32
      %v553 = vpop.permute.xlu0 %552
      %554 = vrot.lane.b32.xlu0 %v424, 32
      %v555 = vpop.permute.xlu0 %554
      %556 = vrot.lane.b32.xlu0 %v430, 32
      %v557 = vpop.permute.xlu0 %556
      %558 = vrot.lane.b32.xlu0 %v434, 32
      %v559 = vpop.permute.xlu0 %558
      %560 = vrot.lane.b32.xlu0 %v440, 32
      %v561 = vpop.permute.xlu0 %560
      %562 = vrot.lane.b32.xlu0 %v444, 32
      %v563 = vpop.permute.xlu0 %562
      %v564 = vlaneseq
      %v565 = vand.u32 %v564, 127
      %vm566 = vcmp.lt.s32.totalorder %v565, 32
      %v567 = vsel %vm566, %v545, %v555
      %v568 = vsel %vm566, %v547, %v557
      %v569 = vsel %vm566, %v549, %v559
      %v570 = vsel %vm566, %v551, %v561
      %v571 = vsel %vm566, %v553, %v563
      %v572 = vsel %vm566, %v555, %v545
      %v573 = vsel %vm566, %v557, %v547
      %v574 = vsel %vm566, %v559, %v549
      %v575 = vsel %vm566, %v561, %v551
      %v576 = vsel %vm566, %v563, %v553
      %v577 = vmul.f32 %v398, %v572
      %v578 = vmul.f32 %v400, %v567
      %v579 = vmul.f32 %v402, %v573
      %v580 = vmul.f32 %v404, %v568
      %v581 = vmul.f32 %v408, %v574
      %v582 = vmul.f32 %v410, %v569
      %v583 = vmul.f32 %v412, %v575
      %v584 = vmul.f32 %v414, %v570
      %v585 = vmul.f32 %v418, %v576
      %v586 = vmul.f32 %v420, %v571
      %v587 = vrot.slane %v577, 4
      %v588 = vadd.f32 %v577, %v587
      %v589 = vrot.slane %v588, 2
      %v590 = vadd.f32 %v588, %v589
      %v591 = vrot.slane %v590, 1
      %v592 = vadd.f32 %v590, %v591
      %v593 = vrot.slane %v578, 4
      %v594 = vadd.f32 %v578, %v593
      %v595 = vrot.slane %v594, 2
      %v596 = vadd.f32 %v594, %v595
      %v597 = vrot.slane %v596, 1
      %v598 = vadd.f32 %v596, %v597
      %v599 = vrot.slane %v579, 4
      %v600 = vadd.f32 %v579, %v599
      %v601 = vrot.slane %v600, 2
      %v602 = vadd.f32 %v600, %v601
      %v603 = vrot.slane %v602, 1
      %v604 = vadd.f32 %v602, %v603
      %v605 = vrot.slane %v580, 4
      %v606 = vadd.f32 %v580, %v605
      %v607 = vrot.slane %v606, 2
      %v608 = vadd.f32 %v606, %v607
      %v609 = vrot.slane %v608, 1
      %v610 = vadd.f32 %v608, %v609
      %v611 = vrot.slane %v581, 4
      %v612 = vadd.f32 %v581, %v611
      %v613 = vrot.slane %v612, 2
      %v614 = vadd.f32 %v612, %v613
      %v615 = vrot.slane %v614, 1
      %v616 = vadd.f32 %v614, %v615
      %v617 = vrot.slane %v582, 4
      %v618 = vadd.f32 %v582, %v617
      %v619 = vrot.slane %v618, 2
      %v620 = vadd.f32 %v618, %v619
      %v621 = vrot.slane %v620, 1
      %v622 = vadd.f32 %v620, %v621
      %v623 = vrot.slane %v583, 4
      %v624 = vadd.f32 %v583, %v623
      %v625 = vrot.slane %v624, 2
      %v626 = vadd.f32 %v624, %v625
      %v627 = vrot.slane %v626, 1
      %v628 = vadd.f32 %v626, %v627
      %v629 = vrot.slane %v584, 4
      %v630 = vadd.f32 %v584, %v629
      %v631 = vrot.slane %v630, 2
      %v632 = vadd.f32 %v630, %v631
      %v633 = vrot.slane %v632, 1
      %v634 = vadd.f32 %v632, %v633
      %v635 = vrot.slane %v585, 4
      %v636 = vadd.f32 %v585, %v635
      %v637 = vrot.slane %v636, 2
      %v638 = vadd.f32 %v636, %v637
      %v639 = vrot.slane %v638, 1
      %v640 = vadd.f32 %v638, %v639
      %v641 = vrot.slane %v586, 4
      %v642 = vadd.f32 %v586, %v641
      %v643 = vrot.slane %v642, 2
      %v644 = vadd.f32 %v642, %v643
      %v645 = vrot.slane %v644, 1
      %v646 = vadd.f32 %v644, %v645
      %647 = vrot.lane.b32.xlu0 %v422, 64
      %v648 = vpop.permute.xlu0 %647
      %649 = vrot.lane.b32.xlu0 %v428, 64
      %v650 = vpop.permute.xlu0 %649
      %651 = vrot.lane.b32.xlu0 %v432, 64
      %v652 = vpop.permute.xlu0 %651
      %653 = vrot.lane.b32.xlu0 %v438, 64
      %v654 = vpop.permute.xlu0 %653
      %655 = vrot.lane.b32.xlu0 %v442, 64
      %v656 = vpop.permute.xlu0 %655
      %657 = vrot.lane.b32.xlu0 %v424, 64
      %v658 = vpop.permute.xlu0 %657
      %659 = vrot.lane.b32.xlu0 %v430, 64
      %v660 = vpop.permute.xlu0 %659
      %661 = vrot.lane.b32.xlu0 %v434, 64
      %v662 = vpop.permute.xlu0 %661
      %663 = vrot.lane.b32.xlu0 %v440, 64
      %v664 = vpop.permute.xlu0 %663
      %665 = vrot.lane.b32.xlu0 %v444, 64
      %v666 = vpop.permute.xlu0 %665
      %vm667 = vcmp.lt.s32.totalorder %v565, 64
      %v668 = vsel %vm667, %v648, %v658
      %v669 = vsel %vm667, %v650, %v660
      %v670 = vsel %vm667, %v652, %v662
      %v671 = vsel %vm667, %v654, %v664
      %v672 = vsel %vm667, %v656, %v666
      %v673 = vsel %vm667, %v658, %v648
      %v674 = vsel %vm667, %v660, %v650
      %v675 = vsel %vm667, %v662, %v652
      %v676 = vsel %vm667, %v664, %v654
      %v677 = vsel %vm667, %v666, %v656
      %v678 = vmul.f32 %v398, %v673
      %v679 = vmul.f32 %v400, %v668
      %v680 = vmul.f32 %v402, %v674
      %v681 = vmul.f32 %v404, %v669
      %v682 = vmul.f32 %v408, %v675
      %v683 = vmul.f32 %v410, %v670
      %v684 = vmul.f32 %v412, %v676
      %v685 = vmul.f32 %v414, %v671
      %v686 = vmul.f32 %v418, %v677
      %v687 = vmul.f32 %v420, %v672
      %v688 = vrot.slane %v678, 4
      %v689 = vadd.f32 %v678, %v688
      %v690 = vrot.slane %v689, 2
      %v691 = vadd.f32 %v689, %v690
      %v692 = vrot.slane %v691, 1
      %v693 = vadd.f32 %v691, %v692
      %v694 = vrot.slane %v679, 4
      %v695 = vadd.f32 %v679, %v694
      %v696 = vrot.slane %v695, 2
      %v697 = vadd.f32 %v695, %v696
      %v698 = vrot.slane %v697, 1
      %v699 = vadd.f32 %v697, %v698
      %v700 = vrot.slane %v680, 4
      %v701 = vadd.f32 %v680, %v700
      %v702 = vrot.slane %v701, 2
      %v703 = vadd.f32 %v701, %v702
      %v704 = vrot.slane %v703, 1
      %v705 = vadd.f32 %v703, %v704
      %v706 = vrot.slane %v681, 4
      %v707 = vadd.f32 %v681, %v706
      %v708 = vrot.slane %v707, 2
      %v709 = vadd.f32 %v707, %v708
      %v710 = vrot.slane %v709, 1
      %v711 = vadd.f32 %v709, %v710
      %v712 = vrot.slane %v682, 4
      %v713 = vadd.f32 %v682, %v712
      %v714 = vrot.slane %v713, 2
      %v715 = vadd.f32 %v713, %v714
      %v716 = vrot.slane %v715, 1
      %v717 = vadd.f32 %v715, %v716
      %v718 = vrot.slane %v683, 4
      %v719 = vadd.f32 %v683, %v718
      %v720 = vrot.slane %v719, 2
      %v721 = vadd.f32 %v719, %v720
      %v722 = vrot.slane %v721, 1
      %v723 = vadd.f32 %v721, %v722
      %v724 = vrot.slane %v684, 4
      %v725 = vadd.f32 %v684, %v724
      %v726 = vrot.slane %v725, 2
      %v727 = vadd.f32 %v725, %v726
      %v728 = vrot.slane %v727, 1
      %v729 = vadd.f32 %v727, %v728
      %v730 = vrot.slane %v685, 4
      %v731 = vadd.f32 %v685, %v730
      %v732 = vrot.slane %v731, 2
      %v733 = vadd.f32 %v731, %v732
      %v734 = vrot.slane %v733, 1
      %v735 = vadd.f32 %v733, %v734
      %v736 = vrot.slane %v686, 4
      %v737 = vadd.f32 %v686, %v736
      %v738 = vrot.slane %v737, 2
      %v739 = vadd.f32 %v737, %v738
      %v740 = vrot.slane %v739, 1
      %v741 = vadd.f32 %v739, %v740
      %v742 = vrot.slane %v687, 4
      %v743 = vadd.f32 %v687, %v742
      %v744 = vrot.slane %v743, 2
      %v745 = vadd.f32 %v743, %v744
      %v746 = vrot.slane %v745, 1
      %v747 = vadd.f32 %v745, %v746
      %748 = vrot.lane.b32.xlu0 %v422, 96
      %v749 = vpop.permute.xlu0 %748
      %750 = vrot.lane.b32.xlu0 %v428, 96
      %v751 = vpop.permute.xlu0 %750
      %752 = vrot.lane.b32.xlu0 %v432, 96
      %v753 = vpop.permute.xlu0 %752
      %754 = vrot.lane.b32.xlu0 %v438, 96
      %v755 = vpop.permute.xlu0 %754
      %756 = vrot.lane.b32.xlu0 %v442, 96
      %v757 = vpop.permute.xlu0 %756
      %758 = vrot.lane.b32.xlu0 %v424, 96
      %v759 = vpop.permute.xlu0 %758
      %760 = vrot.lane.b32.xlu0 %v430, 96
      %v761 = vpop.permute.xlu0 %760
      %762 = vrot.lane.b32.xlu0 %v434, 96
      %v763 = vpop.permute.xlu0 %762
      %764 = vrot.lane.b32.xlu0 %v440, 96
      %v765 = vpop.permute.xlu0 %764
      %766 = vrot.lane.b32.xlu0 %v444, 96
      %v767 = vpop.permute.xlu0 %766
      %vm768 = vcmp.lt.s32.totalorder %v565, 96
      %v769 = vsel %vm768, %v749, %v759
      %v770 = vsel %vm768, %v751, %v761
      %v771 = vsel %vm768, %v753, %v763
      %v772 = vsel %vm768, %v755, %v765
      %v773 = vsel %vm768, %v757, %v767
      %v774 = vsel %vm768, %v759, %v749
      %v775 = vsel %vm768, %v761, %v751
      %v776 = vsel %vm768, %v763, %v753
      %v777 = vsel %vm768, %v765, %v755
      %v778 = vsel %vm768, %v767, %v757
      %v779 = vmul.f32 %v398, %v774
      %v780 = vmul.f32 %v400, %v769
      %v781 = vmul.f32 %v402, %v775
      %v782 = vmul.f32 %v404, %v770
      %v783 = vmul.f32 %v408, %v776
      %v784 = vmul.f32 %v410, %v771
      %v785 = vmul.f32 %v412, %v777
      %v786 = vmul.f32 %v414, %v772
      %v787 = vmul.f32 %v418, %v778
      %v788 = vmul.f32 %v420, %v773
      %v789 = vrot.slane %v779, 4
      %v790 = vadd.f32 %v779, %v789
      %v791 = vrot.slane %v790, 2
      %v792 = vadd.f32 %v790, %v791
      %v793 = vrot.slane %v792, 1
      %v794 = vadd.f32 %v792, %v793
      %v795 = vrot.slane %v780, 4
      %v796 = vadd.f32 %v780, %v795
      %v797 = vrot.slane %v796, 2
      %v798 = vadd.f32 %v796, %v797
      %v799 = vrot.slane %v798, 1
      %v800 = vadd.f32 %v798, %v799
      %v801 = vrot.slane %v781, 4
      %v802 = vadd.f32 %v781, %v801
      %v803 = vrot.slane %v802, 2
      %v804 = vadd.f32 %v802, %v803
      %v805 = vrot.slane %v804, 1
      %v806 = vadd.f32 %v804, %v805
      %v807 = vrot.slane %v782, 4
      %v808 = vadd.f32 %v782, %v807
      %v809 = vrot.slane %v808, 2
      %v810 = vadd.f32 %v808, %v809
      %v811 = vrot.slane %v810, 1
      %v812 = vadd.f32 %v810, %v811
      %v813 = vrot.slane %v783, 4
      %v814 = vadd.f32 %v783, %v813
      %v815 = vrot.slane %v814, 2
      %v816 = vadd.f32 %v814, %v815
      %v817 = vrot.slane %v816, 1
      %v818 = vadd.f32 %v816, %v817
      %v819 = vrot.slane %v784, 4
      %v820 = vadd.f32 %v784, %v819
      %v821 = vrot.slane %v820, 2
      %v822 = vadd.f32 %v820, %v821
      %v823 = vrot.slane %v822, 1
      %v824 = vadd.f32 %v822, %v823
      %v825 = vrot.slane %v785, 4
      %v826 = vadd.f32 %v785, %v825
      %v827 = vrot.slane %v826, 2
      %v828 = vadd.f32 %v826, %v827
      %v829 = vrot.slane %v828, 1
      %v830 = vadd.f32 %v828, %v829
      %v831 = vrot.slane %v786, 4
      %v832 = vadd.f32 %v786, %v831
      %v833 = vrot.slane %v832, 2
      %v834 = vadd.f32 %v832, %v833
      %v835 = vrot.slane %v834, 1
      %v836 = vadd.f32 %v834, %v835
      %v837 = vrot.slane %v787, 4
      %v838 = vadd.f32 %v787, %v837
      %v839 = vrot.slane %v838, 2
      %v840 = vadd.f32 %v838, %v839
      %v841 = vrot.slane %v840, 1
      %v842 = vadd.f32 %v840, %v841
      %v843 = vrot.slane %v788, 4
      %v844 = vadd.f32 %v788, %v843
      %v845 = vrot.slane %v844, 2
      %v846 = vadd.f32 %v844, %v845
      %v847 = vrot.slane %v846, 1
      %v848 = vadd.f32 %v846, %v847
      %v849 = vmul.f32 %v398, %v424
      %v850 = vmul.f32 %v400, %v422
      %v851 = vmul.f32 %v402, %v430
      %v852 = vmul.f32 %v404, %v428
      %v853 = vmul.f32 %v408, %v434
      %v854 = vmul.f32 %v410, %v432
      %v855 = vmul.f32 %v412, %v440
      %v856 = vmul.f32 %v414, %v438
      %v857 = vmul.f32 %v418, %v444
      %v858 = vmul.f32 %v420, %v442
      %v859 = vrot.slane %v849, 4
      %v860 = vadd.f32 %v849, %v859
      %v861 = vrot.slane %v860, 2
      %v862 = vadd.f32 %v860, %v861
      %v863 = vrot.slane %v862, 1
      %v864 = vadd.f32 %v862, %v863
      %v865 = vrot.slane %v850, 4
      %v866 = vadd.f32 %v850, %v865
      %v867 = vrot.slane %v866, 2
      %v868 = vadd.f32 %v866, %v867
      %v869 = vrot.slane %v868, 1
      %v870 = vadd.f32 %v868, %v869
      %v871 = vrot.slane %v851, 4
      %v872 = vadd.f32 %v851, %v871
      %v873 = vrot.slane %v872, 2
      %v874 = vadd.f32 %v872, %v873
      %v875 = vrot.slane %v874, 1
      %v876 = vadd.f32 %v874, %v875
      %v877 = vrot.slane %v852, 4
      %v878 = vadd.f32 %v852, %v877
      %v879 = vrot.slane %v878, 2
      %v880 = vadd.f32 %v878, %v879
      %v881 = vrot.slane %v880, 1
      %v882 = vadd.f32 %v880, %v881
      %v883 = vrot.slane %v853, 4
      %v884 = vadd.f32 %v853, %v883
      %v885 = vrot.slane %v884, 2
      %v886 = vadd.f32 %v884, %v885
      %v887 = vrot.slane %v886, 1
      %v888 = vadd.f32 %v886, %v887
      %v889 = vrot.slane %v854, 4
      %v890 = vadd.f32 %v854, %v889
      %v891 = vrot.slane %v890, 2
      %v892 = vadd.f32 %v890, %v891
      %v893 = vrot.slane %v892, 1
      %v894 = vadd.f32 %v892, %v893
      %v895 = vrot.slane %v855, 4
      %v896 = vadd.f32 %v855, %v895
      %v897 = vrot.slane %v896, 2
      %v898 = vadd.f32 %v896, %v897
      %v899 = vrot.slane %v898, 1
      %v900 = vadd.f32 %v898, %v899
      %v901 = vrot.slane %v856, 4
      %v902 = vadd.f32 %v856, %v901
      %v903 = vrot.slane %v902, 2
      %v904 = vadd.f32 %v902, %v903
      %v905 = vrot.slane %v904, 1
      %v906 = vadd.f32 %v904, %v905
      %v907 = vrot.slane %v857, 4
      %v908 = vadd.f32 %v857, %v907
      %v909 = vrot.slane %v908, 2
      %v910 = vadd.f32 %v908, %v909
      %v911 = vrot.slane %v910, 1
      %v912 = vadd.f32 %v910, %v911
      %v913 = vrot.slane %v858, 4
      %v914 = vadd.f32 %v858, %v913
      %v915 = vrot.slane %v914, 2
      %v916 = vadd.f32 %v914, %v915
      %v917 = vrot.slane %v916, 1
      %v918 = vadd.f32 %v916, %v917
      %v919 = vmul.f32 %v398, %v567
      %v920 = vmul.f32 %v400, %v572
      %v921 = vmul.f32 %v402, %v568
      %v922 = vmul.f32 %v404, %v573
      %v923 = vmul.f32 %v408, %v569
      %v924 = vmul.f32 %v410, %v574
      %v925 = vmul.f32 %v412, %v570
      %v926 = vmul.f32 %v414, %v575
      %v927 = vmul.f32 %v418, %v571
      %v928 = vmul.f32 %v420, %v576
      %v929 = vrot.slane %v919, 4
      %v930 = vadd.f32 %v919, %v929
      %v931 = vrot.slane %v930, 2
      %v932 = vadd.f32 %v930, %v931
      %v933 = vrot.slane %v932, 1
      %v934 = vadd.f32 %v932, %v933
      %v935 = vrot.slane %v920, 4
      %v936 = vadd.f32 %v920, %v935
      %v937 = vrot.slane %v936, 2
      %v938 = vadd.f32 %v936, %v937
      %v939 = vrot.slane %v938, 1
      %v940 = vadd.f32 %v938, %v939
      %v941 = vrot.slane %v921, 4
      %v942 = vadd.f32 %v921, %v941
      %v943 = vrot.slane %v942, 2
      %v944 = vadd.f32 %v942, %v943
      %v945 = vrot.slane %v944, 1
      %v946 = vadd.f32 %v944, %v945
      %v947 = vrot.slane %v922, 4
      %v948 = vadd.f32 %v922, %v947
      %v949 = vrot.slane %v948, 2
      %v950 = vadd.f32 %v948, %v949
      %v951 = vrot.slane %v950, 1
      %v952 = vadd.f32 %v950, %v951
      %v953 = vrot.slane %v923, 4
      %v954 = vadd.f32 %v923, %v953
      %v955 = vrot.slane %v954, 2
      %v956 = vadd.f32 %v954, %v955
      %v957 = vrot.slane %v956, 1
      %v958 = vadd.f32 %v956, %v957
      %v959 = vrot.slane %v924, 4
      %v960 = vadd.f32 %v924, %v959
      %v961 = vrot.slane %v960, 2
      %v962 = vadd.f32 %v960, %v961
      %v963 = vrot.slane %v962, 1
      %v964 = vadd.f32 %v962, %v963
      %v965 = vrot.slane %v925, 4
      %v966 = vadd.f32 %v925, %v965
      %v967 = vrot.slane %v966, 2
      %v968 = vadd.f32 %v966, %v967
      %v969 = vrot.slane %v968, 1
      %v970 = vadd.f32 %v968, %v969
      %v971 = vrot.slane %v926, 4
      %v972 = vadd.f32 %v926, %v971
      %v973 = vrot.slane %v972, 2
      %v974 = vadd.f32 %v972, %v973
      %v975 = vrot.slane %v974, 1
      %v976 = vadd.f32 %v974, %v975
      %v977 = vrot.slane %v927, 4
      %v978 = vadd.f32 %v927, %v977
      %v979 = vrot.slane %v978, 2
      %v980 = vadd.f32 %v978, %v979
      %v981 = vrot.slane %v980, 1
      %v982 = vadd.f32 %v980, %v981
      %v983 = vrot.slane %v928, 4
      %v984 = vadd.f32 %v928, %v983
      %v985 = vrot.slane %v984, 2
      %v986 = vadd.f32 %v984, %v985
      %v987 = vrot.slane %v986, 1
      %v988 = vadd.f32 %v986, %v987
      %v989 = vmul.f32 %v398, %v668
      %v990 = vmul.f32 %v400, %v673
      %v991 = vmul.f32 %v402, %v669
      %v992 = vmul.f32 %v404, %v674
      %v993 = vmul.f32 %v408, %v670
      %v994 = vmul.f32 %v410, %v675
      %v995 = vmul.f32 %v412, %v671
      %v996 = vmul.f32 %v414, %v676
      %v997 = vmul.f32 %v418, %v672
      %v998 = vmul.f32 %v420, %v677
      %v999 = vrot.slane %v989, 4
      %v1000 = vadd.f32 %v989, %v999
      %v1001 = vrot.slane %v1000, 2
      %v1002 = vadd.f32 %v1000, %v1001
      %v1003 = vrot.slane %v1002, 1
      %v1004 = vadd.f32 %v1002, %v1003
      %v1005 = vrot.slane %v990, 4
      %v1006 = vadd.f32 %v990, %v1005
      %v1007 = vrot.slane %v1006, 2
      %v1008 = vadd.f32 %v1006, %v1007
      %v1009 = vrot.slane %v1008, 1
      %v1010 = vadd.f32 %v1008, %v1009
      %v1011 = vrot.slane %v991, 4
      %v1012 = vadd.f32 %v991, %v1011
      %v1013 = vrot.slane %v1012, 2
      %v1014 = vadd.f32 %v1012, %v1013
      %v1015 = vrot.slane %v1014, 1
      %v1016 = vadd.f32 %v1014, %v1015
      %v1017 = vrot.slane %v992, 4
      %v1018 = vadd.f32 %v992, %v1017
      %v1019 = vrot.slane %v1018, 2
      %v1020 = vadd.f32 %v1018, %v1019
      %v1021 = vrot.slane %v1020, 1
      %v1022 = vadd.f32 %v1020, %v1021
      %v1023 = vrot.slane %v993, 4
      %v1024 = vadd.f32 %v993, %v1023
      %v1025 = vrot.slane %v1024, 2
      %v1026 = vadd.f32 %v1024, %v1025
      %v1027 = vrot.slane %v1026, 1
      %v1028 = vadd.f32 %v1026, %v1027
      %v1029 = vrot.slane %v994, 4
      %v1030 = vadd.f32 %v994, %v1029
      %v1031 = vrot.slane %v1030, 2
      %v1032 = vadd.f32 %v1030, %v1031
      %v1033 = vrot.slane %v1032, 1
      %v1034 = vadd.f32 %v1032, %v1033
      %v1035 = vrot.slane %v995, 4
      %v1036 = vadd.f32 %v995, %v1035
      %v1037 = vrot.slane %v1036, 2
      %v1038 = vadd.f32 %v1036, %v1037
      %v1039 = vrot.slane %v1038, 1
      %v1040 = vadd.f32 %v1038, %v1039
      %v1041 = vrot.slane %v996, 4
      %v1042 = vadd.f32 %v996, %v1041
      %v1043 = vrot.slane %v1042, 2
      %v1044 = vadd.f32 %v1042, %v1043
      %v1045 = vrot.slane %v1044, 1
      %v1046 = vadd.f32 %v1044, %v1045
      %v1047 = vrot.slane %v997, 4
      %v1048 = vadd.f32 %v997, %v1047
      %v1049 = vrot.slane %v1048, 2
      %v1050 = vadd.f32 %v1048, %v1049
      %v1051 = vrot.slane %v1050, 1
      %v1052 = vadd.f32 %v1050, %v1051
      %v1053 = vrot.slane %v998, 4
      %v1054 = vadd.f32 %v998, %v1053
      %v1055 = vrot.slane %v1054, 2
      %v1056 = vadd.f32 %v1054, %v1055
      %v1057 = vrot.slane %v1056, 1
      %v1058 = vadd.f32 %v1056, %v1057
      %v1059 = vmul.f32 %v398, %v769
      %v1060 = vmul.f32 %v400, %v774
      %v1061 = vmul.f32 %v402, %v770
      %v1062 = vmul.f32 %v404, %v775
      %v1063 = vmul.f32 %v408, %v771
      %v1064 = vmul.f32 %v410, %v776
      %v1065 = vmul.f32 %v412, %v772
      %v1066 = vmul.f32 %v414, %v777
      %v1067 = vmul.f32 %v418, %v773
      %v1068 = vmul.f32 %v420, %v778
      %v1069 = vrot.slane %v1059, 4
      %v1070 = vadd.f32 %v1059, %v1069
      %v1071 = vrot.slane %v1070, 2
      %v1072 = vadd.f32 %v1070, %v1071
      %v1073 = vrot.slane %v1072, 1
      %v1074 = vadd.f32 %v1072, %v1073
      %v1075 = vrot.slane %v1060, 4
      %v1076 = vadd.f32 %v1060, %v1075
      %v1077 = vrot.slane %v1076, 2
      %v1078 = vadd.f32 %v1076, %v1077
      %v1079 = vrot.slane %v1078, 1
      %v1080 = vadd.f32 %v1078, %v1079
      %v1081 = vrot.slane %v1061, 4
      %v1082 = vadd.f32 %v1061, %v1081
      %v1083 = vrot.slane %v1082, 2
      %v1084 = vadd.f32 %v1082, %v1083
      %v1085 = vrot.slane %v1084, 1
      %v1086 = vadd.f32 %v1084, %v1085
      %v1087 = vrot.slane %v1062, 4
      %v1088 = vadd.f32 %v1062, %v1087
      %v1089 = vrot.slane %v1088, 2
      %v1090 = vadd.f32 %v1088, %v1089
      %v1091 = vrot.slane %v1090, 1
      %v1092 = vadd.f32 %v1090, %v1091
      %v1093 = vrot.slane %v1063, 4
      %v1094 = vadd.f32 %v1063, %v1093
      %v1095 = vrot.slane %v1094, 2
      %v1096 = vadd.f32 %v1094, %v1095
      %v1097 = vrot.slane %v1096, 1
      %v1098 = vadd.f32 %v1096, %v1097
      %v1099 = vrot.slane %v1064, 4
      %v1100 = vadd.f32 %v1064, %v1099
      %v1101 = vrot.slane %v1100, 2
      %v1102 = vadd.f32 %v1100, %v1101
      %v1103 = vrot.slane %v1102, 1
      %v1104 = vadd.f32 %v1102, %v1103
      %v1105 = vrot.slane %v1065, 4
      %v1106 = vadd.f32 %v1065, %v1105
      %v1107 = vrot.slane %v1106, 2
      %v1108 = vadd.f32 %v1106, %v1107
      %v1109 = vrot.slane %v1108, 1
      %v1110 = vadd.f32 %v1108, %v1109
      %v1111 = vrot.slane %v1066, 4
      %v1112 = vadd.f32 %v1066, %v1111
      %v1113 = vrot.slane %v1112, 2
      %v1114 = vadd.f32 %v1112, %v1113
      %v1115 = vrot.slane %v1114, 1
      %v1116 = vadd.f32 %v1114, %v1115
      %v1117 = vrot.slane %v1067, 4
      %v1118 = vadd.f32 %v1067, %v1117
      %v1119 = vrot.slane %v1118, 2
      %v1120 = vadd.f32 %v1118, %v1119
      %v1121 = vrot.slane %v1120, 1
      %v1122 = vadd.f32 %v1120, %v1121
      %v1123 = vrot.slane %v1068, 4
      %v1124 = vadd.f32 %v1068, %v1123
      %v1125 = vrot.slane %v1124, 2
      %v1126 = vadd.f32 %v1124, %v1125
      %v1127 = vrot.slane %v1126, 1
      %v1128 = vadd.f32 %v1126, %v1127
      %v1129 = vmax.f32 %v489, %v592
      %v1130 = vmax.f32 %v495, %v598
      %v1131 = vmax.f32 %v501, %v604
      %v1132 = vmax.f32 %v507, %v610
      %v1133 = vmax.f32 %v513, %v616
      %v1134 = vmax.f32 %v519, %v622
      %v1135 = vmax.f32 %v525, %v628
      %v1136 = vmax.f32 %v531, %v634
      %v1137 = vmax.f32 %v537, %v640
      %v1138 = vmax.f32 %v543, %v646
      %v1139 = vmax.f32 %v1129, %v693
      %v1140 = vmax.f32 %v1130, %v699
      %v1141 = vmax.f32 %v1131, %v705
      %v1142 = vmax.f32 %v1132, %v711
      %v1143 = vmax.f32 %v1133, %v717
      %v1144 = vmax.f32 %v1134, %v723
      %v1145 = vmax.f32 %v1135, %v729
      %v1146 = vmax.f32 %v1136, %v735
      %v1147 = vmax.f32 %v1137, %v741
      %v1148 = vmax.f32 %v1138, %v747
      %v1149 = vmax.f32 %v1139, %v794
      %v1150 = vmax.f32 %v1140, %v800
      %v1151 = vmax.f32 %v1141, %v806
      %v1152 = vmax.f32 %v1142, %v812
      %v1153 = vmax.f32 %v1143, %v818
      %v1154 = vmax.f32 %v1144, %v824
      %v1155 = vmax.f32 %v1145, %v830
      %v1156 = vmax.f32 %v1146, %v836
      %v1157 = vmax.f32 %v1147, %v842
      %v1158 = vmax.f32 %v1148, %v848
      %v1159 = vmax.f32 %v1149, %v864
      %v1160 = vmax.f32 %v1150, %v870
      %v1161 = vmax.f32 %v1151, %v876
      %v1162 = vmax.f32 %v1152, %v882
      %v1163 = vmax.f32 %v1153, %v888
      %v1164 = vmax.f32 %v1154, %v894
      %v1165 = vmax.f32 %v1155, %v900
      %v1166 = vmax.f32 %v1156, %v906
      %v1167 = vmax.f32 %v1157, %v912
      %v1168 = vmax.f32 %v1158, %v918
      %v1169 = vmax.f32 %v1159, %v934
      %v1170 = vmax.f32 %v1160, %v940
      %v1171 = vmax.f32 %v1161, %v946
      %v1172 = vmax.f32 %v1162, %v952
      %v1173 = vmax.f32 %v1163, %v958
      %v1174 = vmax.f32 %v1164, %v964
      %v1175 = vmax.f32 %v1165, %v970
      %v1176 = vmax.f32 %v1166, %v976
      %v1177 = vmax.f32 %v1167, %v982
      %v1178 = vmax.f32 %v1168, %v988
      %v1179 = vmax.f32 %v1169, %v1004
      %v1180 = vmax.f32 %v1170, %v1010
      %v1181 = vmax.f32 %v1171, %v1016
      %v1182 = vmax.f32 %v1172, %v1022
      %v1183 = vmax.f32 %v1173, %v1028
      %v1184 = vmax.f32 %v1174, %v1034
      %v1185 = vmax.f32 %v1175, %v1040
      %v1186 = vmax.f32 %v1176, %v1046
      %v1187 = vmax.f32 %v1177, %v1052
      %v1188 = vmax.f32 %v1178, %v1058
      %v1189 = vmax.f32 %v1179, %v1074
      %v1190 = vmax.f32 %v1180, %v1080
      %v1191 = vmax.f32 %v1181, %v1086
      %v1192 = vmax.f32 %v1182, %v1092
      %v1193 = vmax.f32 %v1183, %v1098
      %v1194 = vmax.f32 %v1184, %v1104
      %v1195 = vmax.f32 %v1185, %v1110
      %v1196 = vmax.f32 %v1186, %v1116
      %v1197 = vmax.f32 %v1187, %v1122
      %v1198 = vmax.f32 %v1188, %v1128
      %v1199 = vsub.f32 %v489, %v1189
      %v1200 = vsub.f32 %v495, %v1190
      %v1201 = vsub.f32 %v501, %v1191
      %v1202 = vsub.f32 %v507, %v1192
      %v1203 = vsub.f32 %v513, %v1193
      %v1204 = vsub.f32 %v519, %v1194
      %v1205 = vsub.f32 %v525, %v1195
      %v1206 = vsub.f32 %v531, %v1196
      %v1207 = vsub.f32 %v537, %v1197
      %v1208 = vsub.f32 %v543, %v1198
      %v1209 = vmul.f32 %v1199, 1.442695
      %v1210 = vpow.pop %v1209
      %v1211 = vmul.f32 %v1200, 1.442695
      %v1212 = vpow.pop %v1211
      %v1213 = vmul.f32 %v1201, 1.442695
      %v1214 = vpow.pop %v1213
      %v1215 = vmul.f32 %v1202, 1.442695
      %v1216 = vpow.pop %v1215
      %v1217 = vmul.f32 %v1203, 1.442695
      %v1218 = vpow.pop %v1217
      %v1219 = vmul.f32 %v1204, 1.442695
      %v1220 = vpow.pop %v1219
      %v1221 = vmul.f32 %v1205, 1.442695
      %v1222 = vpow.pop %v1221
      %v1223 = vmul.f32 %v1206, 1.442695
      %v1224 = vpow.pop %v1223
      %v1225 = vmul.f32 %v1207, 1.442695
      %v1226 = vpow.pop %v1225
      %v1227 = vmul.f32 %v1208, 1.442695
      %v1228 = vpow.pop %v1227
      %v1229 = vsub.f32 %v592, %v1189
      %v1230 = vsub.f32 %v598, %v1190
      %v1231 = vsub.f32 %v604, %v1191
      %v1232 = vsub.f32 %v610, %v1192
      %v1233 = vsub.f32 %v616, %v1193
      %v1234 = vsub.f32 %v622, %v1194
      %v1235 = vsub.f32 %v628, %v1195
      %v1236 = vsub.f32 %v634, %v1196
      %v1237 = vsub.f32 %v640, %v1197
      %v1238 = vsub.f32 %v646, %v1198
      %v1239 = vmul.f32 %v1229, 1.442695
      %v1240 = vpow.pop %v1239
      %v1241 = vmul.f32 %v1230, 1.442695
      %v1242 = vpow.pop %v1241
      %v1243 = vmul.f32 %v1231, 1.442695
      %v1244 = vpow.pop %v1243
      %v1245 = vmul.f32 %v1232, 1.442695
      %v1246 = vpow.pop %v1245
      %v1247 = vmul.f32 %v1233, 1.442695
      %v1248 = vpow.pop %v1247
      %v1249 = vmul.f32 %v1234, 1.442695
      %v1250 = vpow.pop %v1249
      %v1251 = vmul.f32 %v1235, 1.442695
      %v1252 = vpow.pop %v1251
      %v1253 = vmul.f32 %v1236, 1.442695
      %v1254 = vpow.pop %v1253
      %v1255 = vmul.f32 %v1237, 1.442695
      %v1256 = vpow.pop %v1255
      %v1257 = vmul.f32 %v1238, 1.442695
      %v1258 = vpow.pop %v1257
      %v1259 = vsub.f32 %v693, %v1189
      %v1260 = vsub.f32 %v699, %v1190
      %v1261 = vsub.f32 %v705, %v1191
      %v1262 = vsub.f32 %v711, %v1192
      %v1263 = vsub.f32 %v717, %v1193
      %v1264 = vsub.f32 %v723, %v1194
      %v1265 = vsub.f32 %v729, %v1195
      %v1266 = vsub.f32 %v735, %v1196
      %v1267 = vsub.f32 %v741, %v1197
      %v1268 = vsub.f32 %v747, %v1198
      %v1269 = vmul.f32 %v1259, 1.442695
      %v1270 = vpow.pop %v1269
      %v1271 = vmul.f32 %v1260, 1.442695
      %v1272 = vpow.pop %v1271
      %v1273 = vmul.f32 %v1261, 1.442695
      %v1274 = vpow.pop %v1273
      %v1275 = vmul.f32 %v1262, 1.442695
      %v1276 = vpow.pop %v1275
      %v1277 = vmul.f32 %v1263, 1.442695
      %v1278 = vpow.pop %v1277
      %v1279 = vmul.f32 %v1264, 1.442695
      %v1280 = vpow.pop %v1279
      %v1281 = vmul.f32 %v1265, 1.442695
      %v1282 = vpow.pop %v1281
      %v1283 = vmul.f32 %v1266, 1.442695
      %v1284 = vpow.pop %v1283
      %v1285 = vmul.f32 %v1267, 1.442695
      %v1286 = vpow.pop %v1285
      %v1287 = vmul.f32 %v1268, 1.442695
      %v1288 = vpow.pop %v1287
      %v1289 = vsub.f32 %v794, %v1189
      %v1290 = vsub.f32 %v800, %v1190
      %v1291 = vsub.f32 %v806, %v1191
      %v1292 = vsub.f32 %v812, %v1192
      %v1293 = vsub.f32 %v818, %v1193
      %v1294 = vsub.f32 %v824, %v1194
      %v1295 = vsub.f32 %v830, %v1195
      %v1296 = vsub.f32 %v836, %v1196
      %v1297 = vsub.f32 %v842, %v1197
      %v1298 = vsub.f32 %v848, %v1198
      %v1299 = vmul.f32 %v1289, 1.442695
      %v1300 = vpow.pop %v1299
      %v1301 = vmul.f32 %v1290, 1.442695
      %v1302 = vpow.pop %v1301
      %v1303 = vmul.f32 %v1291, 1.442695
      %v1304 = vpow.pop %v1303
      %v1305 = vmul.f32 %v1292, 1.442695
      %v1306 = vpow.pop %v1305
      %v1307 = vmul.f32 %v1293, 1.442695
      %v1308 = vpow.pop %v1307
      %v1309 = vmul.f32 %v1294, 1.442695
      %v1310 = vpow.pop %v1309
      %v1311 = vmul.f32 %v1295, 1.442695
      %v1312 = vpow.pop %v1311
      %v1313 = vmul.f32 %v1296, 1.442695
      %v1314 = vpow.pop %v1313
      %v1315 = vmul.f32 %v1297, 1.442695
      %v1316 = vpow.pop %v1315
      %v1317 = vmul.f32 %v1298, 1.442695
      %v1318 = vpow.pop %v1317
      %v1319 = vsub.f32 %v864, %v1189
      %v1320 = vsub.f32 %v870, %v1190
      %v1321 = vsub.f32 %v876, %v1191
      %v1322 = vsub.f32 %v882, %v1192
      %v1323 = vsub.f32 %v888, %v1193
      %v1324 = vsub.f32 %v894, %v1194
      %v1325 = vsub.f32 %v900, %v1195
      %v1326 = vsub.f32 %v906, %v1196
      %v1327 = vsub.f32 %v912, %v1197
      %v1328 = vsub.f32 %v918, %v1198
      %v1329 = vmul.f32 %v1319, 1.442695
      %v1330 = vpow.pop %v1329
      %v1331 = vmul.f32 %v1320, 1.442695
      %v1332 = vpow.pop %v1331
      %v1333 = vmul.f32 %v1321, 1.442695
      %v1334 = vpow.pop %v1333
      %v1335 = vmul.f32 %v1322, 1.442695
      %v1336 = vpow.pop %v1335
      %v1337 = vmul.f32 %v1323, 1.442695
      %v1338 = vpow.pop %v1337
      %v1339 = vmul.f32 %v1324, 1.442695
      %v1340 = vpow.pop %v1339
      %v1341 = vmul.f32 %v1325, 1.442695
      %v1342 = vpow.pop %v1341
      %v1343 = vmul.f32 %v1326, 1.442695
      %v1344 = vpow.pop %v1343
      %v1345 = vmul.f32 %v1327, 1.442695
      %v1346 = vpow.pop %v1345
      %v1347 = vmul.f32 %v1328, 1.442695
      %v1348 = vpow.pop %v1347
      %v1349 = vsub.f32 %v934, %v1189
      %v1350 = vsub.f32 %v940, %v1190
      %v1351 = vsub.f32 %v946, %v1191
      %v1352 = vsub.f32 %v952, %v1192
      %v1353 = vsub.f32 %v958, %v1193
      %v1354 = vsub.f32 %v964, %v1194
      %v1355 = vsub.f32 %v970, %v1195
      %v1356 = vsub.f32 %v976, %v1196
      %v1357 = vsub.f32 %v982, %v1197
      %v1358 = vsub.f32 %v988, %v1198
      %v1359 = vmul.f32 %v1349, 1.442695
      %v1360 = vpow.pop %v1359
      %v1361 = vmul.f32 %v1350, 1.442695
      %v1362 = vpow.pop %v1361
      %v1363 = vmul.f32 %v1351, 1.442695
      %v1364 = vpow.pop %v1363
      %v1365 = vmul.f32 %v1352, 1.442695
      %v1366 = vpow.pop %v1365
      %v1367 = vmul.f32 %v1353, 1.442695
      %v1368 = vpow.pop %v1367
      %v1369 = vmul.f32 %v1354, 1.442695
      %v1370 = vpow.pop %v1369
      %v1371 = vmul.f32 %v1355, 1.442695
      %v1372 = vpow.pop %v1371
      %v1373 = vmul.f32 %v1356, 1.442695
      %v1374 = vpow.pop %v1373
      %v1375 = vmul.f32 %v1357, 1.442695
      %v1376 = vpow.pop %v1375
      %v1377 = vmul.f32 %v1358, 1.442695
      %v1378 = vpow.pop %v1377
      %v1379 = vsub.f32 %v1004, %v1189
      %v1380 = vsub.f32 %v1010, %v1190
      %v1381 = vsub.f32 %v1016, %v1191
      %v1382 = vsub.f32 %v1022, %v1192
      %v1383 = vsub.f32 %v1028, %v1193
      %v1384 = vsub.f32 %v1034, %v1194
      %v1385 = vsub.f32 %v1040, %v1195
      %v1386 = vsub.f32 %v1046, %v1196
      %v1387 = vsub.f32 %v1052, %v1197
      %v1388 = vsub.f32 %v1058, %v1198
      %v1389 = vmul.f32 %v1379, 1.442695
      %v1390 = vpow.pop %v1389
      %v1391 = vmul.f32 %v1380, 1.442695
      %v1392 = vpow.pop %v1391
      %v1393 = vmul.f32 %v1381, 1.442695
      %v1394 = vpow.pop %v1393
      %v1395 = vmul.f32 %v1382, 1.442695
      %v1396 = vpow.pop %v1395
      %v1397 = vmul.f32 %v1383, 1.442695
      %v1398 = vpow.pop %v1397
      %v1399 = vmul.f32 %v1384, 1.442695
      %v1400 = vpow.pop %v1399
      %v1401 = vmul.f32 %v1385, 1.442695
      %v1402 = vpow.pop %v1401
      %v1403 = vmul.f32 %v1386, 1.442695
      %v1404 = vpow.pop %v1403
      %v1405 = vmul.f32 %v1387, 1.442695
      %v1406 = vpow.pop %v1405
      %v1407 = vmul.f32 %v1388, 1.442695
      %v1408 = vpow.pop %v1407
      %v1409 = vsub.f32 %v1074, %v1189
      %v1410 = vsub.f32 %v1080, %v1190
      %v1411 = vsub.f32 %v1086, %v1191
      %v1412 = vsub.f32 %v1092, %v1192
      %v1413 = vsub.f32 %v1098, %v1193
      %v1414 = vsub.f32 %v1104, %v1194
      %v1415 = vsub.f32 %v1110, %v1195
      %v1416 = vsub.f32 %v1116, %v1196
      %v1417 = vsub.f32 %v1122, %v1197
      %v1418 = vsub.f32 %v1128, %v1198
      %v1419 = vmul.f32 %v1409, 1.442695
      %v1420 = vpow.pop %v1419
      %v1421 = vmul.f32 %v1410, 1.442695
      %v1422 = vpow.pop %v1421
      %v1423 = vmul.f32 %v1411, 1.442695
      %v1424 = vpow.pop %v1423
      %v1425 = vmul.f32 %v1412, 1.442695
      %v1426 = vpow.pop %v1425
      %v1427 = vmul.f32 %v1413, 1.442695
      %v1428 = vpow.pop %v1427
      %v1429 = vmul.f32 %v1414, 1.442695
      %v1430 = vpow.pop %v1429
      %v1431 = vmul.f32 %v1415, 1.442695
      %v1432 = vpow.pop %v1431
      %v1433 = vmul.f32 %v1416, 1.442695
      %v1434 = vpow.pop %v1433
      %v1435 = vmul.f32 %v1417, 1.442695
      %v1436 = vpow.pop %v1435
      %v1437 = vmul.f32 %v1418, 1.442695
      %v1438 = vpow.pop %v1437
      %v1439 = vadd.f32 %v1210, %v1240
      %v1440 = vadd.f32 %v1212, %v1242
      %v1441 = vadd.f32 %v1214, %v1244
      %v1442 = vadd.f32 %v1216, %v1246
      %v1443 = vadd.f32 %v1218, %v1248
      %v1444 = vadd.f32 %v1220, %v1250
      %v1445 = vadd.f32 %v1222, %v1252
      %v1446 = vadd.f32 %v1224, %v1254
      %v1447 = vadd.f32 %v1226, %v1256
      %v1448 = vadd.f32 %v1228, %v1258
      %v1449 = vadd.f32 %v1439, %v1270
      %v1450 = vadd.f32 %v1440, %v1272
      %v1451 = vadd.f32 %v1441, %v1274
      %v1452 = vadd.f32 %v1442, %v1276
      %v1453 = vadd.f32 %v1443, %v1278
      %v1454 = vadd.f32 %v1444, %v1280
      %v1455 = vadd.f32 %v1445, %v1282
      %v1456 = vadd.f32 %v1446, %v1284
      %v1457 = vadd.f32 %v1447, %v1286
      %v1458 = vadd.f32 %v1448, %v1288
      %v1459 = vadd.f32 %v1449, %v1300
      %v1460 = vadd.f32 %v1450, %v1302
      %v1461 = vadd.f32 %v1451, %v1304
      %v1462 = vadd.f32 %v1452, %v1306
      %v1463 = vadd.f32 %v1453, %v1308
      %v1464 = vadd.f32 %v1454, %v1310
      %v1465 = vadd.f32 %v1455, %v1312
      %v1466 = vadd.f32 %v1456, %v1314
      %v1467 = vadd.f32 %v1457, %v1316
      %v1468 = vadd.f32 %v1458, %v1318
      %v1469 = vadd.f32 %v1459, %v1330
      %v1470 = vadd.f32 %v1460, %v1332
      %v1471 = vadd.f32 %v1461, %v1334
      %v1472 = vadd.f32 %v1462, %v1336
      %v1473 = vadd.f32 %v1463, %v1338
      %v1474 = vadd.f32 %v1464, %v1340
      %v1475 = vadd.f32 %v1465, %v1342
      %v1476 = vadd.f32 %v1466, %v1344
      %v1477 = vadd.f32 %v1467, %v1346
      %v1478 = vadd.f32 %v1468, %v1348
      %v1479 = vadd.f32 %v1469, %v1360
      %v1480 = vadd.f32 %v1470, %v1362
      %v1481 = vadd.f32 %v1471, %v1364
      %v1482 = vadd.f32 %v1472, %v1366
      %v1483 = vadd.f32 %v1473, %v1368
      %v1484 = vadd.f32 %v1474, %v1370
      %v1485 = vadd.f32 %v1475, %v1372
      %v1486 = vadd.f32 %v1476, %v1374
      %v1487 = vadd.f32 %v1477, %v1376
      %v1488 = vadd.f32 %v1478, %v1378
      %v1489 = vadd.f32 %v1479, %v1390
      %v1490 = vadd.f32 %v1480, %v1392
      %v1491 = vadd.f32 %v1481, %v1394
      %v1492 = vadd.f32 %v1482, %v1396
      %v1493 = vadd.f32 %v1483, %v1398
      %v1494 = vadd.f32 %v1484, %v1400
      %v1495 = vadd.f32 %v1485, %v1402
      %v1496 = vadd.f32 %v1486, %v1404
      %v1497 = vadd.f32 %v1487, %v1406
      %v1498 = vadd.f32 %v1488, %v1408
      %v1499 = vadd.f32 %v1489, %v1420
      %v1500 = vadd.f32 %v1490, %v1422
      %v1501 = vadd.f32 %v1491, %v1424
      %v1502 = vadd.f32 %v1492, %v1426
      %v1503 = vadd.f32 %v1493, %v1428
      %v1504 = vadd.f32 %v1494, %v1430
      %v1505 = vadd.f32 %v1495, %v1432
      %v1506 = vadd.f32 %v1496, %v1434
      %v1507 = vadd.f32 %v1497, %v1436
      %v1508 = vadd.f32 %v1498, %v1438
      %v1509 = vrcp.pop %v1499
      %v1510 = vrcp.pop %v1500
      %v1511 = vrcp.pop %v1501
      %v1512 = vrcp.pop %v1502
      %v1513 = vrcp.pop %v1503
      %v1514 = vrcp.pop %v1504
      %v1515 = vrcp.pop %v1505
      %v1516 = vrcp.pop %v1506
      %v1517 = vrcp.pop %v1507
      %v1518 = vrcp.pop %v1508
      %v1519 = vmul.f32 %v1210, %v448
      %v1520 = vmul.f32 %v1212, %v450
      %v1521 = vmul.f32 %v1214, %v452
      %v1522 = vmul.f32 %v1216, %v454
      %v1523 = vmul.f32 %v1218, %v458
      %v1524 = vmul.f32 %v1220, %v460
      %v1525 = vmul.f32 %v1222, %v462
      %v1526 = vmul.f32 %v1224, %v464
      %v1527 = vmul.f32 %v1226, %v468
      %v1528 = vmul.f32 %v1228, %v470
      %v1529 = vadd.f32 %v1519, 0.0
      %v1530 = vadd.f32 %v1520, 0.0
      %v1531 = vadd.f32 %v1521, 0.0
      %v1532 = vadd.f32 %v1522, 0.0
      %v1533 = vadd.f32 %v1523, 0.0
      %v1534 = vadd.f32 %v1524, 0.0
      %v1535 = vadd.f32 %v1525, 0.0
      %v1536 = vadd.f32 %v1526, 0.0
      %v1537 = vadd.f32 %v1527, 0.0
      %v1538 = vadd.f32 %v1528, 0.0
      %1539 = vrot.lane.b32.xlu0 %v448, 32
      %v1540 = vpop.permute.xlu0 %1539
      %1541 = vrot.lane.b32.xlu0 %v452, 32
      %v1542 = vpop.permute.xlu0 %1541
      %1543 = vrot.lane.b32.xlu0 %v458, 32
      %v1544 = vpop.permute.xlu0 %1543
      %1545 = vrot.lane.b32.xlu0 %v462, 32
      %v1546 = vpop.permute.xlu0 %1545
      %1547 = vrot.lane.b32.xlu0 %v468, 32
      %v1548 = vpop.permute.xlu0 %1547
      %1549 = vrot.lane.b32.xlu0 %v450, 32
      %v1550 = vpop.permute.xlu0 %1549
      %1551 = vrot.lane.b32.xlu0 %v454, 32
      %v1552 = vpop.permute.xlu0 %1551
      %1553 = vrot.lane.b32.xlu0 %v460, 32
      %v1554 = vpop.permute.xlu0 %1553
      %1555 = vrot.lane.b32.xlu0 %v464, 32
      %v1556 = vpop.permute.xlu0 %1555
      %1557 = vrot.lane.b32.xlu0 %v470, 32
      %v1558 = vpop.permute.xlu0 %1557
      %v1559 = vsel %vm566, %v1540, %v1550
      %v1560 = vsel %vm566, %v1542, %v1552
      %v1561 = vsel %vm566, %v1544, %v1554
      %v1562 = vsel %vm566, %v1546, %v1556
      %v1563 = vsel %vm566, %v1548, %v1558
      %v1564 = vsel %vm566, %v1550, %v1540
      %v1565 = vsel %vm566, %v1552, %v1542
      %v1566 = vsel %vm566, %v1554, %v1544
      %v1567 = vsel %vm566, %v1556, %v1546
      %v1568 = vsel %vm566, %v1558, %v1548
      %v1569 = vmul.f32 %v1240, %v1564
      %v1570 = vmul.f32 %v1242, %v1559
      %v1571 = vmul.f32 %v1244, %v1565
      %v1572 = vmul.f32 %v1246, %v1560
      %v1573 = vmul.f32 %v1248, %v1566
      %v1574 = vmul.f32 %v1250, %v1561
      %v1575 = vmul.f32 %v1252, %v1567
      %v1576 = vmul.f32 %v1254, %v1562
      %v1577 = vmul.f32 %v1256, %v1568
      %v1578 = vmul.f32 %v1258, %v1563
      %v1579 = vadd.f32 %v1529, %v1569
      %v1580 = vadd.f32 %v1530, %v1570
      %v1581 = vadd.f32 %v1531, %v1571
      %v1582 = vadd.f32 %v1532, %v1572
      %v1583 = vadd.f32 %v1533, %v1573
      %v1584 = vadd.f32 %v1534, %v1574
      %v1585 = vadd.f32 %v1535, %v1575
      %v1586 = vadd.f32 %v1536, %v1576
      %v1587 = vadd.f32 %v1537, %v1577
      %v1588 = vadd.f32 %v1538, %v1578
      %1589 = vrot.lane.b32.xlu0 %v448, 64
      %v1590 = vpop.permute.xlu0 %1589
      %1591 = vrot.lane.b32.xlu0 %v452, 64
      %v1592 = vpop.permute.xlu0 %1591
      %1593 = vrot.lane.b32.xlu0 %v458, 64
      %v1594 = vpop.permute.xlu0 %1593
      %1595 = vrot.lane.b32.xlu0 %v462, 64
      %v1596 = vpop.permute.xlu0 %1595
      %1597 = vrot.lane.b32.xlu0 %v468, 64
      %v1598 = vpop.permute.xlu0 %1597
      %1599 = vrot.lane.b32.xlu0 %v450, 64
      %v1600 = vpop.permute.xlu0 %1599
      %1601 = vrot.lane.b32.xlu0 %v454, 64
      %v1602 = vpop.permute.xlu0 %1601
      %1603 = vrot.lane.b32.xlu0 %v460, 64
      %v1604 = vpop.permute.xlu0 %1603
      %1605 = vrot.lane.b32.xlu0 %v464, 64
      %v1606 = vpop.permute.xlu0 %1605
      %1607 = vrot.lane.b32.xlu0 %v470, 64
      %v1608 = vpop.permute.xlu0 %1607
      %v1609 = vsel %vm667, %v1590, %v1600
      %v1610 = vsel %vm667, %v1592, %v1602
      %v1611 = vsel %vm667, %v1594, %v1604
      %v1612 = vsel %vm667, %v1596, %v1606
      %v1613 = vsel %vm667, %v1598, %v1608
      %v1614 = vsel %vm667, %v1600, %v1590
      %v1615 = vsel %vm667, %v1602, %v1592
      %v1616 = vsel %vm667, %v1604, %v1594
      %v1617 = vsel %vm667, %v1606, %v1596
      %v1618 = vsel %vm667, %v1608, %v1598
      %v1619 = vmul.f32 %v1270, %v1614
      %v1620 = vmul.f32 %v1272, %v1609
      %v1621 = vmul.f32 %v1274, %v1615
      %v1622 = vmul.f32 %v1276, %v1610
      %v1623 = vmul.f32 %v1278, %v1616
      %v1624 = vmul.f32 %v1280, %v1611
      %v1625 = vmul.f32 %v1282, %v1617
      %v1626 = vmul.f32 %v1284, %v1612
      %v1627 = vmul.f32 %v1286, %v1618
      %v1628 = vmul.f32 %v1288, %v1613
      %v1629 = vadd.f32 %v1579, %v1619
      %v1630 = vadd.f32 %v1580, %v1620
      %v1631 = vadd.f32 %v1581, %v1621
      %v1632 = vadd.f32 %v1582, %v1622
      %v1633 = vadd.f32 %v1583, %v1623
      %v1634 = vadd.f32 %v1584, %v1624
      %v1635 = vadd.f32 %v1585, %v1625
      %v1636 = vadd.f32 %v1586, %v1626
      %v1637 = vadd.f32 %v1587, %v1627
      %v1638 = vadd.f32 %v1588, %v1628
      %1639 = vrot.lane.b32.xlu0 %v448, 96
      %v1640 = vpop.permute.xlu0 %1639
      %1641 = vrot.lane.b32.xlu0 %v452, 96
      %v1642 = vpop.permute.xlu0 %1641
      %1643 = vrot.lane.b32.xlu0 %v458, 96
      %v1644 = vpop.permute.xlu0 %1643
      %1645 = vrot.lane.b32.xlu0 %v462, 96
      %v1646 = vpop.permute.xlu0 %1645
      %1647 = vrot.lane.b32.xlu0 %v468, 96
      %v1648 = vpop.permute.xlu0 %1647
      %1649 = vrot.lane.b32.xlu0 %v450, 96
      %v1650 = vpop.permute.xlu0 %1649
      %1651 = vrot.lane.b32.xlu0 %v454, 96
      %v1652 = vpop.permute.xlu0 %1651
      %1653 = vrot.lane.b32.xlu0 %v460, 96
      %v1654 = vpop.permute.xlu0 %1653
      %1655 = vrot.lane.b32.xlu0 %v464, 96
      %v1656 = vpop.permute.xlu0 %1655
      %1657 = vrot.lane.b32.xlu0 %v470, 96
      %v1658 = vpop.permute.xlu0 %1657
      %v1659 = vsel %vm768, %v1640, %v1650
      %v1660 = vsel %vm768, %v1642, %v1652
      %v1661 = vsel %vm768, %v1644, %v1654
      %v1662 = vsel %vm768, %v1646, %v1656
      %v1663 = vsel %vm768, %v1648, %v1658
      %v1664 = vsel %vm768, %v1650, %v1640
      %v1665 = vsel %vm768, %v1652, %v1642
      %v1666 = vsel %vm768, %v1654, %v1644
      %v1667 = vsel %vm768, %v1656, %v1646
      %v1668 = vsel %vm768, %v1658, %v1648
      %v1669 = vmul.f32 %v1300, %v1664
      %v1670 = vmul.f32 %v1302, %v1659
      %v1671 = vmul.f32 %v1304, %v1665
      %v1672 = vmul.f32 %v1306, %v1660
      %v1673 = vmul.f32 %v1308, %v1666
      %v1674 = vmul.f32 %v1310, %v1661
      %v1675 = vmul.f32 %v1312, %v1667
      %v1676 = vmul.f32 %v1314, %v1662
      %v1677 = vmul.f32 %v1316, %v1668
      %v1678 = vmul.f32 %v1318, %v1663
      %v1679 = vadd.f32 %v1629, %v1669
      %v1680 = vadd.f32 %v1630, %v1670
      %v1681 = vadd.f32 %v1631, %v1671
      %v1682 = vadd.f32 %v1632, %v1672
      %v1683 = vadd.f32 %v1633, %v1673
      %v1684 = vadd.f32 %v1634, %v1674
      %v1685 = vadd.f32 %v1635, %v1675
      %v1686 = vadd.f32 %v1636, %v1676
      %v1687 = vadd.f32 %v1637, %v1677
      %v1688 = vadd.f32 %v1638, %v1678
      %v1689 = vmul.f32 %v1330, %v450
      %v1690 = vmul.f32 %v1332, %v448
      %v1691 = vmul.f32 %v1334, %v454
      %v1692 = vmul.f32 %v1336, %v452
      %v1693 = vmul.f32 %v1338, %v460
      %v1694 = vmul.f32 %v1340, %v458
      %v1695 = vmul.f32 %v1342, %v464
      %v1696 = vmul.f32 %v1344, %v462
      %v1697 = vmul.f32 %v1346, %v470
      %v1698 = vmul.f32 %v1348, %v468
      %v1699 = vadd.f32 %v1679, %v1689
      %v1700 = vadd.f32 %v1680, %v1690
      %v1701 = vadd.f32 %v1681, %v1691
      %v1702 = vadd.f32 %v1682, %v1692
      %v1703 = vadd.f32 %v1683, %v1693
      %v1704 = vadd.f32 %v1684, %v1694
      %v1705 = vadd.f32 %v1685, %v1695
      %v1706 = vadd.f32 %v1686, %v1696
      %v1707 = vadd.f32 %v1687, %v1697
      %v1708 = vadd.f32 %v1688, %v1698
      %v1709 = vmul.f32 %v1360, %v1559
      %v1710 = vmul.f32 %v1362, %v1564
      %v1711 = vmul.f32 %v1364, %v1560
      %v1712 = vmul.f32 %v1366, %v1565
      %v1713 = vmul.f32 %v1368, %v1561
      %v1714 = vmul.f32 %v1370, %v1566
      %v1715 = vmul.f32 %v1372, %v1562
      %v1716 = vmul.f32 %v1374, %v1567
      %v1717 = vmul.f32 %v1376, %v1563
      %v1718 = vmul.f32 %v1378, %v1568
      %v1719 = vadd.f32 %v1699, %v1709
      %v1720 = vadd.f32 %v1700, %v1710
      %v1721 = vadd.f32 %v1701, %v1711
      %v1722 = vadd.f32 %v1702, %v1712
      %v1723 = vadd.f32 %v1703, %v1713
      %v1724 = vadd.f32 %v1704, %v1714
      %v1725 = vadd.f32 %v1705, %v1715
      %v1726 = vadd.f32 %v1706, %v1716
      %v1727 = vadd.f32 %v1707, %v1717
      %v1728 = vadd.f32 %v1708, %v1718
      %v1729 = vmul.f32 %v1390, %v1609
      %v1730 = vmul.f32 %v1392, %v1614
      %v1731 = vmul.f32 %v1394, %v1610
      %v1732 = vmul.f32 %v1396, %v1615
      %v1733 = vmul.f32 %v1398, %v1611
      %v1734 = vmul.f32 %v1400, %v1616
      %v1735 = vmul.f32 %v1402, %v1612
      %v1736 = vmul.f32 %v1404, %v1617
      %v1737 = vmul.f32 %v1406, %v1613
      %v1738 = vmul.f32 %v1408, %v1618
      %v1739 = vadd.f32 %v1719, %v1729
      %v1740 = vadd.f32 %v1720, %v1730
      %v1741 = vadd.f32 %v1721, %v1731
      %v1742 = vadd.f32 %v1722, %v1732
      %v1743 = vadd.f32 %v1723, %v1733
      %v1744 = vadd.f32 %v1724, %v1734
      %v1745 = vadd.f32 %v1725, %v1735
      %v1746 = vadd.f32 %v1726, %v1736
      %v1747 = vadd.f32 %v1727, %v1737
      %v1748 = vadd.f32 %v1728, %v1738
      %v1749 = vmul.f32 %v1420, %v1659
      %v1750 = vmul.f32 %v1422, %v1664
      %v1751 = vmul.f32 %v1424, %v1660
      %v1752 = vmul.f32 %v1426, %v1665
      %v1753 = vmul.f32 %v1428, %v1661
      %v1754 = vmul.f32 %v1430, %v1666
      %v1755 = vmul.f32 %v1432, %v1662
      %v1756 = vmul.f32 %v1434, %v1667
      %v1757 = vmul.f32 %v1436, %v1663
      %v1758 = vmul.f32 %v1438, %v1668
      %v1759 = vadd.f32 %v1739, %v1749
      %v1760 = vadd.f32 %v1740, %v1750
      %v1761 = vadd.f32 %v1741, %v1751
      %v1762 = vadd.f32 %v1742, %v1752
      %v1763 = vadd.f32 %v1743, %v1753
      %v1764 = vadd.f32 %v1744, %v1754
      %v1765 = vadd.f32 %v1745, %v1755
      %v1766 = vadd.f32 %v1746, %v1756
      %v1767 = vadd.f32 %v1747, %v1757
      %v1768 = vadd.f32 %v1748, %v1758
      %v1769 = vmul.f32 %v1759, %v1509
      %v1770 = vmul.f32 %v1760, %v1510
      %v1771 = vmul.f32 %v1761, %v1511
      %v1772 = vmul.f32 %v1762, %v1512
      %v1773 = vmul.f32 %v1763, %v1513
      %v1774 = vmul.f32 %v1764, %v1514
      %v1775 = vmul.f32 %v1765, %v1515
      %v1776 = vmul.f32 %v1766, %v1516
      %v1777 = vmul.f32 %v1767, %v1517
      %v1778 = vmul.f32 %v1768, %v1518
      %v1779 = vld [vmem:[%s1 + $0x40] sm:$0xf]
      %v1780 = vld [vmem:[%s1 + $0x44] sm:$0xf]
      %v1781 = vld [vmem:[%s1 + $0x48] sm:$0xf]
      %v1782 = vld [vmem:[%s1 + $0x4c] sm:$0xf]
      %v1783 = vld [vmem:[%s1 + $0x50] sm:$0xf]
      %v1784 = vpack.c.bf16 %v1771, %v1769
      %v1785 = vpack.c.bf16 %v1772, %v1770
      %v1786 = vpack.c.bf16 %v1775, %v1773
      %v1787 = vpack.c.bf16 %v1776, %v1774
      %v1788 = vpack.c.bf16 %v1777, %v1777
      %v1789 = vpack.c.bf16 %v1778, %v1778
      %v1790 = vld [vmem:[%s2 + $0x78] sm:$0xff]
      %v1791 = vld [vmem:[%s2 + $0x80] sm:$0xff]
      %v1792 = vld [vmem:[%s2 + $0x88] sm:$0xff]
      %v1793 = vld [vmem:[%s2 + $0x90] sm:$0xff]
      %v1794 = vld [vmem:[%s2 + $0x98] sm:$0xff]
      %1796 = vset.pattern.permute.xlu0 0
      %1797 = vperm.xlu0 %1796, %v1790
      %v1798 = vpop.permute.xlu0 %1797
      %1801 = vset.pattern.permute.xlu0 0
      %1802 = vperm.xlu0 %1801, %v1791
      %v1803 = vpop.permute.xlu0 %1802
      %1806 = vset.pattern.permute.xlu0 0
      %1807 = vperm.xlu0 %1806, %v1792
      %v1808 = vpop.permute.xlu0 %1807
      %1811 = vset.pattern.permute.xlu0 0
      %1812 = vperm.xlu0 %1811, %v1793
      %v1813 = vpop.permute.xlu0 %1812
      %1816 = vset.pattern.permute.xlu0 0
      %1817 = vperm.xlu0 %1816, %v1794
      %v1818 = vpop.permute.xlu0 %1817
      %v1825 = vunpack.c.l.b16 %v1779
      %v1826 = vunpack.c.l.b16 %v1780
      %v1827 = vunpack.c.l.b16 %v1781
      %v1828 = vunpack.c.l.b16 %v1782
      %v1829 = vunpack.c.l.b16 %v1783
      %v1830 = vpack.c.b16 %v1826, %v1825
      %v1831 = vpack.c.b16 %v1828, %v1827
      %v1832 = vpack.c.b16 %v1829, %v1829
      %v1834 = vsel %vm331, %v1830, 0
      %v1837 = vsel %vm331, %v1831, 0
      %v1840 = vsel %vm331, %v1832, 0
      %v1843 = vsel %vm356, %v1788, 0
      %v1846 = vsel %vm356, %v1789, 0
      %1848 = vmatprep.subr.bf16.mxu0 %v1785
      %1849 = vmatpush1.bf16.msra.mxu0 %v1784
      %1850 = vmatprep.subr.bf16.mxu0 %v1787
      %1851 = vmatpush1.bf16.msra.mxu0 %v1786
      %1852 = vmatprep.subr.bf16.mxu0 %v1846
      %1853 = vmatpush1.bf16.msra.mxu0 %v1843
      %1854 = vmatprep.subr.bf16.mxu0 0
      %1855 = vmatpush1.bf16.msra.mxu0 0
      %1856 = vmatprep.subr.bf16.mxu0 0
      %1857 = vmatpush1.bf16.msra.mxu0 0
      %1858 = vmatprep.subr.bf16.mxu0 0
      %1859 = vmatpush1.bf16.msra.mxu0 0
      %1860 = vmatprep.subr.bf16.mxu0 0
      %1861 = vmatpush1.bf16.msra.mxu0 0
      %1862 = vmatprep.subr.bf16.mxu0 0
      %1863 = vmatpush1.bf16.msra.mxu0 0
      %1864 = vmatprep.subr.bf16.mxu0 0
      %1865 = vmatpush1.bf16.msra.mxu0 0
      %1866 = vmatprep.subr.bf16.mxu0 0
      %1867 = vmatpush1.bf16.msra.mxu0 0
      %1868 = vmatprep.subr.bf16.mxu0 0
      %1869 = vmatpush1.bf16.msra.mxu0 0
      %1870 = vmatprep.subr.bf16.mxu0 0
      %1871 = vmatpush1.bf16.msra.mxu0 0
      %1872 = vmatprep.subr.bf16.mxu0 0
      %1873 = vmatpush1.bf16.msra.mxu0 0
      %1874 = vmatprep.subr.bf16.mxu0 0
      %1875 = vmatpush1.bf16.msra.mxu0 0
      %1876 = vmatprep.subr.bf16.mxu0 0
      %1877 = vmatpush1.bf16.msra.mxu0 0
      %1878 = vmatprep.subr.bf16.mxu0 0
      %1879 = vmatpush1.bf16.msra.mxu0 0
      %1880 = vmatprep.mubr.bf16.mxu0 0
      %1881 = vmatmul.mubr.bf16.gmra.mrb[0].mxu0 %v1834
      %v1882 = vpop.f32.mrb[0].mxu0
      %v1883 = vadd.f32 %v1798, %v1882
      %v1884 = vpop.f32.mrb[0].mxu0
      %v1885 = vadd.f32 %v1798, %v1884
      %v1886 = vpop.f32.mrb[0].mxu0
      %v1887 = vadd.f32 %v1803, %v1886
      %v1888 = vpop.f32.mrb[0].mxu0
      %v1889 = vadd.f32 %v1803, %v1888
      %1890 = vmatprep.mubr.bf16.mxu0 0
      %1891 = vmatmul.mubr.bf16.gmra.mrb[0].mxu0 %v1837
      %v1892 = vpop.f32.mrb[0].mxu0
      %v1893 = vadd.f32 %v1808, %v1892
      %v1894 = vpop.f32.mrb[0].mxu0
      %v1895 = vadd.f32 %v1808, %v1894
      %v1896 = vpop.f32.mrb[0].mxu0
      %v1897 = vadd.f32 %v1813, %v1896
      %v1898 = vpop.f32.mrb[0].mxu0
      %v1899 = vadd.f32 %v1813, %v1898
      %1900 = vmatprep.mubr.bf16.mxu0 0
      %1901 = vmatmul.mubr.bf16.gmra.mrb[0].mxu0 %v1840
      %v1902 = vpop.f32.mrb[0].mxu0
      %v1903 = vadd.f32 %v1818, %v1902
      %v1904 = vpop.f32.mrb[0].mxu0
      %v1905 = vadd.f32 %v1818, %v1904
      %v1906 = vpop.f32.mrb[0].mxu0
      %v1907 = vpop.f32.mrb[0].mxu0
      %1908 = vdwg.mxu0
      %v1909 = vadd.f32 %v172, %v1883
      %v1910 = vadd.f32 %v173, %v1885
      %v1911 = vadd.f32 %v174, %v1887
      %v1912 = vadd.f32 %v175, %v1889
      %v1913 = vadd.f32 %v176, %v1893
      %v1914 = vadd.f32 %v177, %v1895
      %v1915 = vadd.f32 %v178, %v1897
      %v1916 = vadd.f32 %v179, %v1899
      %v1917 = vadd.f32 %v180, %v1903
      %v1918 = vadd.f32 %v181, %v1905
      %v1919 = vld [vmem:[%s2 + $0xf0] sm:$0xff]
      %v1920 = vld [vmem:[%s2 + $0xf8] sm:$0xff]
      %v1921 = vld [vmem:[%s2 + $0x100] sm:$0xff]
      %v1922 = vld [vmem:[%s2 + $0x108] sm:$0xff]
      %v1923 = vld [vmem:[%s2 + $0x110] sm:$0xff]
      %v1924 = vld [vmem:[%s2 + $0x118] sm:$0xff]
      %v1925 = vld [vmem:[%s2 + $0x120] sm:$0xff]
      %v1926 = vld [vmem:[%s2 + $0x128] sm:$0xff]
      %v1927 = vld [vmem:[%s2 + $0x130] sm:$0xff]
      %v1928 = vld [vmem:[%s2 + $0x138] sm:$0xff]
      %v1929 = vadd.f32 %v1909, %v1911
      %v1930 = vadd.f32 %v1929, %v1913
      %v1931 = vadd.f32 %v1930, %v1915
      %v1932 = vadd.f32 %v1931, %v1917
      %v1933 = vrot.slane %v1932, 4
      %v1934 = vadd.f32 %v1932, %v1933
      %v1935 = vrot.slane %v1934, 2
      %v1936 = vadd.f32 %v1934, %v1935
      %v1937 = vrot.slane %v1936, 1
      %v1938 = vadd.f32 %v1936, %v1937
      %v1939 = vadd.f32 %v1910, %v1912
      %v1940 = vadd.f32 %v1939, %v1914
      %v1941 = vadd.f32 %v1940, %v1916
      %v1942 = vadd.f32 %v1941, %v1918
      %v1943 = vrot.slane %v1942, 4
      %v1944 = vadd.f32 %v1942, %v1943
      %v1945 = vrot.slane %v1944, 2
      %v1946 = vadd.f32 %v1944, %v1945
      %v1947 = vrot.slane %v1946, 1
      %v1948 = vadd.f32 %v1946, %v1947
      %v1949 = vrcp.pop 40.0
      %v1950 = vmul.f32 %v1938, %v1949
      %v1951 = vmul.f32 %v1948, %v1949
      %v1952 = vsub.f32 %v1909, %v1950
      %v1953 = vsub.f32 %v1910, %v1951
      %v1954 = vsub.f32 %v1911, %v1950
      %v1955 = vsub.f32 %v1912, %v1951
      %v1956 = vsub.f32 %v1913, %v1950
      %v1957 = vsub.f32 %v1914, %v1951
      %v1958 = vsub.f32 %v1915, %v1950
      %v1959 = vsub.f32 %v1916, %v1951
      %v1960 = vsub.f32 %v1917, %v1950
      %v1961 = vsub.f32 %v1918, %v1951
      %v1962 = vmul.f32 %v1952, %v1952
      %v1963 = vmul.f32 %v1953, %v1953
      %v1964 = vmul.f32 %v1954, %v1954
      %v1965 = vmul.f32 %v1955, %v1955
      %v1966 = vmul.f32 %v1956, %v1956
      %v1967 = vmul.f32 %v1957, %v1957
      %v1968 = vmul.f32 %v1958, %v1958
      %v1969 = vmul.f32 %v1959, %v1959
      %v1970 = vmul.f32 %v1960, %v1960
      %v1971 = vmul.f32 %v1961, %v1961
      %v1972 = vadd.f32 %v1962, %v1964
      %v1973 = vadd.f32 %v1972, %v1966
      %v1974 = vadd.f32 %v1973, %v1968
      %v1975 = vadd.f32 %v1974, %v1970
      %v1976 = vrot.slane %v1975, 4
      %v1977 = vadd.f32 %v1975, %v1976
      %v1978 = vrot.slane %v1977, 2
      %v1979 = vadd.f32 %v1977, %v1978
      %v1980 = vrot.slane %v1979, 1
      %v1981 = vadd.f32 %v1979, %v1980
      %v1982 = vadd.f32 %v1963, %v1965
      %v1983 = vadd.f32 %v1982, %v1967
      %v1984 = vadd.f32 %v1983, %v1969
      %v1985 = vadd.f32 %v1984, %v1971
      %v1986 = vrot.slane %v1985, 4
      %v1987 = vadd.f32 %v1985, %v1986
      %v1988 = vrot.slane %v1987, 2
      %v1989 = vadd.f32 %v1987, %v1988
      %v1990 = vrot.slane %v1989, 1
      %v1991 = vadd.f32 %v1989, %v1990
      %v1992 = vmul.f32 %v1981, %v1949
      %v1993 = vmul.f32 %v1991, %v1949
      %v1994 = vadd.f32 %v1992, 1e-05
      %v1995 = vadd.f32 %v1993, 1e-05
      %v1996 = vrsqrt.pop %v1994
      %v1997 = vrsqrt.pop %v1995
      %v1998 = vmul.f32 %v1952, %v1996
      %v1999 = vmul.f32 %v1953, %v1997
      %v2000 = vmul.f32 %v1954, %v1996
      %v2001 = vmul.f32 %v1955, %v1997
      %v2002 = vmul.f32 %v1956, %v1996
      %v2003 = vmul.f32 %v1957, %v1997
      %v2004 = vmul.f32 %v1958, %v1996
      %v2005 = vmul.f32 %v1959, %v1997
      %v2006 = vmul.f32 %v1960, %v1996
      %v2007 = vmul.f32 %v1961, %v1997
      %2009 = vset.pattern.permute.xlu0 0
      %2010 = vperm.xlu0 %2009, %v1919
      %v2011 = vpop.permute.xlu0 %2010
      %2014 = vset.pattern.permute.xlu0 0
      %2015 = vperm.xlu0 %2014, %v1920
      %v2016 = vpop.permute.xlu0 %2015
      %2019 = vset.pattern.permute.xlu0 0
      %2020 = vperm.xlu0 %2019, %v1921
      %v2021 = vpop.permute.xlu0 %2020
      %2024 = vset.pattern.permute.xlu0 0
      %2025 = vperm.xlu0 %2024, %v1922
      %v2026 = vpop.permute.xlu0 %2025
      %2029 = vset.pattern.permute.xlu0 0
      %2030 = vperm.xlu0 %2029, %v1923
      %v2031 = vpop.permute.xlu0 %2030
      %v2033 = vmul.f32 %v1998, %v2011
      %v2034 = vmul.f32 %v1999, %v2011
      %v2035 = vmul.f32 %v2000, %v2016
      %v2036 = vmul.f32 %v2001, %v2016
      %v2037 = vmul.f32 %v2002, %v2021
      %v2038 = vmul.f32 %v2003, %v2021
      %v2039 = vmul.f32 %v2004, %v2026
      %v2040 = vmul.f32 %v2005, %v2026
      %v2041 = vmul.f32 %v2006, %v2031
      %v2042 = vmul.f32 %v2007, %v2031
      %2044 = vset.pattern.permute.xlu0 0
      %2045 = vperm.xlu0 %2044, %v1924
      %v2046 = vpop.permute.xlu0 %2045
      %2049 = vset.pattern.permute.xlu0 0
      %2050 = vperm.xlu0 %2049, %v1925
      %v2051 = vpop.permute.xlu0 %2050
      %2054 = vset.pattern.permute.xlu0 0
      %2055 = vperm.xlu0 %2054, %v1926
      %v2056 = vpop.permute.xlu0 %2055
      %2059 = vset.pattern.permute.xlu0 0
      %2060 = vperm.xlu0 %2059, %v1927
      %v2061 = vpop.permute.xlu0 %2060
      %2064 = vset.pattern.permute.xlu0 0
      %2065 = vperm.xlu0 %2064, %v1928
      %v2066 = vpop.permute.xlu0 %2065
      %v2068 = vadd.f32 %v2033, %v2046
      %v2069 = vadd.f32 %v2034, %v2046
      %v2070 = vadd.f32 %v2035, %v2051
      %v2071 = vadd.f32 %v2036, %v2051
      %v2072 = vadd.f32 %v2037, %v2056
      %v2073 = vadd.f32 %v2038, %v2056
      %v2074 = vadd.f32 %v2039, %v2061
      %v2075 = vadd.f32 %v2040, %v2061
      %v2076 = vadd.f32 %v2041, %v2066
      %v2077 = vadd.f32 %v2042, %v2066
      %v2078 = vld [vmem:[%s1 + $0x58] sm:$0xf]
      %v2079 = vld [vmem:[%s1 + $0x5c] sm:$0xf]
      %v2080 = vld [vmem:[%s1 + $0x60] sm:$0xf]
      %v2081 = vld [vmem:[%s1 + $0x64] sm:$0xf]
      %v2082 = vld [vmem:[%s1 + $0x68] sm:$0xf]
      %v2083 = vpack.c.bf16 %v2070, %v2068
      %v2084 = vpack.c.bf16 %v2071, %v2069
      %v2085 = vpack.c.bf16 %v2074, %v2072
      %v2086 = vpack.c.bf16 %v2075, %v2073
      %v2087 = vpack.c.bf16 %v2076, %v2076
      %v2088 = vpack.c.bf16 %v2077, %v2077
      %v2089 = vld [vmem:[%s2 + $0xa0] sm:$0xff]
      %v2090 = vld [vmem:[%s2 + $0xa8] sm:$0xff]
      %v2091 = vld [vmem:[%s2 + $0xb0] sm:$0xff]
      %v2092 = vld [vmem:[%s2 + $0xb8] sm:$0xff]
      %v2093 = vld [vmem:[%s2 + $0xc0] sm:$0xff]
      %2095 = vset.pattern.permute.xlu0 0
      %2096 = vperm.xlu0 %2095, %v2089
      %v2097 = vpop.permute.xlu0 %2096
      %2100 = vset.pattern.permute.xlu0 0
      %2101 = vperm.xlu0 %2100, %v2090
      %v2102 = vpop.permute.xlu0 %2101
      %2105 = vset.pattern.permute.xlu0 0
      %2106 = vperm.xlu0 %2105, %v2091
      %v2107 = vpop.permute.xlu0 %2106
      %2110 = vset.pattern.permute.xlu0 0
      %2111 = vperm.xlu0 %2110, %v2092
      %v2112 = vpop.permute.xlu0 %2111
      %2115 = vset.pattern.permute.xlu0 0
      %2116 = vperm.xlu0 %2115, %v2093
      %v2117 = vpop.permute.xlu0 %2116
      %v2124 = vunpack.c.l.b16 %v2078
      %v2125 = vunpack.c.l.b16 %v2079
      %v2126 = vunpack.c.l.b16 %v2080
      %v2127 = vunpack.c.l.b16 %v2081
      %v2128 = vunpack.c.l.b16 %v2082
      %v2129 = vpack.c.b16 %v2125, %v2124
      %v2130 = vpack.c.b16 %v2127, %v2126
      %v2131 = vpack.c.b16 %v2128, %v2128
      %v2133 = vsel %vm331, %v2129, 0
      %v2136 = vsel %vm331, %v2130, 0
      %v2139 = vsel %vm331, %v2131, 0
      %v2142 = vsel %vm356, %v2087, 0
      %v2145 = vsel %vm356, %v2088, 0
      %2147 = vmatprep.subr.bf16.mxu0 %v2084
      %2148 = vmatpush1.bf16.msra.mxu0 %v2083
      %2149 = vmatprep.subr.bf16.mxu0 %v2086
      %2150 = vmatpush1.bf16.msra.mxu0 %v2085
      %2151 = vmatprep.subr.bf16.mxu0 %v2145
      %2152 = vmatpush1.bf16.msra.mxu0 %v2142
      %2153 = vmatprep.subr.bf16.mxu0 0
      %2154 = vmatpush1.bf16.msra.mxu0 0
      %2155 = vmatprep.subr.bf16.mxu0 0
      %2156 = vmatpush1.bf16.msra.mxu0 0
      %2157 = vmatprep.subr.bf16.mxu0 0
      %2158 = vmatpush1.bf16.msra.mxu0 0
      %2159 = vmatprep.subr.bf16.mxu0 0
      %2160 = vmatpush1.bf16.msra.mxu0 0
      %2161 = vmatprep.subr.bf16.mxu0 0
      %2162 = vmatpush1.bf16.msra.mxu0 0
      %2163 = vmatprep.subr.bf16.mxu0 0
      %2164 = vmatpush1.bf16.msra.mxu0 0
      %2165 = vmatprep.subr.bf16.mxu0 0
      %2166 = vmatpush1.bf16.msra.mxu0 0
      %2167 = vmatprep.subr.bf16.mxu0 0
      %2168 = vmatpush1.bf16.msra.mxu0 0
      %2169 = vmatprep.subr.bf16.mxu0 0
      %2170 = vmatpush1.bf16.msra.mxu0 0
      %2171 = vmatprep.subr.bf16.mxu0 0
      %2172 = vmatpush1.bf16.msra.mxu0 0
      %2173 = vmatprep.subr.bf16.mxu0 0
      %2174 = vmatpush1.bf16.msra.mxu0 0
      %2175 = vmatprep.subr.bf16.mxu0 0
      %2176 = vmatpush1.bf16.msra.mxu0 0
      %2177 = vmatprep.subr.bf16.mxu0 0
      %2178 = vmatpush1.bf16.msra.mxu0 0
      %2179 = vmatprep.mubr.bf16.mxu0 0
      %2180 = vmatmul.mubr.bf16.gmra.mrb[0].mxu0 %v2133
      %v2181 = vpop.f32.mrb[0].mxu0
      %v2182 = vadd.f32 %v2097, %v2181
      %v2183 = vpop.f32.mrb[0].mxu0
      %v2184 = vadd.f32 %v2097, %v2183
      %v2185 = vpop.f32.mrb[0].mxu0
      %v2186 = vadd.f32 %v2102, %v2185
      %v2187 = vpop.f32.mrb[0].mxu0
      %v2188 = vadd.f32 %v2102, %v2187
      %2189 = vmatprep.mubr.bf16.mxu0 0
      %2190 = vmatmul.mubr.bf16.gmra.mrb[0].mxu0 %v2136
      %v2191 = vpop.f32.mrb[0].mxu0
      %v2192 = vadd.f32 %v2107, %v2191
      %v2193 = vpop.f32.mrb[0].mxu0
      %v2194 = vadd.f32 %v2107, %v2193
      %v2195 = vpop.f32.mrb[0].mxu0
      %v2196 = vadd.f32 %v2112, %v2195
      %v2197 = vpop.f32.mrb[0].mxu0
      %v2198 = vadd.f32 %v2112, %v2197
      %2199 = vmatprep.mubr.bf16.mxu0 0
      %2200 = vmatmul.mubr.bf16.gmra.mrb[0].mxu0 %v2139
      %v2201 = vpop.f32.mrb[0].mxu0
      %v2202 = vadd.f32 %v2117, %v2201
      %v2203 = vpop.f32.mrb[0].mxu0
      %v2204 = vadd.f32 %v2117, %v2203
      %v2205 = vpop.f32.mrb[0].mxu0
      %v2206 = vpop.f32.mrb[0].mxu0
      %2207 = vdwg.mxu0
      %v2208 = vmax.f32 %v2182, 0.0
      %v2209 = vmax.f32 %v2184, 0.0
      %v2210 = vmax.f32 %v2186, 0.0
      %v2211 = vmax.f32 %v2188, 0.0
      %v2212 = vmax.f32 %v2192, 0.0
      %v2213 = vmax.f32 %v2194, 0.0
      %v2214 = vmax.f32 %v2196, 0.0
      %v2215 = vmax.f32 %v2198, 0.0
      %v2216 = vmax.f32 %v2202, 0.0
      %v2217 = vmax.f32 %v2204, 0.0
      %v2218 = vld [vmem:[%s1 + $0x70] sm:$0xf]
      %v2219 = vld [vmem:[%s1 + $0x74] sm:$0xf]
      %v2220 = vld [vmem:[%s1 + $0x78] sm:$0xf]
      %v2221 = vld [vmem:[%s1 + $0x7c] sm:$0xf]
      %v2222 = vld [vmem:[%s1 + $0x80] sm:$0xf]
      %v2223 = vpack.c.bf16 %v2210, %v2208
      %v2224 = vpack.c.bf16 %v2211, %v2209
      %v2225 = vpack.c.bf16 %v2214, %v2212
      %v2226 = vpack.c.bf16 %v2215, %v2213
      %v2227 = vpack.c.bf16 %v2216, %v2216
      %v2228 = vpack.c.bf16 %v2217, %v2217
      %v2229 = vld [vmem:[%s2 + $0xc8] sm:$0xff]
      %v2230 = vld [vmem:[%s2 + $0xd0] sm:$0xff]
      %v2231 = vld [vmem:[%s2 + $0xd8] sm:$0xff]
      %v2232 = vld [vmem:[%s2 + $0xe0] sm:$0xff]
      %v2233 = vld [vmem:[%s2 + $0xe8] sm:$0xff]
      %2235 = vset.pattern.permute.xlu0 0
      %2236 = vperm.xlu0 %2235, %v2229
      %v2237 = vpop.permute.xlu0 %2236
      %2240 = vset.pattern.permute.xlu0 0
      %2241 = vperm.xlu0 %2240, %v2230
      %v2242 = vpop.permute.xlu0 %2241
      %2245 = vset.pattern.permute.xlu0 0
      %2246 = vperm.xlu0 %2245, %v2231
      %v2247 = vpop.permute.xlu0 %2246
      %2250 = vset.pattern.permute.xlu0 0
      %2251 = vperm.xlu0 %2250, %v2232
      %v2252 = vpop.permute.xlu0 %2251
      %2255 = vset.pattern.permute.xlu0 0
      %2256 = vperm.xlu0 %2255, %v2233
      %v2257 = vpop.permute.xlu0 %2256
      %v2264 = vunpack.c.l.b16 %v2218
      %v2265 = vunpack.c.l.b16 %v2219
      %v2266 = vunpack.c.l.b16 %v2220
      %v2267 = vunpack.c.l.b16 %v2221
      %v2268 = vunpack.c.l.b16 %v2222
      %v2269 = vpack.c.b16 %v2265, %v2264
      %v2270 = vpack.c.b16 %v2267, %v2266
      %v2271 = vpack.c.b16 %v2268, %v2268
      %v2273 = vsel %vm331, %v2269, 0
      %v2276 = vsel %vm331, %v2270, 0
      %v2279 = vsel %vm331, %v2271, 0
      %v2282 = vsel %vm356, %v2227, 0
      %v2285 = vsel %vm356, %v2228, 0
      %2287 = vmatprep.subr.bf16.mxu0 %v2224
      %2288 = vmatpush1.bf16.msra.mxu0 %v2223
      %2289 = vmatprep.subr.bf16.mxu0 %v2226
      %2290 = vmatpush1.bf16.msra.mxu0 %v2225
      %2291 = vmatprep.subr.bf16.mxu0 %v2285
      %2292 = vmatpush1.bf16.msra.mxu0 %v2282
      %2293 = vmatprep.subr.bf16.mxu0 0
      %2294 = vmatpush1.bf16.msra.mxu0 0
      %2295 = vmatprep.subr.bf16.mxu0 0
      %2296 = vmatpush1.bf16.msra.mxu0 0
      %2297 = vmatprep.subr.bf16.mxu0 0
      %2298 = vmatpush1.bf16.msra.mxu0 0
      %2299 = vmatprep.subr.bf16.mxu0 0
      %2300 = vmatpush1.bf16.msra.mxu0 0
      %2301 = vmatprep.subr.bf16.mxu0 0
      %2302 = vmatpush1.bf16.msra.mxu0 0
      %2303 = vmatprep.subr.bf16.mxu0 0
      %2304 = vmatpush1.bf16.msra.mxu0 0
      %2305 = vmatprep.subr.bf16.mxu0 0
      %2306 = vmatpush1.bf16.msra.mxu0 0
      %2307 = vmatprep.subr.bf16.mxu0 0
      %2308 = vmatpush1.bf16.msra.mxu0 0
      %2309 = vmatprep.subr.bf16.mxu0 0
      %2310 = vmatpush1.bf16.msra.mxu0 0
      %2311 = vmatprep.subr.bf16.mxu0 0
      %2312 = vmatpush1.bf16.msra.mxu0 0
      %2313 = vmatprep.subr.bf16.mxu0 0
      %2314 = vmatpush1.bf16.msra.mxu0 0
      %2315 = vmatprep.subr.bf16.mxu0 0
      %2316 = vmatpush1.bf16.msra.mxu0 0
      %2317 = vmatprep.subr.bf16.mxu0 0
      %2318 = vmatpush1.bf16.msra.mxu0 0
      %2319 = vmatprep.mubr.bf16.mxu0 0
      %2320 = vmatmul.mubr.bf16.gmra.mrb[0].mxu0 %v2273
      %v2321 = vpop.f32.mrb[0].mxu0
      %v2322 = vadd.f32 %v2237, %v2321
      %v2323 = vpop.f32.mrb[0].mxu0
      %v2324 = vadd.f32 %v2237, %v2323
      %v2325 = vpop.f32.mrb[0].mxu0
      %v2326 = vadd.f32 %v2242, %v2325
      %v2327 = vpop.f32.mrb[0].mxu0
      %v2328 = vadd.f32 %v2242, %v2327
      %2329 = vmatprep.mubr.bf16.mxu0 0
      %2330 = vmatmul.mubr.bf16.gmra.mrb[0].mxu0 %v2276
      %v2331 = vpop.f32.mrb[0].mxu0
      %v2332 = vadd.f32 %v2247, %v2331
      %v2333 = vpop.f32.mrb[0].mxu0
      %v2334 = vadd.f32 %v2247, %v2333
      %v2335 = vpop.f32.mrb[0].mxu0
      %v2336 = vadd.f32 %v2252, %v2335
      %v2337 = vpop.f32.mrb[0].mxu0
      %v2338 = vadd.f32 %v2252, %v2337
      %2339 = vmatprep.mubr.bf16.mxu0 0
      %2340 = vmatmul.mubr.bf16.gmra.mrb[0].mxu0 %v2279
      %v2341 = vpop.f32.mrb[0].mxu0
      %v2342 = vadd.f32 %v2257, %v2341
      %v2343 = vpop.f32.mrb[0].mxu0
      %v2344 = vadd.f32 %v2257, %v2343
      %v2345 = vpop.f32.mrb[0].mxu0
      %v2346 = vpop.f32.mrb[0].mxu0
      %2347 = vdwg.mxu0
      %v2348 = vadd.f32 %v2068, %v2322
      %v2349 = vadd.f32 %v2069, %v2324
      %v2350 = vadd.f32 %v2070, %v2326
      %v2351 = vadd.f32 %v2071, %v2328
      %v2352 = vadd.f32 %v2072, %v2332
      %v2353 = vadd.f32 %v2073, %v2334
      %v2354 = vadd.f32 %v2074, %v2336
      %v2355 = vadd.f32 %v2075, %v2338
      %v2356 = vadd.f32 %v2076, %v2342
      %v2357 = vadd.f32 %v2077, %v2344
      %v2358 = vld [vmem:[%s2 + $0x140] sm:$0xff]
      %v2359 = vld [vmem:[%s2 + $0x148] sm:$0xff]
      %v2360 = vld [vmem:[%s2 + $0x150] sm:$0xff]
      %v2361 = vld [vmem:[%s2 + $0x158] sm:$0xff]
      %v2362 = vld [vmem:[%s2 + $0x160] sm:$0xff]
      %v2363 = vld [vmem:[%s2 + $0x168] sm:$0xff]
      %v2364 = vld [vmem:[%s2 + $0x170] sm:$0xff]
      %v2365 = vld [vmem:[%s2 + $0x178] sm:$0xff]
      %v2366 = vld [vmem:[%s2 + $0x180] sm:$0xff]
      %v2367 = vld [vmem:[%s2 + $0x188] sm:$0xff]
      %v2368 = vadd.f32 %v2348, %v2350
      %v2369 = vadd.f32 %v2368, %v2352
      %v2370 = vadd.f32 %v2369, %v2354
      %v2371 = vadd.f32 %v2370, %v2356
      %v2372 = vrot.slane %v2371, 4
      %v2373 = vadd.f32 %v2371, %v2372
      %v2374 = vrot.slane %v2373, 2
      %v2375 = vadd.f32 %v2373, %v2374
      %v2376 = vrot.slane %v2375, 1
      %v2377 = vadd.f32 %v2375, %v2376
      %v2378 = vadd.f32 %v2349, %v2351
      %v2379 = vadd.f32 %v2378, %v2353
      %v2380 = vadd.f32 %v2379, %v2355
      %v2381 = vadd.f32 %v2380, %v2357
      %v2382 = vrot.slane %v2381, 4
      %v2383 = vadd.f32 %v2381, %v2382
      %v2384 = vrot.slane %v2383, 2
      %v2385 = vadd.f32 %v2383, %v2384
      %v2386 = vrot.slane %v2385, 1
      %v2387 = vadd.f32 %v2385, %v2386
      %v2388 = vmul.f32 %v2377, %v1949
      %v2389 = vmul.f32 %v2387, %v1949
      %v2390 = vsub.f32 %v2348, %v2388
      %v2391 = vsub.f32 %v2349, %v2389
      %v2392 = vsub.f32 %v2350, %v2388
      %v2393 = vsub.f32 %v2351, %v2389
      %v2394 = vsub.f32 %v2352, %v2388
      %v2395 = vsub.f32 %v2353, %v2389
      %v2396 = vsub.f32 %v2354, %v2388
      %v2397 = vsub.f32 %v2355, %v2389
      %v2398 = vsub.f32 %v2356, %v2388
      %v2399 = vsub.f32 %v2357, %v2389
      %v2400 = vmul.f32 %v2390, %v2390
      %v2401 = vmul.f32 %v2391, %v2391
      %v2402 = vmul.f32 %v2392, %v2392
      %v2403 = vmul.f32 %v2393, %v2393
      %v2404 = vmul.f32 %v2394, %v2394
      %v2405 = vmul.f32 %v2395, %v2395
      %v2406 = vmul.f32 %v2396, %v2396
      %v2407 = vmul.f32 %v2397, %v2397
      %v2408 = vmul.f32 %v2398, %v2398
      %v2409 = vmul.f32 %v2399, %v2399
      %v2410 = vadd.f32 %v2400, %v2402
      %v2411 = vadd.f32 %v2410, %v2404
      %v2412 = vadd.f32 %v2411, %v2406
      %v2413 = vadd.f32 %v2412, %v2408
      %v2414 = vrot.slane %v2413, 4
      %v2415 = vadd.f32 %v2413, %v2414
      %v2416 = vrot.slane %v2415, 2
      %v2417 = vadd.f32 %v2415, %v2416
      %v2418 = vrot.slane %v2417, 1
      %v2419 = vadd.f32 %v2417, %v2418
      %v2420 = vadd.f32 %v2401, %v2403
      %v2421 = vadd.f32 %v2420, %v2405
      %v2422 = vadd.f32 %v2421, %v2407
      %v2423 = vadd.f32 %v2422, %v2409
      %v2424 = vrot.slane %v2423, 4
      %v2425 = vadd.f32 %v2423, %v2424
      %v2426 = vrot.slane %v2425, 2
      %v2427 = vadd.f32 %v2425, %v2426
      %v2428 = vrot.slane %v2427, 1
      %v2429 = vadd.f32 %v2427, %v2428
      %v2430 = vmul.f32 %v2419, %v1949
      %v2431 = vmul.f32 %v2429, %v1949
      %v2432 = vadd.f32 %v2430, 1e-05
      %v2433 = vadd.f32 %v2431, 1e-05
      %v2434 = vrsqrt.pop %v2432
      %v2435 = vrsqrt.pop %v2433
      %v2436 = vmul.f32 %v2390, %v2434
      %v2437 = vmul.f32 %v2391, %v2435
      %v2438 = vmul.f32 %v2392, %v2434
      %v2439 = vmul.f32 %v2393, %v2435
      %v2440 = vmul.f32 %v2394, %v2434
      %v2441 = vmul.f32 %v2395, %v2435
      %v2442 = vmul.f32 %v2396, %v2434
      %v2443 = vmul.f32 %v2397, %v2435
      %v2444 = vmul.f32 %v2398, %v2434
      %v2445 = vmul.f32 %v2399, %v2435
      %2447 = vset.pattern.permute.xlu0 0
      %2448 = vperm.xlu0 %2447, %v2358
      %v2449 = vpop.permute.xlu0 %2448
      %2452 = vset.pattern.permute.xlu0 0
      %2453 = vperm.xlu0 %2452, %v2359
      %v2454 = vpop.permute.xlu0 %2453
      %2457 = vset.pattern.permute.xlu0 0
      %2458 = vperm.xlu0 %2457, %v2360
      %v2459 = vpop.permute.xlu0 %2458
      %2462 = vset.pattern.permute.xlu0 0
      %2463 = vperm.xlu0 %2462, %v2361
      %v2464 = vpop.permute.xlu0 %2463
      %2467 = vset.pattern.permute.xlu0 0
      %2468 = vperm.xlu0 %2467, %v2362
      %v2469 = vpop.permute.xlu0 %2468
      %v2471 = vmul.f32 %v2436, %v2449
      %v2472 = vmul.f32 %v2437, %v2449
      %v2473 = vmul.f32 %v2438, %v2454
      %v2474 = vmul.f32 %v2439, %v2454
      %v2475 = vmul.f32 %v2440, %v2459
      %v2476 = vmul.f32 %v2441, %v2459
      %v2477 = vmul.f32 %v2442, %v2464
      %v2478 = vmul.f32 %v2443, %v2464
      %v2479 = vmul.f32 %v2444, %v2469
      %v2480 = vmul.f32 %v2445, %v2469
      %2482 = vset.pattern.permute.xlu0 0
      %2483 = vperm.xlu0 %2482, %v2363
      %v2484 = vpop.permute.xlu0 %2483
      %2487 = vset.pattern.permute.xlu0 0
      %2488 = vperm.xlu0 %2487, %v2364
      %v2489 = vpop.permute.xlu0 %2488
      %2492 = vset.pattern.permute.xlu0 0
      %2493 = vperm.xlu0 %2492, %v2365
      %v2494 = vpop.permute.xlu0 %2493
      %2497 = vset.pattern.permute.xlu0 0
      %2498 = vperm.xlu0 %2497, %v2366
      %v2499 = vpop.permute.xlu0 %2498
      %2502 = vset.pattern.permute.xlu0 0
      %2503 = vperm.xlu0 %2502, %v2367
      %v2504 = vpop.permute.xlu0 %2503
      %v2506 = vadd.f32 %v2471, %v2484
      %v2507 = vadd.f32 %v2472, %v2484
      %v2508 = vadd.f32 %v2473, %v2489
      %v2509 = vadd.f32 %v2474, %v2489
      %v2510 = vadd.f32 %v2475, %v2494
      %v2511 = vadd.f32 %v2476, %v2494
      %v2512 = vadd.f32 %v2477, %v2499
      %v2513 = vadd.f32 %v2478, %v2499
      %v2514 = vadd.f32 %v2479, %v2504
      %v2515 = vadd.f32 %v2480, %v2504
      %v2516 = vpack.c.bf16 %v2508, %v2506
      %v2517 = vpack.c.bf16 %v2509, %v2507
      %v2518 = vpack.c.bf16 %v2512, %v2510
      %v2519 = vpack.c.bf16 %v2513, %v2511
      %v2520 = vpack.c.bf16 %v2514, %v2514
      %v2521 = vpack.c.bf16 %v2515, %v2515
      %s2522 = scalar_lea.vmem %s1, 160
      %v2523 = vld [vmem:[%s2522] sm:$0xf]
      %v2524 = vld [vmem:[%s2522 + $0x4] sm:$0xf]
      %v2525 = vld [vmem:[%s2522 + $0x8] sm:$0xf]
      %v2526 = vld [vmem:[%s2522 + $0xc] sm:$0xf]
      %v2527 = vld [vmem:[%s2522 + $0x10] sm:$0xf]
      %v2528 = vld [vmem:[%s2522 + $0x14] sm:$0xf]
      %v2529 = vld [vmem:[%s2522 + $0x18] sm:$0xf]
      %v2530 = vld [vmem:[%s2522 + $0x1c] sm:$0xf]
      %v2531 = vld [vmem:[%s2522 + $0x20] sm:$0xf]
      %v2532 = vld [vmem:[%s2522 + $0x24] sm:$0xf]
      %v2533 = vld [vmem:[%s2522 + $0x28] sm:$0xf]
      %v2534 = vld [vmem:[%s2522 + $0x2c] sm:$0xf]
      %v2535 = vld [vmem:[%s2522 + $0x30] sm:$0xf]
      %v2536 = vld [vmem:[%s2522 + $0x34] sm:$0xf]
      %v2537 = vld [vmem:[%s2522 + $0x38] sm:$0xf]
      %s2538 = scalar_lea.vmem %s2, 440
      %v2539 = vld [vmem:[%s2538] sm:$0xff]
      %v2540 = vld [vmem:[%s2538 + $0x8] sm:$0xff]
      %v2541 = vld [vmem:[%s2538 + $0x10] sm:$0xff]
      %v2542 = vld [vmem:[%s2538 + $0x18] sm:$0xff]
      %v2543 = vld [vmem:[%s2538 + $0x20] sm:$0xff]
      %v2544 = vld [vmem:[%s2538 + $0x28] sm:$0xff]
      %v2545 = vld [vmem:[%s2538 + $0x30] sm:$0xff]
      %v2546 = vld [vmem:[%s2538 + $0x38] sm:$0xff]
      %v2547 = vld [vmem:[%s2538 + $0x40] sm:$0xff]
      %v2548 = vld [vmem:[%s2538 + $0x48] sm:$0xff]
      %v2549 = vld [vmem:[%s2538 + $0x50] sm:$0xff]
      %v2550 = vld [vmem:[%s2538 + $0x58] sm:$0xff]
      %v2551 = vld [vmem:[%s2538 + $0x60] sm:$0xff]
      %v2552 = vld [vmem:[%s2538 + $0x68] sm:$0xff]
      %v2553 = vld [vmem:[%s2538 + $0x70] sm:$0xff]
      %2555 = vset.pattern.permute.xlu0 0
      %2556 = vperm.xlu0 %2555, %v2539
      %v2557 = vpop.permute.xlu0 %2556
      %2560 = vset.pattern.permute.xlu0 0
      %2561 = vperm.xlu0 %2560, %v2540
      %v2562 = vpop.permute.xlu0 %2561
      %2565 = vset.pattern.permute.xlu0 0
      %2566 = vperm.xlu0 %2565, %v2541
      %v2567 = vpop.permute.xlu0 %2566
      %2570 = vset.pattern.permute.xlu0 0
      %2571 = vperm.xlu0 %2570, %v2542
      %v2572 = vpop.permute.xlu0 %2571
      %2575 = vset.pattern.permute.xlu0 0
      %2576 = vperm.xlu0 %2575, %v2543
      %v2577 = vpop.permute.xlu0 %2576
      %2580 = vset.pattern.permute.xlu0 0
      %2581 = vperm.xlu0 %2580, %v2544
      %v2582 = vpop.permute.xlu0 %2581
      %2585 = vset.pattern.permute.xlu0 0
      %2586 = vperm.xlu0 %2585, %v2545
      %v2587 = vpop.permute.xlu0 %2586
      %2590 = vset.pattern.permute.xlu0 0
      %2591 = vperm.xlu0 %2590, %v2546
      %v2592 = vpop.permute.xlu0 %2591
      %2595 = vset.pattern.permute.xlu0 0
      %2596 = vperm.xlu0 %2595, %v2547
      %v2597 = vpop.permute.xlu0 %2596
      %2600 = vset.pattern.permute.xlu0 0
      %2601 = vperm.xlu0 %2600, %v2548
      %v2602 = vpop.permute.xlu0 %2601
      %2605 = vset.pattern.permute.xlu0 0
      %2606 = vperm.xlu0 %2605, %v2549
      %v2607 = vpop.permute.xlu0 %2606
      %2610 = vset.pattern.permute.xlu0 0
      %2611 = vperm.xlu0 %2610, %v2550
      %v2612 = vpop.permute.xlu0 %2611
      %2615 = vset.pattern.permute.xlu0 0
      %2616 = vperm.xlu0 %2615, %v2551
      %v2617 = vpop.permute.xlu0 %2616
      %2620 = vset.pattern.permute.xlu0 0
      %2621 = vperm.xlu0 %2620, %v2552
      %v2622 = vpop.permute.xlu0 %2621
      %2625 = vset.pattern.permute.xlu0 0
      %2626 = vperm.xlu0 %2625, %v2553
      %v2627 = vpop.permute.xlu0 %2626
      %v2644 = vunpack.c.l.b16 %v2523
      %v2645 = vunpack.c.l.b16 %v2524
      %v2646 = vunpack.c.l.b16 %v2525
      %v2647 = vunpack.c.l.b16 %v2526
      %v2648 = vunpack.c.l.b16 %v2527
      %v2649 = vunpack.c.l.b16 %v2528
      %v2650 = vunpack.c.l.b16 %v2529
      %v2651 = vunpack.c.l.b16 %v2530
      %v2652 = vunpack.c.l.b16 %v2531
      %v2653 = vunpack.c.l.b16 %v2532
      %v2654 = vunpack.c.l.b16 %v2533
      %v2655 = vunpack.c.l.b16 %v2534
      %v2656 = vunpack.c.l.b16 %v2535
      %v2657 = vunpack.c.l.b16 %v2536
      %v2658 = vunpack.c.l.b16 %v2537
      %v2659 = vpack.c.b16 %v2645, %v2644
      %v2660 = vpack.c.b16 %v2647, %v2646
      %v2661 = vpack.c.b16 %v2649, %v2648
      %v2662 = vpack.c.b16 %v2651, %v2650
      %v2663 = vpack.c.b16 %v2653, %v2652
      %v2664 = vpack.c.b16 %v2655, %v2654
      %v2665 = vpack.c.b16 %v2657, %v2656
      %v2666 = vpack.c.b16 %v2658, %v2658
      %v2668 = vsel %vm331, %v2659, 0
      %v2671 = vsel %vm331, %v2660, 0
      %v2674 = vsel %vm331, %v2661, 0
      %v2677 = vsel %vm331, %v2662, 0
      %v2680 = vsel %vm331, %v2663, 0
      %v2683 = vsel %vm331, %v2664, 0
      %v2686 = vsel %vm331, %v2665, 0
      %v2689 = vsel %vm331, %v2666, 0
      %v2692 = vsel %vm356, %v2520, 0
      %v2695 = vsel %vm356, %v2521, 0
      %2697 = vmatprep.subr.bf16.mxu0 %v2517
      %2698 = vmatpush1.bf16.msra.mxu0 %v2516
      %2699 = vmatprep.subr.bf16.mxu0 %v2519
      %2700 = vmatpush1.bf16.msra.mxu0 %v2518
      %2701 = vmatprep.subr.bf16.mxu0 %v2695
      %2702 = vmatpush1.bf16.msra.mxu0 %v2692
      %2703 = vmatprep.subr.bf16.mxu0 0
      %2704 = vmatpush1.bf16.msra.mxu0 0
      %2705 = vmatprep.subr.bf16.mxu0 0
      %2706 = vmatpush1.bf16.msra.mxu0 0
      %2707 = vmatprep.subr.bf16.mxu0 0
      %2708 = vmatpush1.bf16.msra.mxu0 0
      %2709 = vmatprep.subr.bf16.mxu0 0
      %2710 = vmatpush1.bf16.msra.mxu0 0
      %2711 = vmatprep.subr.bf16.mxu0 0
      %2712 = vmatpush1.bf16.msra.mxu0 0
      %2713 = vmatprep.subr.bf16.mxu0 0
      %2714 = vmatpush1.bf16.msra.mxu0 0
      %2715 = vmatprep.subr.bf16.mxu0 0
      %2716 = vmatpush1.bf16.msra.mxu0 0
      %2717 = vmatprep.subr.bf16.mxu0 0
      %2718 = vmatpush1.bf16.msra.mxu0 0
      %2719 = vmatprep.subr.bf16.mxu0 0
      %2720 = vmatpush1.bf16.msra.mxu0 0
      %2721 = vmatprep.subr.bf16.mxu0 0
      %2722 = vmatpush1.bf16.msra.mxu0 0
      %2723 = vmatprep.subr.bf16.mxu0 0
      %2724 = vmatpush1.bf16.msra.mxu0 0
      %2725 = vmatprep.subr.bf16.mxu0 0
      %2726 = vmatpush1.bf16.msra.mxu0 0
      %2727 = vmatprep.subr.bf16.mxu0 0
      %2728 = vmatpush1.bf16.msra.mxu0 0
      %2729 = vmatprep.mubr.bf16.mxu0 0
      %2730 = vmatmul.mubr.bf16.gmra.mrb[0].mxu0 %v2668
      %v2731 = vpop.f32.mrb[0].mxu0
      %v2732 = vadd.f32 %v2557, %v2731
      %v2733 = vpop.f32.mrb[0].mxu0
      %v2734 = vadd.f32 %v2557, %v2733
      %v2735 = vpop.f32.mrb[0].mxu0
      %v2736 = vadd.f32 %v2562, %v2735
      %v2737 = vpop.f32.mrb[0].mxu0
      %v2738 = vadd.f32 %v2562, %v2737
      %2739 = vmatprep.mubr.bf16.mxu0 0
      %2740 = vmatmul.mubr.bf16.gmra.mrb[0].mxu0 %v2671
      %v2741 = vpop.f32.mrb[0].mxu0
      %v2742 = vadd.f32 %v2567, %v2741
      %v2743 = vpop.f32.mrb[0].mxu0
      %v2744 = vadd.f32 %v2567, %v2743
      %v2745 = vpop.f32.mrb[0].mxu0
      %v2746 = vadd.f32 %v2572, %v2745
      %v2747 = vpop.f32.mrb[0].mxu0
      %v2748 = vadd.f32 %v2572, %v2747
      %2749 = vmatprep.mubr.bf16.mxu0 0
      %2750 = vmatmul.mubr.bf16.gmra.mrb[0].mxu0 %v2674
      %v2751 = vpop.f32.mrb[0].mxu0
      %v2752 = vadd.f32 %v2577, %v2751
      %v2753 = vpop.f32.mrb[0].mxu0
      %v2754 = vadd.f32 %v2577, %v2753
      %v2755 = vpop.f32.mrb[0].mxu0
      %v2756 = vadd.f32 %v2582, %v2755
      %v2757 = vpop.f32.mrb[0].mxu0
      %v2758 = vadd.f32 %v2582, %v2757
      %2759 = vmatprep.mubr.bf16.mxu0 0
      %2760 = vmatmul.mubr.bf16.gmra.mrb[0].mxu0 %v2677
      %v2761 = vpop.f32.mrb[0].mxu0
      %v2762 = vadd.f32 %v2587, %v2761
      %v2763 = vpop.f32.mrb[0].mxu0
      %v2764 = vadd.f32 %v2587, %v2763
      %v2765 = vpop.f32.mrb[0].mxu0
      %v2766 = vadd.f32 %v2592, %v2765
      %v2767 = vpop.f32.mrb[0].mxu0
      %v2768 = vadd.f32 %v2592, %v2767
      %2769 = vmatprep.mubr.bf16.mxu0 0
      %2770 = vmatmul.mubr.bf16.gmra.mrb[0].mxu0 %v2680
      %v2771 = vpop.f32.mrb[0].mxu0
      %v2772 = vadd.f32 %v2597, %v2771
      %v2773 = vpop.f32.mrb[0].mxu0
      %v2774 = vadd.f32 %v2597, %v2773
      %v2775 = vpop.f32.mrb[0].mxu0
      %v2776 = vadd.f32 %v2602, %v2775
      %v2777 = vpop.f32.mrb[0].mxu0
      %v2778 = vadd.f32 %v2602, %v2777
      %2779 = vmatprep.mubr.bf16.mxu0 0
      %2780 = vmatmul.mubr.bf16.gmra.mrb[0].mxu0 %v2683
      %v2781 = vpop.f32.mrb[0].mxu0
      %v2782 = vadd.f32 %v2607, %v2781
      %v2783 = vpop.f32.mrb[0].mxu0
      %v2784 = vadd.f32 %v2607, %v2783
      %v2785 = vpop.f32.mrb[0].mxu0
      %v2786 = vadd.f32 %v2612, %v2785
      %v2787 = vpop.f32.mrb[0].mxu0
      %v2788 = vadd.f32 %v2612, %v2787
      %2789 = vmatprep.mubr.bf16.mxu0 0
      %2790 = vmatmul.mubr.bf16.gmra.mrb[0].mxu0 %v2686
      %v2791 = vpop.f32.mrb[0].mxu0
      %v2792 = vadd.f32 %v2617, %v2791
      %v2793 = vpop.f32.mrb[0].mxu0
      %v2794 = vadd.f32 %v2617, %v2793
      %v2795 = vpop.f32.mrb[0].mxu0
      %v2796 = vadd.f32 %v2622, %v2795
      %v2797 = vpop.f32.mrb[0].mxu0
      %v2798 = vadd.f32 %v2622, %v2797
      %2799 = vmatprep.mubr.bf16.mxu0 0
      %2800 = vmatmul.mubr.bf16.gmra.mrb[0].mxu0 %v2689
      %v2801 = vpop.f32.mrb[0].mxu0
      %v2802 = vadd.f32 %v2627, %v2801
      %v2803 = vpop.f32.mrb[0].mxu0
      %v2804 = vadd.f32 %v2627, %v2803
      %v2805 = vpop.f32.mrb[0].mxu0
      %v2806 = vpop.f32.mrb[0].mxu0
      %2807 = vdwg.mxu0
      %v2808 = vmul.f32 %v2732, %v2756
      %v2809 = vmul.f32 %v2734, %v2758
      %v2810 = vmul.f32 %v2736, %v2762
      %v2811 = vmul.f32 %v2738, %v2764
      %v2812 = vmul.f32 %v2742, %v2766
      %v2813 = vmul.f32 %v2744, %v2768
      %v2814 = vmul.f32 %v2746, %v2772
      %v2815 = vmul.f32 %v2748, %v2774
      %v2816 = vmul.f32 %v2752, %v2776
      %v2817 = vmul.f32 %v2754, %v2778
      %v2818 = vrot.slane %v2808, 4
      %v2819 = vadd.f32 %v2808, %v2818
      %v2820 = vrot.slane %v2819, 2
      %v2821 = vadd.f32 %v2819, %v2820
      %v2822 = vrot.slane %v2821, 1
      %v2823 = vadd.f32 %v2821, %v2822
      %v2824 = vrot.slane %v2809, 4
      %v2825 = vadd.f32 %v2809, %v2824
      %v2826 = vrot.slane %v2825, 2
      %v2827 = vadd.f32 %v2825, %v2826
      %v2828 = vrot.slane %v2827, 1
      %v2829 = vadd.f32 %v2827, %v2828
      %v2830 = vrot.slane %v2810, 4
      %v2831 = vadd.f32 %v2810, %v2830
      %v2832 = vrot.slane %v2831, 2
      %v2833 = vadd.f32 %v2831, %v2832
      %v2834 = vrot.slane %v2833, 1
      %v2835 = vadd.f32 %v2833, %v2834
      %v2836 = vrot.slane %v2811, 4
      %v2837 = vadd.f32 %v2811, %v2836
      %v2838 = vrot.slane %v2837, 2
      %v2839 = vadd.f32 %v2837, %v2838
      %v2840 = vrot.slane %v2839, 1
      %v2841 = vadd.f32 %v2839, %v2840
      %v2842 = vrot.slane %v2812, 4
      %v2843 = vadd.f32 %v2812, %v2842
      %v2844 = vrot.slane %v2843, 2
      %v2845 = vadd.f32 %v2843, %v2844
      %v2846 = vrot.slane %v2845, 1
      %v2847 = vadd.f32 %v2845, %v2846
      %v2848 = vrot.slane %v2813, 4
      %v2849 = vadd.f32 %v2813, %v2848
      %v2850 = vrot.slane %v2849, 2
      %v2851 = vadd.f32 %v2849, %v2850
      %v2852 = vrot.slane %v2851, 1
      %v2853 = vadd.f32 %v2851, %v2852
      %v2854 = vrot.slane %v2814, 4
      %v2855 = vadd.f32 %v2814, %v2854
      %v2856 = vrot.slane %v2855, 2
      %v2857 = vadd.f32 %v2855, %v2856
      %v2858 = vrot.slane %v2857, 1
      %v2859 = vadd.f32 %v2857, %v2858
      %v2860 = vrot.slane %v2815, 4
      %v2861 = vadd.f32 %v2815, %v2860
      %v2862 = vrot.slane %v2861, 2
      %v2863 = vadd.f32 %v2861, %v2862
      %v2864 = vrot.slane %v2863, 1
      %v2865 = vadd.f32 %v2863, %v2864
      %v2866 = vrot.slane %v2816, 4
      %v2867 = vadd.f32 %v2816, %v2866
      %v2868 = vrot.slane %v2867, 2
      %v2869 = vadd.f32 %v2867, %v2868
      %v2870 = vrot.slane %v2869, 1
      %v2871 = vadd.f32 %v2869, %v2870
      %v2872 = vrot.slane %v2817, 4
      %v2873 = vadd.f32 %v2817, %v2872
      %v2874 = vrot.slane %v2873, 2
      %v2875 = vadd.f32 %v2873, %v2874
      %v2876 = vrot.slane %v2875, 1
      %v2877 = vadd.f32 %v2875, %v2876
      %2878 = vrot.lane.b32.xlu0 %v2756, 32
      %v2879 = vpop.permute.xlu0 %2878
      %2880 = vrot.lane.b32.xlu0 %v2762, 32
      %v2881 = vpop.permute.xlu0 %2880
      %2882 = vrot.lane.b32.xlu0 %v2766, 32
      %v2883 = vpop.permute.xlu0 %2882
      %2884 = vrot.lane.b32.xlu0 %v2772, 32
      %v2885 = vpop.permute.xlu0 %2884
      %2886 = vrot.lane.b32.xlu0 %v2776, 32
      %v2887 = vpop.permute.xlu0 %2886
      %2888 = vrot.lane.b32.xlu0 %v2758, 32
      %v2889 = vpop.permute.xlu0 %2888
      %2890 = vrot.lane.b32.xlu0 %v2764, 32
      %v2891 = vpop.permute.xlu0 %2890
      %2892 = vrot.lane.b32.xlu0 %v2768, 32
      %v2893 = vpop.permute.xlu0 %2892
      %2894 = vrot.lane.b32.xlu0 %v2774, 32
      %v2895 = vpop.permute.xlu0 %2894
      %2896 = vrot.lane.b32.xlu0 %v2778, 32
      %v2897 = vpop.permute.xlu0 %2896
      %v2898 = vsel %vm566, %v2879, %v2889
      %v2899 = vsel %vm566, %v2881, %v2891
      %v2900 = vsel %vm566, %v2883, %v2893
      %v2901 = vsel %vm566, %v2885, %v2895
      %v2902 = vsel %vm566, %v2887, %v2897
      %v2903 = vsel %vm566, %v2889, %v2879
      %v2904 = vsel %vm566, %v2891, %v2881
      %v2905 = vsel %vm566, %v2893, %v2883
      %v2906 = vsel %vm566, %v2895, %v2885
      %v2907 = vsel %vm566, %v2897, %v2887
      %v2908 = vmul.f32 %v2732, %v2903
      %v2909 = vmul.f32 %v2734, %v2898
      %v2910 = vmul.f32 %v2736, %v2904
      %v2911 = vmul.f32 %v2738, %v2899
      %v2912 = vmul.f32 %v2742, %v2905
      %v2913 = vmul.f32 %v2744, %v2900
      %v2914 = vmul.f32 %v2746, %v2906
      %v2915 = vmul.f32 %v2748, %v2901
      %v2916 = vmul.f32 %v2752, %v2907
      %v2917 = vmul.f32 %v2754, %v2902
      %v2918 = vrot.slane %v2908, 4
      %v2919 = vadd.f32 %v2908, %v2918
      %v2920 = vrot.slane %v2919, 2
      %v2921 = vadd.f32 %v2919, %v2920
      %v2922 = vrot.slane %v2921, 1
      %v2923 = vadd.f32 %v2921, %v2922
      %v2924 = vrot.slane %v2909, 4
      %v2925 = vadd.f32 %v2909, %v2924
      %v2926 = vrot.slane %v2925, 2
      %v2927 = vadd.f32 %v2925, %v2926
      %v2928 = vrot.slane %v2927, 1
      %v2929 = vadd.f32 %v2927, %v2928
      %v2930 = vrot.slane %v2910, 4
      %v2931 = vadd.f32 %v2910, %v2930
      %v2932 = vrot.slane %v2931, 2
      %v2933 = vadd.f32 %v2931, %v2932
      %v2934 = vrot.slane %v2933, 1
      %v2935 = vadd.f32 %v2933, %v2934
      %v2936 = vrot.slane %v2911, 4
      %v2937 = vadd.f32 %v2911, %v2936
      %v2938 = vrot.slane %v2937, 2
      %v2939 = vadd.f32 %v2937, %v2938
      %v2940 = vrot.slane %v2939, 1
      %v2941 = vadd.f32 %v2939, %v2940
      %v2942 = vrot.slane %v2912, 4
      %v2943 = vadd.f32 %v2912, %v2942
      %v2944 = vrot.slane %v2943, 2
      %v2945 = vadd.f32 %v2943, %v2944
      %v2946 = vrot.slane %v2945, 1
      %v2947 = vadd.f32 %v2945, %v2946
      %v2948 = vrot.slane %v2913, 4
      %v2949 = vadd.f32 %v2913, %v2948
      %v2950 = vrot.slane %v2949, 2
      %v2951 = vadd.f32 %v2949, %v2950
      %v2952 = vrot.slane %v2951, 1
      %v2953 = vadd.f32 %v2951, %v2952
      %v2954 = vrot.slane %v2914, 4
      %v2955 = vadd.f32 %v2914, %v2954
      %v2956 = vrot.slane %v2955, 2
      %v2957 = vadd.f32 %v2955, %v2956
      %v2958 = vrot.slane %v2957, 1
      %v2959 = vadd.f32 %v2957, %v2958
      %v2960 = vrot.slane %v2915, 4
      %v2961 = vadd.f32 %v2915, %v2960
      %v2962 = vrot.slane %v2961, 2
      %v2963 = vadd.f32 %v2961, %v2962
      %v2964 = vrot.slane %v2963, 1
      %v2965 = vadd.f32 %v2963, %v2964
      %v2966 = vrot.slane %v2916, 4
      %v2967 = vadd.f32 %v2916, %v2966
      %v2968 = vrot.slane %v2967, 2
      %v2969 = vadd.f32 %v2967, %v2968
      %v2970 = vrot.slane %v2969, 1
      %v2971 = vadd.f32 %v2969, %v2970
      %v2972 = vrot.slane %v2917, 4
      %v2973 = vadd.f32 %v2917, %v2972
      %v2974 = vrot.slane %v2973, 2
      %v2975 = vadd.f32 %v2973, %v2974
      %v2976 = vrot.slane %v2975, 1
      %v2977 = vadd.f32 %v2975, %v2976
      %2978 = vrot.lane.b32.xlu0 %v2756, 64
      %v2979 = vpop.permute.xlu0 %2978
      %2980 = vrot.lane.b32.xlu0 %v2762, 64
      %v2981 = vpop.permute.xlu0 %2980
      %2982 = vrot.lane.b32.xlu0 %v2766, 64
      %v2983 = vpop.permute.xlu0 %2982
      %2984 = vrot.lane.b32.xlu0 %v2772, 64
      %v2985 = vpop.permute.xlu0 %2984
      %2986 = vrot.lane.b32.xlu0 %v2776, 64
      %v2987 = vpop.permute.xlu0 %2986
      %2988 = vrot.lane.b32.xlu0 %v2758, 64
      %v2989 = vpop.permute.xlu0 %2988
      %2990 = vrot.lane.b32.xlu0 %v2764, 64
      %v2991 = vpop.permute.xlu0 %2990
      %2992 = vrot.lane.b32.xlu0 %v2768, 64
      %v2993 = vpop.permute.xlu0 %2992
      %2994 = vrot.lane.b32.xlu0 %v2774, 64
      %v2995 = vpop.permute.xlu0 %2994
      %2996 = vrot.lane.b32.xlu0 %v2778, 64
      %v2997 = vpop.permute.xlu0 %2996
      %v2998 = vsel %vm667, %v2979, %v2989
      %v2999 = vsel %vm667, %v2981, %v2991
      %v3000 = vsel %vm667, %v2983, %v2993
      %v3001 = vsel %vm667, %v2985, %v2995
      %v3002 = vsel %vm667, %v2987, %v2997
      %v3003 = vsel %vm667, %v2989, %v2979
      %v3004 = vsel %vm667, %v2991, %v2981
      %v3005 = vsel %vm667, %v2993, %v2983
      %v3006 = vsel %vm667, %v2995, %v2985
      %v3007 = vsel %vm667, %v2997, %v2987
      %v3008 = vmul.f32 %v2732, %v3003
      %v3009 = vmul.f32 %v2734, %v2998
      %v3010 = vmul.f32 %v2736, %v3004
      %v3011 = vmul.f32 %v2738, %v2999
      %v3012 = vmul.f32 %v2742, %v3005
      %v3013 = vmul.f32 %v2744, %v3000
      %v3014 = vmul.f32 %v2746, %v3006
      %v3015 = vmul.f32 %v2748, %v3001
      %v3016 = vmul.f32 %v2752, %v3007
      %v3017 = vmul.f32 %v2754, %v3002
      %v3018 = vrot.slane %v3008, 4
      %v3019 = vadd.f32 %v3008, %v3018
      %v3020 = vrot.slane %v3019, 2
      %v3021 = vadd.f32 %v3019, %v3020
      %v3022 = vrot.slane %v3021, 1
      %v3023 = vadd.f32 %v3021, %v3022
      %v3024 = vrot.slane %v3009, 4
      %v3025 = vadd.f32 %v3009, %v3024
      %v3026 = vrot.slane %v3025, 2
      %v3027 = vadd.f32 %v3025, %v3026
      %v3028 = vrot.slane %v3027, 1
      %v3029 = vadd.f32 %v3027, %v3028
      %v3030 = vrot.slane %v3010, 4
      %v3031 = vadd.f32 %v3010, %v3030
      %v3032 = vrot.slane %v3031, 2
      %v3033 = vadd.f32 %v3031, %v3032
      %v3034 = vrot.slane %v3033, 1
      %v3035 = vadd.f32 %v3033, %v3034
      %v3036 = vrot.slane %v3011, 4
      %v3037 = vadd.f32 %v3011, %v3036
      %v3038 = vrot.slane %v3037, 2
      %v3039 = vadd.f32 %v3037, %v3038
      %v3040 = vrot.slane %v3039, 1
      %v3041 = vadd.f32 %v3039, %v3040
      %v3042 = vrot.slane %v3012, 4
      %v3043 = vadd.f32 %v3012, %v3042
      %v3044 = vrot.slane %v3043, 2
      %v3045 = vadd.f32 %v3043, %v3044
      %v3046 = vrot.slane %v3045, 1
      %v3047 = vadd.f32 %v3045, %v3046
      %v3048 = vrot.slane %v3013, 4
      %v3049 = vadd.f32 %v3013, %v3048
      %v3050 = vrot.slane %v3049, 2
      %v3051 = vadd.f32 %v3049, %v3050
      %v3052 = vrot.slane %v3051, 1
      %v3053 = vadd.f32 %v3051, %v3052
      %v3054 = vrot.slane %v3014, 4
      %v3055 = vadd.f32 %v3014, %v3054
      %v3056 = vrot.slane %v3055, 2
      %v3057 = vadd.f32 %v3055, %v3056
      %v3058 = vrot.slane %v3057, 1
      %v3059 = vadd.f32 %v3057, %v3058
      %v3060 = vrot.slane %v3015, 4
      %v3061 = vadd.f32 %v3015, %v3060
      %v3062 = vrot.slane %v3061, 2
      %v3063 = vadd.f32 %v3061, %v3062
      %v3064 = vrot.slane %v3063, 1
      %v3065 = vadd.f32 %v3063, %v3064
      %v3066 = vrot.slane %v3016, 4
      %v3067 = vadd.f32 %v3016, %v3066
      %v3068 = vrot.slane %v3067, 2
      %v3069 = vadd.f32 %v3067, %v3068
      %v3070 = vrot.slane %v3069, 1
      %v3071 = vadd.f32 %v3069, %v3070
      %v3072 = vrot.slane %v3017, 4
      %v3073 = vadd.f32 %v3017, %v3072
      %v3074 = vrot.slane %v3073, 2
      %v3075 = vadd.f32 %v3073, %v3074
      %v3076 = vrot.slane %v3075, 1
      %v3077 = vadd.f32 %v3075, %v3076
      %3078 = vrot.lane.b32.xlu0 %v2756, 96
      %v3079 = vpop.permute.xlu0 %3078
      %3080 = vrot.lane.b32.xlu0 %v2762, 96
      %v3081 = vpop.permute.xlu0 %3080
      %3082 = vrot.lane.b32.xlu0 %v2766, 96
      %v3083 = vpop.permute.xlu0 %3082
      %3084 = vrot.lane.b32.xlu0 %v2772, 96
      %v3085 = vpop.permute.xlu0 %3084
      %3086 = vrot.lane.b32.xlu0 %v2776, 96
      %v3087 = vpop.permute.xlu0 %3086
      %3088 = vrot.lane.b32.xlu0 %v2758, 96
      %v3089 = vpop.permute.xlu0 %3088
      %3090 = vrot.lane.b32.xlu0 %v2764, 96
      %v3091 = vpop.permute.xlu0 %3090
      %3092 = vrot.lane.b32.xlu0 %v2768, 96
      %v3093 = vpop.permute.xlu0 %3092
      %3094 = vrot.lane.b32.xlu0 %v2774, 96
      %v3095 = vpop.permute.xlu0 %3094
      %3096 = vrot.lane.b32.xlu0 %v2778, 96
      %v3097 = vpop.permute.xlu0 %3096
      %v3098 = vsel %vm768, %v3079, %v3089
      %v3099 = vsel %vm768, %v3081, %v3091
      %v3100 = vsel %vm768, %v3083, %v3093
      %v3101 = vsel %vm768, %v3085, %v3095
      %v3102 = vsel %vm768, %v3087, %v3097
      %v3103 = vsel %vm768, %v3089, %v3079
      %v3104 = vsel %vm768, %v3091, %v3081
      %v3105 = vsel %vm768, %v3093, %v3083
      %v3106 = vsel %vm768, %v3095, %v3085
      %v3107 = vsel %vm768, %v3097, %v3087
      %v3108 = vmul.f32 %v2732, %v3103
      %v3109 = vmul.f32 %v2734, %v3098
      %v3110 = vmul.f32 %v2736, %v3104
      %v3111 = vmul.f32 %v2738, %v3099
      %v3112 = vmul.f32 %v2742, %v3105
      %v3113 = vmul.f32 %v2744, %v3100
      %v3114 = vmul.f32 %v2746, %v3106
      %v3115 = vmul.f32 %v2748, %v3101
      %v3116 = vmul.f32 %v2752, %v3107
      %v3117 = vmul.f32 %v2754, %v3102
      %v3118 = vrot.slane %v3108, 4
      %v3119 = vadd.f32 %v3108, %v3118
      %v3120 = vrot.slane %v3119, 2
      %v3121 = vadd.f32 %v3119, %v3120
      %v3122 = vrot.slane %v3121, 1
      %v3123 = vadd.f32 %v3121, %v3122
      %v3124 = vrot.slane %v3109, 4
      %v3125 = vadd.f32 %v3109, %v3124
      %v3126 = vrot.slane %v3125, 2
      %v3127 = vadd.f32 %v3125, %v3126
      %v3128 = vrot.slane %v3127, 1
      %v3129 = vadd.f32 %v3127, %v3128
      %v3130 = vrot.slane %v3110, 4
      %v3131 = vadd.f32 %v3110, %v3130
      %v3132 = vrot.slane %v3131, 2
      %v3133 = vadd.f32 %v3131, %v3132
      %v3134 = vrot.slane %v3133, 1
      %v3135 = vadd.f32 %v3133, %v3134
      %v3136 = vrot.slane %v3111, 4
      %v3137 = vadd.f32 %v3111, %v3136
      %v3138 = vrot.slane %v3137, 2
      %v3139 = vadd.f32 %v3137, %v3138
      %v3140 = vrot.slane %v3139, 1
      %v3141 = vadd.f32 %v3139, %v3140
      %v3142 = vrot.slane %v3112, 4
      %v3143 = vadd.f32 %v3112, %v3142
      %v3144 = vrot.slane %v3143, 2
      %v3145 = vadd.f32 %v3143, %v3144
      %v3146 = vrot.slane %v3145, 1
      %v3147 = vadd.f32 %v3145, %v3146
      %v3148 = vrot.slane %v3113, 4
      %v3149 = vadd.f32 %v3113, %v3148
      %v3150 = vrot.slane %v3149, 2
      %v3151 = vadd.f32 %v3149, %v3150
      %v3152 = vrot.slane %v3151, 1
      %v3153 = vadd.f32 %v3151, %v3152
      %v3154 = vrot.slane %v3114, 4
      %v3155 = vadd.f32 %v3114, %v3154
      %v3156 = vrot.slane %v3155, 2
      %v3157 = vadd.f32 %v3155, %v3156
      %v3158 = vrot.slane %v3157, 1
      %v3159 = vadd.f32 %v3157, %v3158
      %v3160 = vrot.slane %v3115, 4
      %v3161 = vadd.f32 %v3115, %v3160
      %v3162 = vrot.slane %v3161, 2
      %v3163 = vadd.f32 %v3161, %v3162
      %v3164 = vrot.slane %v3163, 1
      %v3165 = vadd.f32 %v3163, %v3164
      %v3166 = vrot.slane %v3116, 4
      %v3167 = vadd.f32 %v3116, %v3166
      %v3168 = vrot.slane %v3167, 2
      %v3169 = vadd.f32 %v3167, %v3168
      %v3170 = vrot.slane %v3169, 1
      %v3171 = vadd.f32 %v3169, %v3170
      %v3172 = vrot.slane %v3117, 4
      %v3173 = vadd.f32 %v3117, %v3172
      %v3174 = vrot.slane %v3173, 2
      %v3175 = vadd.f32 %v3173, %v3174
      %v3176 = vrot.slane %v3175, 1
      %v3177 = vadd.f32 %v3175, %v3176
      %v3178 = vmul.f32 %v2732, %v2758
      %v3179 = vmul.f32 %v2734, %v2756
      %v3180 = vmul.f32 %v2736, %v2764
      %v3181 = vmul.f32 %v2738, %v2762
      %v3182 = vmul.f32 %v2742, %v2768
      %v3183 = vmul.f32 %v2744, %v2766
      %v3184 = vmul.f32 %v2746, %v2774
      %v3185 = vmul.f32 %v2748, %v2772
      %v3186 = vmul.f32 %v2752, %v2778
      %v3187 = vmul.f32 %v2754, %v2776
      %v3188 = vrot.slane %v3178, 4
      %v3189 = vadd.f32 %v3178, %v3188
      %v3190 = vrot.slane %v3189, 2
      %v3191 = vadd.f32 %v3189, %v3190
      %v3192 = vrot.slane %v3191, 1
      %v3193 = vadd.f32 %v3191, %v3192
      %v3194 = vrot.slane %v3179, 4
      %v3195 = vadd.f32 %v3179, %v3194
      %v3196 = vrot.slane %v3195, 2
      %v3197 = vadd.f32 %v3195, %v3196
      %v3198 = vrot.slane %v3197, 1
      %v3199 = vadd.f32 %v3197, %v3198
      %v3200 = vrot.slane %v3180, 4
      %v3201 = vadd.f32 %v3180, %v3200
      %v3202 = vrot.slane %v3201, 2
      %v3203 = vadd.f32 %v3201, %v3202
      %v3204 = vrot.slane %v3203, 1
      %v3205 = vadd.f32 %v3203, %v3204
      %v3206 = vrot.slane %v3181, 4
      %v3207 = vadd.f32 %v3181, %v3206
      %v3208 = vrot.slane %v3207, 2
      %v3209 = vadd.f32 %v3207, %v3208
      %v3210 = vrot.slane %v3209, 1
      %v3211 = vadd.f32 %v3209, %v3210
      %v3212 = vrot.slane %v3182, 4
      %v3213 = vadd.f32 %v3182, %v3212
      %v3214 = vrot.slane %v3213, 2
      %v3215 = vadd.f32 %v3213, %v3214
      %v3216 = vrot.slane %v3215, 1
      %v3217 = vadd.f32 %v3215, %v3216
      %v3218 = vrot.slane %v3183, 4
      %v3219 = vadd.f32 %v3183, %v3218
      %v3220 = vrot.slane %v3219, 2
      %v3221 = vadd.f32 %v3219, %v3220
      %v3222 = vrot.slane %v3221, 1
      %v3223 = vadd.f32 %v3221, %v3222
      %v3224 = vrot.slane %v3184, 4
      %v3225 = vadd.f32 %v3184, %v3224
      %v3226 = vrot.slane %v3225, 2
      %v3227 = vadd.f32 %v3225, %v3226
      %v3228 = vrot.slane %v3227, 1
      %v3229 = vadd.f32 %v3227, %v3228
      %v3230 = vrot.slane %v3185, 4
      %v3231 = vadd.f32 %v3185, %v3230
      %v3232 = vrot.slane %v3231, 2
      %v3233 = vadd.f32 %v3231, %v3232
      %v3234 = vrot.slane %v3233, 1
      %v3235 = vadd.f32 %v3233, %v3234
      %v3236 = vrot.slane %v3186, 4
      %v3237 = vadd.f32 %v3186, %v3236
      %v3238 = vrot.slane %v3237, 2
      %v3239 = vadd.f32 %v3237, %v3238
      %v3240 = vrot.slane %v3239, 1
      %v3241 = vadd.f32 %v3239, %v3240
      %v3242 = vrot.slane %v3187, 4
      %v3243 = vadd.f32 %v3187, %v3242
      %v3244 = vrot.slane %v3243, 2
      %v3245 = vadd.f32 %v3243, %v3244
      %v3246 = vrot.slane %v3245, 1
      %v3247 = vadd.f32 %v3245, %v3246
      %v3248 = vmul.f32 %v2732, %v2898
      %v3249 = vmul.f32 %v2734, %v2903
      %v3250 = vmul.f32 %v2736, %v2899
      %v3251 = vmul.f32 %v2738, %v2904
      %v3252 = vmul.f32 %v2742, %v2900
      %v3253 = vmul.f32 %v2744, %v2905
      %v3254 = vmul.f32 %v2746, %v2901
      %v3255 = vmul.f32 %v2748, %v2906
      %v3256 = vmul.f32 %v2752, %v2902
      %v3257 = vmul.f32 %v2754, %v2907
      %v3258 = vrot.slane %v3248, 4
      %v3259 = vadd.f32 %v3248, %v3258
      %v3260 = vrot.slane %v3259, 2
      %v3261 = vadd.f32 %v3259, %v3260
      %v3262 = vrot.slane %v3261, 1
      %v3263 = vadd.f32 %v3261, %v3262
      %v3264 = vrot.slane %v3249, 4
      %v3265 = vadd.f32 %v3249, %v3264
      %v3266 = vrot.slane %v3265, 2
      %v3267 = vadd.f32 %v3265, %v3266
      %v3268 = vrot.slane %v3267, 1
      %v3269 = vadd.f32 %v3267, %v3268
      %v3270 = vrot.slane %v3250, 4
      %v3271 = vadd.f32 %v3250, %v3270
      %v3272 = vrot.slane %v3271, 2
      %v3273 = vadd.f32 %v3271, %v3272
      %v3274 = vrot.slane %v3273, 1
      %v3275 = vadd.f32 %v3273, %v3274
      %v3276 = vrot.slane %v3251, 4
      %v3277 = vadd.f32 %v3251, %v3276
      %v3278 = vrot.slane %v3277, 2
      %v3279 = vadd.f32 %v3277, %v3278
      %v3280 = vrot.slane %v3279, 1
      %v3281 = vadd.f32 %v3279, %v3280
      %v3282 = vrot.slane %v3252, 4
      %v3283 = vadd.f32 %v3252, %v3282
      %v3284 = vrot.slane %v3283, 2
      %v3285 = vadd.f32 %v3283, %v3284
      %v3286 = vrot.slane %v3285, 1
      %v3287 = vadd.f32 %v3285, %v3286
      %v3288 = vrot.slane %v3253, 4
      %v3289 = vadd.f32 %v3253, %v3288
      %v3290 = vrot.slane %v3289, 2
      %v3291 = vadd.f32 %v3289, %v3290
      %v3292 = vrot.slane %v3291, 1
      %v3293 = vadd.f32 %v3291, %v3292
      %v3294 = vrot.slane %v3254, 4
      %v3295 = vadd.f32 %v3254, %v3294
      %v3296 = vrot.slane %v3295, 2
      %v3297 = vadd.f32 %v3295, %v3296
      %v3298 = vrot.slane %v3297, 1
      %v3299 = vadd.f32 %v3297, %v3298
      %v3300 = vrot.slane %v3255, 4
      %v3301 = vadd.f32 %v3255, %v3300
      %v3302 = vrot.slane %v3301, 2
      %v3303 = vadd.f32 %v3301, %v3302
      %v3304 = vrot.slane %v3303, 1
      %v3305 = vadd.f32 %v3303, %v3304
      %v3306 = vrot.slane %v3256, 4
      %v3307 = vadd.f32 %v3256, %v3306
      %v3308 = vrot.slane %v3307, 2
      %v3309 = vadd.f32 %v3307, %v3308
      %v3310 = vrot.slane %v3309, 1
      %v3311 = vadd.f32 %v3309, %v3310
      %v3312 = vrot.slane %v3257, 4
      %v3313 = vadd.f32 %v3257, %v3312
      %v3314 = vrot.slane %v3313, 2
      %v3315 = vadd.f32 %v3313, %v3314
      %v3316 = vrot.slane %v3315, 1
      %v3317 = vadd.f32 %v3315, %v3316
      %v3318 = vmul.f32 %v2732, %v2998
      %v3319 = vmul.f32 %v2734, %v3003
      %v3320 = vmul.f32 %v2736, %v2999
      %v3321 = vmul.f32 %v2738, %v3004
      %v3322 = vmul.f32 %v2742, %v3000
      %v3323 = vmul.f32 %v2744, %v3005
      %v3324 = vmul.f32 %v2746, %v3001
      %v3325 = vmul.f32 %v2748, %v3006
      %v3326 = vmul.f32 %v2752, %v3002
      %v3327 = vmul.f32 %v2754, %v3007
      %v3328 = vrot.slane %v3318, 4
      %v3329 = vadd.f32 %v3318, %v3328
      %v3330 = vrot.slane %v3329, 2
      %v3331 = vadd.f32 %v3329, %v3330
      %v3332 = vrot.slane %v3331, 1
      %v3333 = vadd.f32 %v3331, %v3332
      %v3334 = vrot.slane %v3319, 4
      %v3335 = vadd.f32 %v3319, %v3334
      %v3336 = vrot.slane %v3335, 2
      %v3337 = vadd.f32 %v3335, %v3336
      %v3338 = vrot.slane %v3337, 1
      %v3339 = vadd.f32 %v3337, %v3338
      %v3340 = vrot.slane %v3320, 4
      %v3341 = vadd.f32 %v3320, %v3340
      %v3342 = vrot.slane %v3341, 2
      %v3343 = vadd.f32 %v3341, %v3342
      %v3344 = vrot.slane %v3343, 1
      %v3345 = vadd.f32 %v3343, %v3344
      %v3346 = vrot.slane %v3321, 4
      %v3347 = vadd.f32 %v3321, %v3346
      %v3348 = vrot.slane %v3347, 2
      %v3349 = vadd.f32 %v3347, %v3348
      %v3350 = vrot.slane %v3349, 1
      %v3351 = vadd.f32 %v3349, %v3350
      %v3352 = vrot.slane %v3322, 4
      %v3353 = vadd.f32 %v3322, %v3352
      %v3354 = vrot.slane %v3353, 2
      %v3355 = vadd.f32 %v3353, %v3354
      %v3356 = vrot.slane %v3355, 1
      %v3357 = vadd.f32 %v3355, %v3356
      %v3358 = vrot.slane %v3323, 4
      %v3359 = vadd.f32 %v3323, %v3358
      %v3360 = vrot.slane %v3359, 2
      %v3361 = vadd.f32 %v3359, %v3360
      %v3362 = vrot.slane %v3361, 1
      %v3363 = vadd.f32 %v3361, %v3362
      %v3364 = vrot.slane %v3324, 4
      %v3365 = vadd.f32 %v3324, %v3364
      %v3366 = vrot.slane %v3365, 2
      %v3367 = vadd.f32 %v3365, %v3366
      %v3368 = vrot.slane %v3367, 1
      %v3369 = vadd.f32 %v3367, %v3368
      %v3370 = vrot.slane %v3325, 4
      %v3371 = vadd.f32 %v3325, %v3370
      %v3372 = vrot.slane %v3371, 2
      %v3373 = vadd.f32 %v3371, %v3372
      %v3374 = vrot.slane %v3373, 1
      %v3375 = vadd.f32 %v3373, %v3374
      %v3376 = vrot.slane %v3326, 4
      %v3377 = vadd.f32 %v3326, %v3376
      %v3378 = vrot.slane %v3377, 2
      %v3379 = vadd.f32 %v3377, %v3378
      %v3380 = vrot.slane %v3379, 1
      %v3381 = vadd.f32 %v3379, %v3380
      %v3382 = vrot.slane %v3327, 4
      %v3383 = vadd.f32 %v3327, %v3382
      %v3384 = vrot.slane %v3383, 2
      %v3385 = vadd.f32 %v3383, %v3384
      %v3386 = vrot.slane %v3385, 1
      %v3387 = vadd.f32 %v3385, %v3386
      %v3388 = vmul.f32 %v2732, %v3098
      %v3389 = vmul.f32 %v2734, %v3103
      %v3390 = vmul.f32 %v2736, %v3099
      %v3391 = vmul.f32 %v2738, %v3104
      %v3392 = vmul.f32 %v2742, %v3100
      %v3393 = vmul.f32 %v2744, %v3105
      %v3394 = vmul.f32 %v2746, %v3101
      %v3395 = vmul.f32 %v2748, %v3106
      %v3396 = vmul.f32 %v2752, %v3102
      %v3397 = vmul.f32 %v2754, %v3107
      %v3398 = vrot.slane %v3388, 4
      %v3399 = vadd.f32 %v3388, %v3398
      %v3400 = vrot.slane %v3399, 2
      %v3401 = vadd.f32 %v3399, %v3400
      %v3402 = vrot.slane %v3401, 1
      %v3403 = vadd.f32 %v3401, %v3402
      %v3404 = vrot.slane %v3389, 4
      %v3405 = vadd.f32 %v3389, %v3404
      %v3406 = vrot.slane %v3405, 2
      %v3407 = vadd.f32 %v3405, %v3406
      %v3408 = vrot.slane %v3407, 1
      %v3409 = vadd.f32 %v3407, %v3408
      %v3410 = vrot.slane %v3390, 4
      %v3411 = vadd.f32 %v3390, %v3410
      %v3412 = vrot.slane %v3411, 2
      %v3413 = vadd.f32 %v3411, %v3412
      %v3414 = vrot.slane %v3413, 1
      %v3415 = vadd.f32 %v3413, %v3414
      %v3416 = vrot.slane %v3391, 4
      %v3417 = vadd.f32 %v3391, %v3416
      %v3418 = vrot.slane %v3417, 2
      %v3419 = vadd.f32 %v3417, %v3418
      %v3420 = vrot.slane %v3419, 1
      %v3421 = vadd.f32 %v3419, %v3420
      %v3422 = vrot.slane %v3392, 4
      %v3423 = vadd.f32 %v3392, %v3422
      %v3424 = vrot.slane %v3423, 2
      %v3425 = vadd.f32 %v3423, %v3424
      %v3426 = vrot.slane %v3425, 1
      %v3427 = vadd.f32 %v3425, %v3426
      %v3428 = vrot.slane %v3393, 4
      %v3429 = vadd.f32 %v3393, %v3428
      %v3430 = vrot.slane %v3429, 2
      %v3431 = vadd.f32 %v3429, %v3430
      %v3432 = vrot.slane %v3431, 1
      %v3433 = vadd.f32 %v3431, %v3432
      %v3434 = vrot.slane %v3394, 4
      %v3435 = vadd.f32 %v3394, %v3434
      %v3436 = vrot.slane %v3435, 2
      %v3437 = vadd.f32 %v3435, %v3436
      %v3438 = vrot.slane %v3437, 1
      %v3439 = vadd.f32 %v3437, %v3438
      %v3440 = vrot.slane %v3395, 4
      %v3441 = vadd.f32 %v3395, %v3440
      %v3442 = vrot.slane %v3441, 2
      %v3443 = vadd.f32 %v3441, %v3442
      %v3444 = vrot.slane %v3443, 1
      %v3445 = vadd.f32 %v3443, %v3444
      %v3446 = vrot.slane %v3396, 4
      %v3447 = vadd.f32 %v3396, %v3446
      %v3448 = vrot.slane %v3447, 2
      %v3449 = vadd.f32 %v3447, %v3448
      %v3450 = vrot.slane %v3449, 1
      %v3451 = vadd.f32 %v3449, %v3450
      %v3452 = vrot.slane %v3397, 4
      %v3453 = vadd.f32 %v3397, %v3452
      %v3454 = vrot.slane %v3453, 2
      %v3455 = vadd.f32 %v3453, %v3454
      %v3456 = vrot.slane %v3455, 1
      %v3457 = vadd.f32 %v3455, %v3456
      %v3458 = vmax.f32 %v2823, %v2923
      %v3459 = vmax.f32 %v2829, %v2929
      %v3460 = vmax.f32 %v2835, %v2935
      %v3461 = vmax.f32 %v2841, %v2941
      %v3462 = vmax.f32 %v2847, %v2947
      %v3463 = vmax.f32 %v2853, %v2953
      %v3464 = vmax.f32 %v2859, %v2959
      %v3465 = vmax.f32 %v2865, %v2965
      %v3466 = vmax.f32 %v2871, %v2971
      %v3467 = vmax.f32 %v2877, %v2977
      %v3468 = vmax.f32 %v3458, %v3023
      %v3469 = vmax.f32 %v3459, %v3029
      %v3470 = vmax.f32 %v3460, %v3035
      %v3471 = vmax.f32 %v3461, %v3041
      %v3472 = vmax.f32 %v3462, %v3047
      %v3473 = vmax.f32 %v3463, %v3053
      %v3474 = vmax.f32 %v3464, %v3059
      %v3475 = vmax.f32 %v3465, %v3065
      %v3476 = vmax.f32 %v3466, %v3071
      %v3477 = vmax.f32 %v3467, %v3077
      %v3478 = vmax.f32 %v3468, %v3123
      %v3479 = vmax.f32 %v3469, %v3129
      %v3480 = vmax.f32 %v3470, %v3135
      %v3481 = vmax.f32 %v3471, %v3141
      %v3482 = vmax.f32 %v3472, %v3147
      %v3483 = vmax.f32 %v3473, %v3153
      %v3484 = vmax.f32 %v3474, %v3159
      %v3485 = vmax.f32 %v3475, %v3165
      %v3486 = vmax.f32 %v3476, %v3171
      %v3487 = vmax.f32 %v3477, %v3177
      %v3488 = vmax.f32 %v3478, %v3193
      %v3489 = vmax.f32 %v3479, %v3199
      %v3490 = vmax.f32 %v3480, %v3205
      %v3491 = vmax.f32 %v3481, %v3211
      %v3492 = vmax.f32 %v3482, %v3217
      %v3493 = vmax.f32 %v3483, %v3223
      %v3494 = vmax.f32 %v3484, %v3229
      %v3495 = vmax.f32 %v3485, %v3235
      %v3496 = vmax.f32 %v3486, %v3241
      %v3497 = vmax.f32 %v3487, %v3247
      %v3498 = vmax.f32 %v3488, %v3263
      %v3499 = vmax.f32 %v3489, %v3269
      %v3500 = vmax.f32 %v3490, %v3275
      %v3501 = vmax.f32 %v3491, %v3281
      %v3502 = vmax.f32 %v3492, %v3287
      %v3503 = vmax.f32 %v3493, %v3293
      %v3504 = vmax.f32 %v3494, %v3299
      %v3505 = vmax.f32 %v3495, %v3305
      %v3506 = vmax.f32 %v3496, %v3311
      %v3507 = vmax.f32 %v3497, %v3317
      %v3508 = vmax.f32 %v3498, %v3333
      %v3509 = vmax.f32 %v3499, %v3339
      %v3510 = vmax.f32 %v3500, %v3345
      %v3511 = vmax.f32 %v3501, %v3351
      %v3512 = vmax.f32 %v3502, %v3357
      %v3513 = vmax.f32 %v3503, %v3363
      %v3514 = vmax.f32 %v3504, %v3369
      %v3515 = vmax.f32 %v3505, %v3375
      %v3516 = vmax.f32 %v3506, %v3381
      %v3517 = vmax.f32 %v3507, %v3387
      %v3518 = vmax.f32 %v3508, %v3403
      %v3519 = vmax.f32 %v3509, %v3409
      %v3520 = vmax.f32 %v3510, %v3415
      %v3521 = vmax.f32 %v3511, %v3421
      %v3522 = vmax.f32 %v3512, %v3427
      %v3523 = vmax.f32 %v3513, %v3433
      %v3524 = vmax.f32 %v3514, %v3439
      %v3525 = vmax.f32 %v3515, %v3445
      %v3526 = vmax.f32 %v3516, %v3451
      %v3527 = vmax.f32 %v3517, %v3457
      %v3528 = vsub.f32 %v2823, %v3518
      %v3529 = vsub.f32 %v2829, %v3519
      %v3530 = vsub.f32 %v2835, %v3520
      %v3531 = vsub.f32 %v2841, %v3521
      %v3532 = vsub.f32 %v2847, %v3522
      %v3533 = vsub.f32 %v2853, %v3523
      %v3534 = vsub.f32 %v2859, %v3524
      %v3535 = vsub.f32 %v2865, %v3525
      %v3536 = vsub.f32 %v2871, %v3526
      %v3537 = vsub.f32 %v2877, %v3527
      %v3538 = vmul.f32 %v3528, 1.442695
      %v3539 = vpow.pop %v3538
      %v3540 = vmul.f32 %v3529, 1.442695
      %v3541 = vpow.pop %v3540
      %v3542 = vmul.f32 %v3530, 1.442695
      %v3543 = vpow.pop %v3542
      %v3544 = vmul.f32 %v3531, 1.442695
      %v3545 = vpow.pop %v3544
      %v3546 = vmul.f32 %v3532, 1.442695
      %v3547 = vpow.pop %v3546
      %v3548 = vmul.f32 %v3533, 1.442695
      %v3549 = vpow.pop %v3548
      %v3550 = vmul.f32 %v3534, 1.442695
      %v3551 = vpow.pop %v3550
      %v3552 = vmul.f32 %v3535, 1.442695
      %v3553 = vpow.pop %v3552
      %v3554 = vmul.f32 %v3536, 1.442695
      %v3555 = vpow.pop %v3554
      %v3556 = vmul.f32 %v3537, 1.442695
      %v3557 = vpow.pop %v3556
      %v3558 = vsub.f32 %v2923, %v3518
      %v3559 = vsub.f32 %v2929, %v3519
      %v3560 = vsub.f32 %v2935, %v3520
      %v3561 = vsub.f32 %v2941, %v3521
      %v3562 = vsub.f32 %v2947, %v3522
      %v3563 = vsub.f32 %v2953, %v3523
      %v3564 = vsub.f32 %v2959, %v3524
      %v3565 = vsub.f32 %v2965, %v3525
      %v3566 = vsub.f32 %v2971, %v3526
      %v3567 = vsub.f32 %v2977, %v3527
      %v3568 = vmul.f32 %v3558, 1.442695
      %v3569 = vpow.pop %v3568
      %v3570 = vmul.f32 %v3559, 1.442695
      %v3571 = vpow.pop %v3570
      %v3572 = vmul.f32 %v3560, 1.442695
      %v3573 = vpow.pop %v3572
      %v3574 = vmul.f32 %v3561, 1.442695
      %v3575 = vpow.pop %v3574
      %v3576 = vmul.f32 %v3562, 1.442695
      %v3577 = vpow.pop %v3576
      %v3578 = vmul.f32 %v3563, 1.442695
      %v3579 = vpow.pop %v3578
      %v3580 = vmul.f32 %v3564, 1.442695
      %v3581 = vpow.pop %v3580
      %v3582 = vmul.f32 %v3565, 1.442695
      %v3583 = vpow.pop %v3582
      %v3584 = vmul.f32 %v3566, 1.442695
      %v3585 = vpow.pop %v3584
      %v3586 = vmul.f32 %v3567, 1.442695
      %v3587 = vpow.pop %v3586
      %v3588 = vsub.f32 %v3023, %v3518
      %v3589 = vsub.f32 %v3029, %v3519
      %v3590 = vsub.f32 %v3035, %v3520
      %v3591 = vsub.f32 %v3041, %v3521
      %v3592 = vsub.f32 %v3047, %v3522
      %v3593 = vsub.f32 %v3053, %v3523
      %v3594 = vsub.f32 %v3059, %v3524
      %v3595 = vsub.f32 %v3065, %v3525
      %v3596 = vsub.f32 %v3071, %v3526
      %v3597 = vsub.f32 %v3077, %v3527
      %v3598 = vmul.f32 %v3588, 1.442695
      %v3599 = vpow.pop %v3598
      %v3600 = vmul.f32 %v3589, 1.442695
      %v3601 = vpow.pop %v3600
      %v3602 = vmul.f32 %v3590, 1.442695
      %v3603 = vpow.pop %v3602
      %v3604 = vmul.f32 %v3591, 1.442695
      %v3605 = vpow.pop %v3604
      %v3606 = vmul.f32 %v3592, 1.442695
      %v3607 = vpow.pop %v3606
      %v3608 = vmul.f32 %v3593, 1.442695
      %v3609 = vpow.pop %v3608
      %v3610 = vmul.f32 %v3594, 1.442695
      %v3611 = vpow.pop %v3610
      %v3612 = vmul.f32 %v3595, 1.442695
      %v3613 = vpow.pop %v3612
      %v3614 = vmul.f32 %v3596, 1.442695
      %v3615 = vpow.pop %v3614
      %v3616 = vmul.f32 %v3597, 1.442695
      %v3617 = vpow.pop %v3616
      %v3618 = vsub.f32 %v3123, %v3518
      %v3619 = vsub.f32 %v3129, %v3519
      %v3620 = vsub.f32 %v3135, %v3520
      %v3621 = vsub.f32 %v3141, %v3521
      %v3622 = vsub.f32 %v3147, %v3522
      %v3623 = vsub.f32 %v3153, %v3523
      %v3624 = vsub.f32 %v3159, %v3524
      %v3625 = vsub.f32 %v3165, %v3525
      %v3626 = vsub.f32 %v3171, %v3526
      %v3627 = vsub.f32 %v3177, %v3527
      %v3628 = vmul.f32 %v3618, 1.442695
      %v3629 = vpow.pop %v3628
      %v3630 = vmul.f32 %v3619, 1.442695
      %v3631 = vpow.pop %v3630
      %v3632 = vmul.f32 %v3620, 1.442695
      %v3633 = vpow.pop %v3632
      %v3634 = vmul.f32 %v3621, 1.442695
      %v3635 = vpow.pop %v3634
      %v3636 = vmul.f32 %v3622, 1.442695
      %v3637 = vpow.pop %v3636
      %v3638 = vmul.f32 %v3623, 1.442695
      %v3639 = vpow.pop %v3638
      %v3640 = vmul.f32 %v3624, 1.442695
      %v3641 = vpow.pop %v3640
      %v3642 = vmul.f32 %v3625, 1.442695
      %v3643 = vpow.pop %v3642
      %v3644 = vmul.f32 %v3626, 1.442695
      %v3645 = vpow.pop %v3644
      %v3646 = vmul.f32 %v3627, 1.442695
      %v3647 = vpow.pop %v3646
      %v3648 = vsub.f32 %v3193, %v3518
      %v3649 = vsub.f32 %v3199, %v3519
      %v3650 = vsub.f32 %v3205, %v3520
      %v3651 = vsub.f32 %v3211, %v3521
      %v3652 = vsub.f32 %v3217, %v3522
      %v3653 = vsub.f32 %v3223, %v3523
      %v3654 = vsub.f32 %v3229, %v3524
      %v3655 = vsub.f32 %v3235, %v3525
      %v3656 = vsub.f32 %v3241, %v3526
      %v3657 = vsub.f32 %v3247, %v3527
      %v3658 = vmul.f32 %v3648, 1.442695
      %v3659 = vpow.pop %v3658
      %v3660 = vmul.f32 %v3649, 1.442695
      %v3661 = vpow.pop %v3660
      %v3662 = vmul.f32 %v3650, 1.442695
      %v3663 = vpow.pop %v3662
      %v3664 = vmul.f32 %v3651, 1.442695
      %v3665 = vpow.pop %v3664
      %v3666 = vmul.f32 %v3652, 1.442695
      %v3667 = vpow.pop %v3666
      %v3668 = vmul.f32 %v3653, 1.442695
      %v3669 = vpow.pop %v3668
      %v3670 = vmul.f32 %v3654, 1.442695
      %v3671 = vpow.pop %v3670
      %v3672 = vmul.f32 %v3655, 1.442695
      %v3673 = vpow.pop %v3672
      %v3674 = vmul.f32 %v3656, 1.442695
      %v3675 = vpow.pop %v3674
      %v3676 = vmul.f32 %v3657, 1.442695
      %v3677 = vpow.pop %v3676
      %v3678 = vsub.f32 %v3263, %v3518
      %v3679 = vsub.f32 %v3269, %v3519
      %v3680 = vsub.f32 %v3275, %v3520
      %v3681 = vsub.f32 %v3281, %v3521
      %v3682 = vsub.f32 %v3287, %v3522
      %v3683 = vsub.f32 %v3293, %v3523
      %v3684 = vsub.f32 %v3299, %v3524
      %v3685 = vsub.f32 %v3305, %v3525
      %v3686 = vsub.f32 %v3311, %v3526
      %v3687 = vsub.f32 %v3317, %v3527
      %v3688 = vmul.f32 %v3678, 1.442695
      %v3689 = vpow.pop %v3688
      %v3690 = vmul.f32 %v3679, 1.442695
      %v3691 = vpow.pop %v3690
      %v3692 = vmul.f32 %v3680, 1.442695
      %v3693 = vpow.pop %v3692
      %v3694 = vmul.f32 %v3681, 1.442695
      %v3695 = vpow.pop %v3694
      %v3696 = vmul.f32 %v3682, 1.442695
      %v3697 = vpow.pop %v3696
      %v3698 = vmul.f32 %v3683, 1.442695
      %v3699 = vpow.pop %v3698
      %v3700 = vmul.f32 %v3684, 1.442695
      %v3701 = vpow.pop %v3700
      %v3702 = vmul.f32 %v3685, 1.442695
      %v3703 = vpow.pop %v3702
      %v3704 = vmul.f32 %v3686, 1.442695
      %v3705 = vpow.pop %v3704
      %v3706 = vmul.f32 %v3687, 1.442695
      %v3707 = vpow.pop %v3706
      %v3708 = vsub.f32 %v3333, %v3518
      %v3709 = vsub.f32 %v3339, %v3519
      %v3710 = vsub.f32 %v3345, %v3520
      %v3711 = vsub.f32 %v3351, %v3521
      %v3712 = vsub.f32 %v3357, %v3522
      %v3713 = vsub.f32 %v3363, %v3523
      %v3714 = vsub.f32 %v3369, %v3524
      %v3715 = vsub.f32 %v3375, %v3525
      %v3716 = vsub.f32 %v3381, %v3526
      %v3717 = vsub.f32 %v3387, %v3527
      %v3718 = vmul.f32 %v3708, 1.442695
      %v3719 = vpow.pop %v3718
      %v3720 = vmul.f32 %v3709, 1.442695
      %v3721 = vpow.pop %v3720
      %v3722 = vmul.f32 %v3710, 1.442695
      %v3723 = vpow.pop %v3722
      %v3724 = vmul.f32 %v3711, 1.442695
      %v3725 = vpow.pop %v3724
      %v3726 = vmul.f32 %v3712, 1.442695
      %v3727 = vpow.pop %v3726
      %v3728 = vmul.f32 %v3713, 1.442695
      %v3729 = vpow.pop %v3728
      %v3730 = vmul.f32 %v3714, 1.442695
      %v3731 = vpow.pop %v3730
      %v3732 = vmul.f32 %v3715, 1.442695
      %v3733 = vpow.pop %v3732
      %v3734 = vmul.f32 %v3716, 1.442695
      %v3735 = vpow.pop %v3734
      %v3736 = vmul.f32 %v3717, 1.442695
      %v3737 = vpow.pop %v3736
      %v3738 = vsub.f32 %v3403, %v3518
      %v3739 = vsub.f32 %v3409, %v3519
      %v3740 = vsub.f32 %v3415, %v3520
      %v3741 = vsub.f32 %v3421, %v3521
      %v3742 = vsub.f32 %v3427, %v3522
      %v3743 = vsub.f32 %v3433, %v3523
      %v3744 = vsub.f32 %v3439, %v3524
      %v3745 = vsub.f32 %v3445, %v3525
      %v3746 = vsub.f32 %v3451, %v3526
      %v3747 = vsub.f32 %v3457, %v3527
      %v3748 = vmul.f32 %v3738, 1.442695
      %v3749 = vpow.pop %v3748
      %v3750 = vmul.f32 %v3739, 1.442695
      %v3751 = vpow.pop %v3750
      %v3752 = vmul.f32 %v3740, 1.442695
      %v3753 = vpow.pop %v3752
      %v3754 = vmul.f32 %v3741, 1.442695
      %v3755 = vpow.pop %v3754
      %v3756 = vmul.f32 %v3742, 1.442695
      %v3757 = vpow.pop %v3756
      %v3758 = vmul.f32 %v3743, 1.442695
      %v3759 = vpow.pop %v3758
      %v3760 = vmul.f32 %v3744, 1.442695
      %v3761 = vpow.pop %v3760
      %v3762 = vmul.f32 %v3745, 1.442695
      %v3763 = vpow.pop %v3762
      %v3764 = vmul.f32 %v3746, 1.442695
      %v3765 = vpow.pop %v3764
      %v3766 = vmul.f32 %v3747, 1.442695
      %v3767 = vpow.pop %v3766
      %v3768 = vadd.f32 %v3539, %v3569
      %v3769 = vadd.f32 %v3541, %v3571
      %v3770 = vadd.f32 %v3543, %v3573
      %v3771 = vadd.f32 %v3545, %v3575
      %v3772 = vadd.f32 %v3547, %v3577
      %v3773 = vadd.f32 %v3549, %v3579
      %v3774 = vadd.f32 %v3551, %v3581
      %v3775 = vadd.f32 %v3553, %v3583
      %v3776 = vadd.f32 %v3555, %v3585
      %v3777 = vadd.f32 %v3557, %v3587
      %v3778 = vadd.f32 %v3768, %v3599
      %v3779 = vadd.f32 %v3769, %v3601
      %v3780 = vadd.f32 %v3770, %v3603
      %v3781 = vadd.f32 %v3771, %v3605
      %v3782 = vadd.f32 %v3772, %v3607
      %v3783 = vadd.f32 %v3773, %v3609
      %v3784 = vadd.f32 %v3774, %v3611
      %v3785 = vadd.f32 %v3775, %v3613
      %v3786 = vadd.f32 %v3776, %v3615
      %v3787 = vadd.f32 %v3777, %v3617
      %v3788 = vadd.f32 %v3778, %v3629
      %v3789 = vadd.f32 %v3779, %v3631
      %v3790 = vadd.f32 %v3780, %v3633
      %v3791 = vadd.f32 %v3781, %v3635
      %v3792 = vadd.f32 %v3782, %v3637
      %v3793 = vadd.f32 %v3783, %v3639
      %v3794 = vadd.f32 %v3784, %v3641
      %v3795 = vadd.f32 %v3785, %v3643
      %v3796 = vadd.f32 %v3786, %v3645
      %v3797 = vadd.f32 %v3787, %v3647
      %v3798 = vadd.f32 %v3788, %v3659
      %v3799 = vadd.f32 %v3789, %v3661
      %v3800 = vadd.f32 %v3790, %v3663
      %v3801 = vadd.f32 %v3791, %v3665
      %v3802 = vadd.f32 %v3792, %v3667
      %v3803 = vadd.f32 %v3793, %v3669
      %v3804 = vadd.f32 %v3794, %v3671
      %v3805 = vadd.f32 %v3795, %v3673
      %v3806 = vadd.f32 %v3796, %v3675
      %v3807 = vadd.f32 %v3797, %v3677
      %v3808 = vadd.f32 %v3798, %v3689
      %v3809 = vadd.f32 %v3799, %v3691
      %v3810 = vadd.f32 %v3800, %v3693
      %v3811 = vadd.f32 %v3801, %v3695
      %v3812 = vadd.f32 %v3802, %v3697
      %v3813 = vadd.f32 %v3803, %v3699
      %v3814 = vadd.f32 %v3804, %v3701
      %v3815 = vadd.f32 %v3805, %v3703
      %v3816 = vadd.f32 %v3806, %v3705
      %v3817 = vadd.f32 %v3807, %v3707
      %v3818 = vadd.f32 %v3808, %v3719
      %v3819 = vadd.f32 %v3809, %v3721
      %v3820 = vadd.f32 %v3810, %v3723
      %v3821 = vadd.f32 %v3811, %v3725
      %v3822 = vadd.f32 %v3812, %v3727
      %v3823 = vadd.f32 %v3813, %v3729
      %v3824 = vadd.f32 %v3814, %v3731
      %v3825 = vadd.f32 %v3815, %v3733
      %v3826 = vadd.f32 %v3816, %v3735
      %v3827 = vadd.f32 %v3817, %v3737
      %v3828 = vadd.f32 %v3818, %v3749
      %v3829 = vadd.f32 %v3819, %v3751
      %v3830 = vadd.f32 %v3820, %v3753
      %v3831 = vadd.f32 %v3821, %v3755
      %v3832 = vadd.f32 %v3822, %v3757
      %v3833 = vadd.f32 %v3823, %v3759
      %v3834 = vadd.f32 %v3824, %v3761
      %v3835 = vadd.f32 %v3825, %v3763
      %v3836 = vadd.f32 %v3826, %v3765
      %v3837 = vadd.f32 %v3827, %v3767
      %v3838 = vrcp.pop %v3828
      %v3839 = vrcp.pop %v3829
      %v3840 = vrcp.pop %v3830
      %v3841 = vrcp.pop %v3831
      %v3842 = vrcp.pop %v3832
      %v3843 = vrcp.pop %v3833
      %v3844 = vrcp.pop %v3834
      %v3845 = vrcp.pop %v3835
      %v3846 = vrcp.pop %v3836
      %v3847 = vrcp.pop %v3837
      %v3848 = vmul.f32 %v3539, %v2782
      %v3849 = vmul.f32 %v3541, %v2784
      %v3850 = vmul.f32 %v3543, %v2786
      %v3851 = vmul.f32 %v3545, %v2788
      %v3852 = vmul.f32 %v3547, %v2792
      %v3853 = vmul.f32 %v3549, %v2794
      %v3854 = vmul.f32 %v3551, %v2796
      %v3855 = vmul.f32 %v3553, %v2798
      %v3856 = vmul.f32 %v3555, %v2802
      %v3857 = vmul.f32 %v3557, %v2804
      %v3858 = vadd.f32 %v3848, 0.0
      %v3859 = vadd.f32 %v3849, 0.0
      %v3860 = vadd.f32 %v3850, 0.0
      %v3861 = vadd.f32 %v3851, 0.0
      %v3862 = vadd.f32 %v3852, 0.0
      %v3863 = vadd.f32 %v3853, 0.0
      %v3864 = vadd.f32 %v3854, 0.0
      %v3865 = vadd.f32 %v3855, 0.0
      %v3866 = vadd.f32 %v3856, 0.0
      %v3867 = vadd.f32 %v3857, 0.0
      %3868 = vrot.lane.b32.xlu0 %v2782, 32
      %v3869 = vpop.permute.xlu0 %3868
      %3870 = vrot.lane.b32.xlu0 %v2786, 32
      %v3871 = vpop.permute.xlu0 %3870
      %3872 = vrot.lane.b32.xlu0 %v2792, 32
      %v3873 = vpop.permute.xlu0 %3872
      %3874 = vrot.lane.b32.xlu0 %v2796, 32
      %v3875 = vpop.permute.xlu0 %3874
      %3876 = vrot.lane.b32.xlu0 %v2802, 32
      %v3877 = vpop.permute.xlu0 %3876
      %3878 = vrot.lane.b32.xlu0 %v2784, 32
      %v3879 = vpop.permute.xlu0 %3878
      %3880 = vrot.lane.b32.xlu0 %v2788, 32
      %v3881 = vpop.permute.xlu0 %3880
      %3882 = vrot.lane.b32.xlu0 %v2794, 32
      %v3883 = vpop.permute.xlu0 %3882
      %3884 = vrot.lane.b32.xlu0 %v2798, 32
      %v3885 = vpop.permute.xlu0 %3884
      %3886 = vrot.lane.b32.xlu0 %v2804, 32
      %v3887 = vpop.permute.xlu0 %3886
      %v3888 = vsel %vm566, %v3869, %v3879
      %v3889 = vsel %vm566, %v3871, %v3881
      %v3890 = vsel %vm566, %v3873, %v3883
      %v3891 = vsel %vm566, %v3875, %v3885
      %v3892 = vsel %vm566, %v3877, %v3887
      %v3893 = vsel %vm566, %v3879, %v3869
      %v3894 = vsel %vm566, %v3881, %v3871
      %v3895 = vsel %vm566, %v3883, %v3873
      %v3896 = vsel %vm566, %v3885, %v3875
      %v3897 = vsel %vm566, %v3887, %v3877
      %v3898 = vmul.f32 %v3569, %v3893
      %v3899 = vmul.f32 %v3571, %v3888
      %v3900 = vmul.f32 %v3573, %v3894
      %v3901 = vmul.f32 %v3575, %v3889
      %v3902 = vmul.f32 %v3577, %v3895
      %v3903 = vmul.f32 %v3579, %v3890
      %v3904 = vmul.f32 %v3581, %v3896
      %v3905 = vmul.f32 %v3583, %v3891
      %v3906 = vmul.f32 %v3585, %v3897
      %v3907 = vmul.f32 %v3587, %v3892
      %v3908 = vadd.f32 %v3858, %v3898
      %v3909 = vadd.f32 %v3859, %v3899
      %v3910 = vadd.f32 %v3860, %v3900
      %v3911 = vadd.f32 %v3861, %v3901
      %v3912 = vadd.f32 %v3862, %v3902
      %v3913 = vadd.f32 %v3863, %v3903
      %v3914 = vadd.f32 %v3864, %v3904
      %v3915 = vadd.f32 %v3865, %v3905
      %v3916 = vadd.f32 %v3866, %v3906
      %v3917 = vadd.f32 %v3867, %v3907
      %3918 = vrot.lane.b32.xlu0 %v2782, 64
      %v3919 = vpop.permute.xlu0 %3918
      %3920 = vrot.lane.b32.xlu0 %v2786, 64
      %v3921 = vpop.permute.xlu0 %3920
      %3922 = vrot.lane.b32.xlu0 %v2792, 64
      %v3923 = vpop.permute.xlu0 %3922
      %3924 = vrot.lane.b32.xlu0 %v2796, 64
      %v3925 = vpop.permute.xlu0 %3924
      %3926 = vrot.lane.b32.xlu0 %v2802, 64
      %v3927 = vpop.permute.xlu0 %3926
      %3928 = vrot.lane.b32.xlu0 %v2784, 64
      %v3929 = vpop.permute.xlu0 %3928
      %3930 = vrot.lane.b32.xlu0 %v2788, 64
      %v3931 = vpop.permute.xlu0 %3930
      %3932 = vrot.lane.b32.xlu0 %v2794, 64
      %v3933 = vpop.permute.xlu0 %3932
      %3934 = vrot.lane.b32.xlu0 %v2798, 64
      %v3935 = vpop.permute.xlu0 %3934
      %3936 = vrot.lane.b32.xlu0 %v2804, 64
      %v3937 = vpop.permute.xlu0 %3936
      %v3938 = vsel %vm667, %v3919, %v3929
      %v3939 = vsel %vm667, %v3921, %v3931
      %v3940 = vsel %vm667, %v3923, %v3933
      %v3941 = vsel %vm667, %v3925, %v3935
      %v3942 = vsel %vm667, %v3927, %v3937
      %v3943 = vsel %vm667, %v3929, %v3919
      %v3944 = vsel %vm667, %v3931, %v3921
      %v3945 = vsel %vm667, %v3933, %v3923
      %v3946 = vsel %vm667, %v3935, %v3925
      %v3947 = vsel %vm667, %v3937, %v3927
      %v3948 = vmul.f32 %v3599, %v3943
      %v3949 = vmul.f32 %v3601, %v3938
      %v3950 = vmul.f32 %v3603, %v3944
      %v3951 = vmul.f32 %v3605, %v3939
      %v3952 = vmul.f32 %v3607, %v3945
      %v3953 = vmul.f32 %v3609, %v3940
      %v3954 = vmul.f32 %v3611, %v3946
      %v3955 = vmul.f32 %v3613, %v3941
      %v3956 = vmul.f32 %v3615, %v3947
      %v3957 = vmul.f32 %v3617, %v3942
      %v3958 = vadd.f32 %v3908, %v3948
      %v3959 = vadd.f32 %v3909, %v3949
      %v3960 = vadd.f32 %v3910, %v3950
      %v3961 = vadd.f32 %v3911, %v3951
      %v3962 = vadd.f32 %v3912, %v3952
      %v3963 = vadd.f32 %v3913, %v3953
      %v3964 = vadd.f32 %v3914, %v3954
      %v3965 = vadd.f32 %v3915, %v3955
      %v3966 = vadd.f32 %v3916, %v3956
      %v3967 = vadd.f32 %v3917, %v3957
      %3968 = vrot.lane.b32.xlu0 %v2782, 96
      %v3969 = vpop.permute.xlu0 %3968
      %3970 = vrot.lane.b32.xlu0 %v2786, 96
      %v3971 = vpop.permute.xlu0 %3970
      %3972 = vrot.lane.b32.xlu0 %v2792, 96
      %v3973 = vpop.permute.xlu0 %3972
      %3974 = vrot.lane.b32.xlu0 %v2796, 96
      %v3975 = vpop.permute.xlu0 %3974
      %3976 = vrot.lane.b32.xlu0 %v2802, 96
      %v3977 = vpop.permute.xlu0 %3976
      %3978 = vrot.lane.b32.xlu0 %v2784, 96
      %v3979 = vpop.permute.xlu0 %3978
      %3980 = vrot.lane.b32.xlu0 %v2788, 96
      %v3981 = vpop.permute.xlu0 %3980
      %3982 = vrot.lane.b32.xlu0 %v2794, 96
      %v3983 = vpop.permute.xlu0 %3982
      %3984 = vrot.lane.b32.xlu0 %v2798, 96
      %v3985 = vpop.permute.xlu0 %3984
      %3986 = vrot.lane.b32.xlu0 %v2804, 96
      %v3987 = vpop.permute.xlu0 %3986
      %v3988 = vsel %vm768, %v3969, %v3979
      %v3989 = vsel %vm768, %v3971, %v3981
      %v3990 = vsel %vm768, %v3973, %v3983
      %v3991 = vsel %vm768, %v3975, %v3985
      %v3992 = vsel %vm768, %v3977, %v3987
      %v3993 = vsel %vm768, %v3979, %v3969
      %v3994 = vsel %vm768, %v3981, %v3971
      %v3995 = vsel %vm768, %v3983, %v3973
      %v3996 = vsel %vm768, %v3985, %v3975
      %v3997 = vsel %vm768, %v3987, %v3977
      %v3998 = vmul.f32 %v3629, %v3993
      %v3999 = vmul.f32 %v3631, %v3988
      %v4000 = vmul.f32 %v3633, %v3994
      %v4001 = vmul.f32 %v3635, %v3989
      %v4002 = vmul.f32 %v3637, %v3995
      %v4003 = vmul.f32 %v3639, %v3990
      %v4004 = vmul.f32 %v3641, %v3996
      %v4005 = vmul.f32 %v3643, %v3991
      %v4006 = vmul.f32 %v3645, %v3997
      %v4007 = vmul.f32 %v3647, %v3992
      %v4008 = vadd.f32 %v3958, %v3998
      %v4009 = vadd.f32 %v3959, %v3999
      %v4010 = vadd.f32 %v3960, %v4000
      %v4011 = vadd.f32 %v3961, %v4001
      %v4012 = vadd.f32 %v3962, %v4002
      %v4013 = vadd.f32 %v3963, %v4003
      %v4014 = vadd.f32 %v3964, %v4004
      %v4015 = vadd.f32 %v3965, %v4005
      %v4016 = vadd.f32 %v3966, %v4006
      %v4017 = vadd.f32 %v3967, %v4007
      %v4018 = vmul.f32 %v3659, %v2784
      %v4019 = vmul.f32 %v3661, %v2782
      %v4020 = vmul.f32 %v3663, %v2788
      %v4021 = vmul.f32 %v3665, %v2786
      %v4022 = vmul.f32 %v3667, %v2794
      %v4023 = vmul.f32 %v3669, %v2792
      %v4024 = vmul.f32 %v3671, %v2798
      %v4025 = vmul.f32 %v3673, %v2796
      %v4026 = vmul.f32 %v3675, %v2804
      %v4027 = vmul.f32 %v3677, %v2802
      %v4028 = vadd.f32 %v4008, %v4018
      %v4029 = vadd.f32 %v4009, %v4019
      %v4030 = vadd.f32 %v4010, %v4020
      %v4031 = vadd.f32 %v4011, %v4021
      %v4032 = vadd.f32 %v4012, %v4022
      %v4033 = vadd.f32 %v4013, %v4023
      %v4034 = vadd.f32 %v4014, %v4024
      %v4035 = vadd.f32 %v4015, %v4025
      %v4036 = vadd.f32 %v4016, %v4026
      %v4037 = vadd.f32 %v4017, %v4027
      %v4038 = vmul.f32 %v3689, %v3888
      %v4039 = vmul.f32 %v3691, %v3893
      %v4040 = vmul.f32 %v3693, %v3889
      %v4041 = vmul.f32 %v3695, %v3894
      %v4042 = vmul.f32 %v3697, %v3890
      %v4043 = vmul.f32 %v3699, %v3895
      %v4044 = vmul.f32 %v3701, %v3891
      %v4045 = vmul.f32 %v3703, %v3896
      %v4046 = vmul.f32 %v3705, %v3892
      %v4047 = vmul.f32 %v3707, %v3897
      %v4048 = vadd.f32 %v4028, %v4038
      %v4049 = vadd.f32 %v4029, %v4039
      %v4050 = vadd.f32 %v4030, %v4040
      %v4051 = vadd.f32 %v4031, %v4041
      %v4052 = vadd.f32 %v4032, %v4042
      %v4053 = vadd.f32 %v4033, %v4043
      %v4054 = vadd.f32 %v4034, %v4044
      %v4055 = vadd.f32 %v4035, %v4045
      %v4056 = vadd.f32 %v4036, %v4046
      %v4057 = vadd.f32 %v4037, %v4047
      %v4058 = vmul.f32 %v3719, %v3938
      %v4059 = vmul.f32 %v3721, %v3943
      %v4060 = vmul.f32 %v3723, %v3939
      %v4061 = vmul.f32 %v3725, %v3944
      %v4062 = vmul.f32 %v3727, %v3940
      %v4063 = vmul.f32 %v3729, %v3945
      %v4064 = vmul.f32 %v3731, %v3941
      %v4065 = vmul.f32 %v3733, %v3946
      %v4066 = vmul.f32 %v3735, %v3942
      %v4067 = vmul.f32 %v3737, %v3947
      %v4068 = vadd.f32 %v4048, %v4058
      %v4069 = vadd.f32 %v4049, %v4059
      %v4070 = vadd.f32 %v4050, %v4060
      %v4071 = vadd.f32 %v4051, %v4061
      %v4072 = vadd.f32 %v4052, %v4062
      %v4073 = vadd.f32 %v4053, %v4063
      %v4074 = vadd.f32 %v4054, %v4064
      %v4075 = vadd.f32 %v4055, %v4065
      %v4076 = vadd.f32 %v4056, %v4066
      %v4077 = vadd.f32 %v4057, %v4067
      %v4078 = vmul.f32 %v3749, %v3988
      %v4079 = vmul.f32 %v3751, %v3993
      %v4080 = vmul.f32 %v3753, %v3989
      %v4081 = vmul.f32 %v3755, %v3994
      %v4082 = vmul.f32 %v3757, %v3990
      %v4083 = vmul.f32 %v3759, %v3995
      %v4084 = vmul.f32 %v3761, %v3991
      %v4085 = vmul.f32 %v3763, %v3996
      %v4086 = vmul.f32 %v3765, %v3992
      %v4087 = vmul.f32 %v3767, %v3997
      %v4088 = vadd.f32 %v4068, %v4078
      %v4089 = vadd.f32 %v4069, %v4079
      %v4090 = vadd.f32 %v4070, %v4080
      %v4091 = vadd.f32 %v4071, %v4081
      %v4092 = vadd.f32 %v4072, %v4082
      %v4093 = vadd.f32 %v4073, %v4083
      %v4094 = vadd.f32 %v4074, %v4084
      %v4095 = vadd.f32 %v4075, %v4085
      %v4096 = vadd.f32 %v4076, %v4086
      %v4097 = vadd.f32 %v4077, %v4087
      %v4098 = vmul.f32 %v4088, %v3838
      %v4099 = vmul.f32 %v4089, %v3839
      %v4100 = vmul.f32 %v4090, %v3840
      %v4101 = vmul.f32 %v4091, %v3841
      %v4102 = vmul.f32 %v4092, %v3842
      %v4103 = vmul.f32 %v4093, %v3843
      %v4104 = vmul.f32 %v4094, %v3844
      %v4105 = vmul.f32 %v4095, %v3845
      %v4106 = vmul.f32 %v4096, %v3846
      %v4107 = vmul.f32 %v4097, %v3847
      %v4108 = vld [vmem:[%s2522 + $0x40] sm:$0xf]
      %v4109 = vld [vmem:[%s2522 + $0x44] sm:$0xf]
      %v4110 = vld [vmem:[%s2522 + $0x48] sm:$0xf]
      %v4111 = vld [vmem:[%s2522 + $0x4c] sm:$0xf]
      %v4112 = vld [vmem:[%s2522 + $0x50] sm:$0xf]
      %v4113 = vpack.c.bf16 %v4100, %v4098
      %v4114 = vpack.c.bf16 %v4101, %v4099
      %v4115 = vpack.c.bf16 %v4104, %v4102
      %v4116 = vpack.c.bf16 %v4105, %v4103
      %v4117 = vpack.c.bf16 %v4106, %v4106
      %v4118 = vpack.c.bf16 %v4107, %v4107
      %v4119 = vld [vmem:[%s2538 + $0x78] sm:$0xff]
      %v4120 = vld [vmem:[%s2538 + $0x80] sm:$0xff]
      %v4121 = vld [vmem:[%s2538 + $0x88] sm:$0xff]
      %v4122 = vld [vmem:[%s2538 + $0x90] sm:$0xff]
      %v4123 = vld [vmem:[%s2538 + $0x98] sm:$0xff]
      %4125 = vset.pattern.permute.xlu0 0
      %4126 = vperm.xlu0 %4125, %v4119
      %v4127 = vpop.permute.xlu0 %4126
      %4130 = vset.pattern.permute.xlu0 0
      %4131 = vperm.xlu0 %4130, %v4120
      %v4132 = vpop.permute.xlu0 %4131
      %4135 = vset.pattern.permute.xlu0 0
      %4136 = vperm.xlu0 %4135, %v4121
      %v4137 = vpop.permute.xlu0 %4136
      %4140 = vset.pattern.permute.xlu0 0
      %4141 = vperm.xlu0 %4140, %v4122
      %v4142 = vpop.permute.xlu0 %4141
      %4145 = vset.pattern.permute.xlu0 0
      %4146 = vperm.xlu0 %4145, %v4123
      %v4147 = vpop.permute.xlu0 %4146
      %v4154 = vunpack.c.l.b16 %v4108
      %v4155 = vunpack.c.l.b16 %v4109
      %v4156 = vunpack.c.l.b16 %v4110
      %v4157 = vunpack.c.l.b16 %v4111
      %v4158 = vunpack.c.l.b16 %v4112
      %v4159 = vpack.c.b16 %v4155, %v4154
      %v4160 = vpack.c.b16 %v4157, %v4156
      %v4161 = vpack.c.b16 %v4158, %v4158
      %v4163 = vsel %vm331, %v4159, 0
      %v4166 = vsel %vm331, %v4160, 0
      %v4169 = vsel %vm331, %v4161, 0
      %v4172 = vsel %vm356, %v4117, 0
      %v4175 = vsel %vm356, %v4118, 0
      %4177 = vmatprep.subr.bf16.mxu0 %v4114
      %4178 = vmatpush1.bf16.msra.mxu0 %v4113
      %4179 = vmatprep.subr.bf16.mxu0 %v4116
      %4180 = vmatpush1.bf16.msra.mxu0 %v4115
      %4181 = vmatprep.subr.bf16.mxu0 %v4175
      %4182 = vmatpush1.bf16.msra.mxu0 %v4172
      %4183 = vmatprep.subr.bf16.mxu0 0
      %4184 = vmatpush1.bf16.msra.mxu0 0
      %4185 = vmatprep.subr.bf16.mxu0 0
      %4186 = vmatpush1.bf16.msra.mxu0 0
      %4187 = vmatprep.subr.bf16.mxu0 0
      %4188 = vmatpush1.bf16.msra.mxu0 0
      %4189 = vmatprep.subr.bf16.mxu0 0
      %4190 = vmatpush1.bf16.msra.mxu0 0
      %4191 = vmatprep.subr.bf16.mxu0 0
      %4192 = vmatpush1.bf16.msra.mxu0 0
      %4193 = vmatprep.subr.bf16.mxu0 0
      %4194 = vmatpush1.bf16.msra.mxu0 0
      %4195 = vmatprep.subr.bf16.mxu0 0
      %4196 = vmatpush1.bf16.msra.mxu0 0
      %4197 = vmatprep.subr.bf16.mxu0 0
      %4198 = vmatpush1.bf16.msra.mxu0 0
      %4199 = vmatprep.subr.bf16.mxu0 0
      %4200 = vmatpush1.bf16.msra.mxu0 0
      %4201 = vmatprep.subr.bf16.mxu0 0
      %4202 = vmatpush1.bf16.msra.mxu0 0
      %4203 = vmatprep.subr.bf16.mxu0 0
      %4204 = vmatpush1.bf16.msra.mxu0 0
      %4205 = vmatprep.subr.bf16.mxu0 0
      %4206 = vmatpush1.bf16.msra.mxu0 0
      %4207 = vmatprep.subr.bf16.mxu0 0
      %4208 = vmatpush1.bf16.msra.mxu0 0
      %4209 = vmatprep.mubr.bf16.mxu0 0
      %4210 = vmatmul.mubr.bf16.gmra.mrb[0].mxu0 %v4163
      %v4211 = vpop.f32.mrb[0].mxu0
      %v4212 = vadd.f32 %v4127, %v4211
      %v4213 = vpop.f32.mrb[0].mxu0
      %v4214 = vadd.f32 %v4127, %v4213
      %v4215 = vpop.f32.mrb[0].mxu0
      %v4216 = vadd.f32 %v4132, %v4215
      %v4217 = vpop.f32.mrb[0].mxu0
      %v4218 = vadd.f32 %v4132, %v4217
      %4219 = vmatprep.mubr.bf16.mxu0 0
      %4220 = vmatmul.mubr.bf16.gmra.mrb[0].mxu0 %v4166
      %v4221 = vpop.f32.mrb[0].mxu0
      %v4222 = vadd.f32 %v4137, %v4221
      %v4223 = vpop.f32.mrb[0].mxu0
      %v4224 = vadd.f32 %v4137, %v4223
      %v4225 = vpop.f32.mrb[0].mxu0
      %v4226 = vadd.f32 %v4142, %v4225
      %v4227 = vpop.f32.mrb[0].mxu0
      %v4228 = vadd.f32 %v4142, %v4227
      %4229 = vmatprep.mubr.bf16.mxu0 0
      %4230 = vmatmul.mubr.bf16.gmra.mrb[0].mxu0 %v4169
      %v4231 = vpop.f32.mrb[0].mxu0
      %v4232 = vadd.f32 %v4147, %v4231
      %v4233 = vpop.f32.mrb[0].mxu0
      %v4234 = vadd.f32 %v4147, %v4233
      %v4235 = vpop.f32.mrb[0].mxu0
      %v4236 = vpop.f32.mrb[0].mxu0
      %4237 = vdwg.mxu0
      %v4238 = vadd.f32 %v2506, %v4212
      %v4239 = vadd.f32 %v2507, %v4214
      %v4240 = vadd.f32 %v2508, %v4216
      %v4241 = vadd.f32 %v2509, %v4218
      %v4242 = vadd.f32 %v2510, %v4222
      %v4243 = vadd.f32 %v2511, %v4224
      %v4244 = vadd.f32 %v2512, %v4226
      %v4245 = vadd.f32 %v2513, %v4228
      %v4246 = vadd.f32 %v2514, %v4232
      %v4247 = vadd.f32 %v2515, %v4234
      %v4248 = vld [vmem:[%s2538 + $0xf0] sm:$0xff]
      %v4249 = vld [vmem:[%s2538 + $0xf8] sm:$0xff]
      %v4250 = vld [vmem:[%s2538 + $0x100] sm:$0xff]
      %v4251 = vld [vmem:[%s2538 + $0x108] sm:$0xff]
      %v4252 = vld [vmem:[%s2538 + $0x110] sm:$0xff]
      %v4253 = vld [vmem:[%s2538 + $0x118] sm:$0xff]
      %v4254 = vld [vmem:[%s2538 + $0x120] sm:$0xff]
      %v4255 = vld [vmem:[%s2538 + $0x128] sm:$0xff]
      %v4256 = vld [vmem:[%s2538 + $0x130] sm:$0xff]
      %v4257 = vld [vmem:[%s2538 + $0x138] sm:$0xff]
      %v4258 = vadd.f32 %v4238, %v4240
      %v4259 = vadd.f32 %v4258, %v4242
      %v4260 = vadd.f32 %v4259, %v4244
      %v4261 = vadd.f32 %v4260, %v4246
      %v4262 = vrot.slane %v4261, 4
      %v4263 = vadd.f32 %v4261, %v4262
      %v4264 = vrot.slane %v4263, 2
      %v4265 = vadd.f32 %v4263, %v4264
      %v4266 = vrot.slane %v4265, 1
      %v4267 = vadd.f32 %v4265, %v4266
      %v4268 = vadd.f32 %v4239, %v4241
      %v4269 = vadd.f32 %v4268, %v4243
      %v4270 = vadd.f32 %v4269, %v4245
      %v4271 = vadd.f32 %v4270, %v4247
      %v4272 = vrot.slane %v4271, 4
      %v4273 = vadd.f32 %v4271, %v4272
      %v4274 = vrot.slane %v4273, 2
      %v4275 = vadd.f32 %v4273, %v4274
      %v4276 = vrot.slane %v4275, 1
      %v4277 = vadd.f32 %v4275, %v4276
      %v4278 = vmul.f32 %v4267, %v1949
      %v4279 = vmul.f32 %v4277, %v1949
      %v4280 = vsub.f32 %v4238, %v4278
      %v4281 = vsub.f32 %v4239, %v4279
      %v4282 = vsub.f32 %v4240, %v4278
      %v4283 = vsub.f32 %v4241, %v4279
      %v4284 = vsub.f32 %v4242, %v4278
      %v4285 = vsub.f32 %v4243, %v4279
      %v4286 = vsub.f32 %v4244, %v4278
      %v4287 = vsub.f32 %v4245, %v4279
      %v4288 = vsub.f32 %v4246, %v4278
      %v4289 = vsub.f32 %v4247, %v4279
      %v4290 = vmul.f32 %v4280, %v4280
      %v4291 = vmul.f32 %v4281, %v4281
      %v4292 = vmul.f32 %v4282, %v4282
      %v4293 = vmul.f32 %v4283, %v4283
      %v4294 = vmul.f32 %v4284, %v4284
      %v4295 = vmul.f32 %v4285, %v4285
      %v4296 = vmul.f32 %v4286, %v4286
      %v4297 = vmul.f32 %v4287, %v4287
      %v4298 = vmul.f32 %v4288, %v4288
      %v4299 = vmul.f32 %v4289, %v4289
      %v4300 = vadd.f32 %v4290, %v4292
      %v4301 = vadd.f32 %v4300, %v4294
      %v4302 = vadd.f32 %v4301, %v4296
      %v4303 = vadd.f32 %v4302, %v4298
      %v4304 = vrot.slane %v4303, 4
      %v4305 = vadd.f32 %v4303, %v4304
      %v4306 = vrot.slane %v4305, 2
      %v4307 = vadd.f32 %v4305, %v4306
      %v4308 = vrot.slane %v4307, 1
      %v4309 = vadd.f32 %v4307, %v4308
      %v4310 = vadd.f32 %v4291, %v4293
      %v4311 = vadd.f32 %v4310, %v4295
      %v4312 = vadd.f32 %v4311, %v4297
      %v4313 = vadd.f32 %v4312, %v4299
      %v4314 = vrot.slane %v4313, 4
      %v4315 = vadd.f32 %v4313, %v4314
      %v4316 = vrot.slane %v4315, 2
      %v4317 = vadd.f32 %v4315, %v4316
      %v4318 = vrot.slane %v4317, 1
      %v4319 = vadd.f32 %v4317, %v4318
      %v4320 = vmul.f32 %v4309, %v1949
      %v4321 = vmul.f32 %v4319, %v1949
      %v4322 = vadd.f32 %v4320, 1e-05
      %v4323 = vadd.f32 %v4321, 1e-05
      %v4324 = vrsqrt.pop %v4322
      %v4325 = vrsqrt.pop %v4323
      %v4326 = vmul.f32 %v4280, %v4324
      %v4327 = vmul.f32 %v4281, %v4325
      %v4328 = vmul.f32 %v4282, %v4324
      %v4329 = vmul.f32 %v4283, %v4325
      %v4330 = vmul.f32 %v4284, %v4324
      %v4331 = vmul.f32 %v4285, %v4325
      %v4332 = vmul.f32 %v4286, %v4324
      %v4333 = vmul.f32 %v4287, %v4325
      %v4334 = vmul.f32 %v4288, %v4324
      %v4335 = vmul.f32 %v4289, %v4325
      %4337 = vset.pattern.permute.xlu0 0
      %4338 = vperm.xlu0 %4337, %v4248
      %v4339 = vpop.permute.xlu0 %4338
      %4342 = vset.pattern.permute.xlu0 0
      %4343 = vperm.xlu0 %4342, %v4249
      %v4344 = vpop.permute.xlu0 %4343
      %4347 = vset.pattern.permute.xlu0 0
      %4348 = vperm.xlu0 %4347, %v4250
      %v4349 = vpop.permute.xlu0 %4348
      %4352 = vset.pattern.permute.xlu0 0
      %4353 = vperm.xlu0 %4352, %v4251
      %v4354 = vpop.permute.xlu0 %4353
      %4357 = vset.pattern.permute.xlu0 0
      %4358 = vperm.xlu0 %4357, %v4252
      %v4359 = vpop.permute.xlu0 %4358
      %v4361 = vmul.f32 %v4326, %v4339
      %v4362 = vmul.f32 %v4327, %v4339
      %v4363 = vmul.f32 %v4328, %v4344
      %v4364 = vmul.f32 %v4329, %v4344
      %v4365 = vmul.f32 %v4330, %v4349
      %v4366 = vmul.f32 %v4331, %v4349
      %v4367 = vmul.f32 %v4332, %v4354
      %v4368 = vmul.f32 %v4333, %v4354
      %v4369 = vmul.f32 %v4334, %v4359
      %v4370 = vmul.f32 %v4335, %v4359
      %4372 = vset.pattern.permute.xlu0 0
      %4373 = vperm.xlu0 %4372, %v4253
      %v4374 = vpop.permute.xlu0 %4373
      %4377 = vset.pattern.permute.xlu0 0
      %4378 = vperm.xlu0 %4377, %v4254
      %v4379 = vpop.permute.xlu0 %4378
      %4382 = vset.pattern.permute.xlu0 0
      %4383 = vperm.xlu0 %4382, %v4255
      %v4384 = vpop.permute.xlu0 %4383
      %4387 = vset.pattern.permute.xlu0 0
      %4388 = vperm.xlu0 %4387, %v4256
      %v4389 = vpop.permute.xlu0 %4388
      %4392 = vset.pattern.permute.xlu0 0
      %4393 = vperm.xlu0 %4392, %v4257
      %v4394 = vpop.permute.xlu0 %4393
      %v4396 = vadd.f32 %v4361, %v4374
      %v4397 = vadd.f32 %v4362, %v4374
      %v4398 = vadd.f32 %v4363, %v4379
      %v4399 = vadd.f32 %v4364, %v4379
      %v4400 = vadd.f32 %v4365, %v4384
      %v4401 = vadd.f32 %v4366, %v4384
      %v4402 = vadd.f32 %v4367, %v4389
      %v4403 = vadd.f32 %v4368, %v4389
      %v4404 = vadd.f32 %v4369, %v4394
      %v4405 = vadd.f32 %v4370, %v4394
      %v4406 = vld [vmem:[%s2522 + $0x58] sm:$0xf]
      %v4407 = vld [vmem:[%s2522 + $0x5c] sm:$0xf]
      %v4408 = vld [vmem:[%s2522 + $0x60] sm:$0xf]
      %v4409 = vld [vmem:[%s2522 + $0x64] sm:$0xf]
      %v4410 = vld [vmem:[%s2522 + $0x68] sm:$0xf]
      %v4411 = vpack.c.bf16 %v4398, %v4396
      %v4412 = vpack.c.bf16 %v4399, %v4397
      %v4413 = vpack.c.bf16 %v4402, %v4400
      %v4414 = vpack.c.bf16 %v4403, %v4401
      %v4415 = vpack.c.bf16 %v4404, %v4404
      %v4416 = vpack.c.bf16 %v4405, %v4405
      %v4417 = vld [vmem:[%s2538 + $0xa0] sm:$0xff]
      %v4418 = vld [vmem:[%s2538 + $0xa8] sm:$0xff]
      %v4419 = vld [vmem:[%s2538 + $0xb0] sm:$0xff]
      %v4420 = vld [vmem:[%s2538 + $0xb8] sm:$0xff]
      %v4421 = vld [vmem:[%s2538 + $0xc0] sm:$0xff]
      %4423 = vset.pattern.permute.xlu0 0
      %4424 = vperm.xlu0 %4423, %v4417
      %v4425 = vpop.permute.xlu0 %4424
      %4428 = vset.pattern.permute.xlu0 0
      %4429 = vperm.xlu0 %4428, %v4418
      %v4430 = vpop.permute.xlu0 %4429
      %4433 = vset.pattern.permute.xlu0 0
      %4434 = vperm.xlu0 %4433, %v4419
      %v4435 = vpop.permute.xlu0 %4434
      %4438 = vset.pattern.permute.xlu0 0
      %4439 = vperm.xlu0 %4438, %v4420
      %v4440 = vpop.permute.xlu0 %4439
      %4443 = vset.pattern.permute.xlu0 0
      %4444 = vperm.xlu0 %4443, %v4421
      %v4445 = vpop.permute.xlu0 %4444
      %v4452 = vunpack.c.l.b16 %v4406
      %v4453 = vunpack.c.l.b16 %v4407
      %v4454 = vunpack.c.l.b16 %v4408
      %v4455 = vunpack.c.l.b16 %v4409
      %v4456 = vunpack.c.l.b16 %v4410
      %v4457 = vpack.c.b16 %v4453, %v4452
      %v4458 = vpack.c.b16 %v4455, %v4454
      %v4459 = vpack.c.b16 %v4456, %v4456
      %v4461 = vsel %vm331, %v4457, 0
      %v4464 = vsel %vm331, %v4458, 0
      %v4467 = vsel %vm331, %v4459, 0
      %v4470 = vsel %vm356, %v4415, 0
      %v4473 = vsel %vm356, %v4416, 0
      %4475 = vmatprep.subr.bf16.mxu0 %v4412
      %4476 = vmatpush1.bf16.msra.mxu0 %v4411
      %4477 = vmatprep.subr.bf16.mxu0 %v4414
      %4478 = vmatpush1.bf16.msra.mxu0 %v4413
      %4479 = vmatprep.subr.bf16.mxu0 %v4473
      %4480 = vmatpush1.bf16.msra.mxu0 %v4470
      %4481 = vmatprep.subr.bf16.mxu0 0
      %4482 = vmatpush1.bf16.msra.mxu0 0
      %4483 = vmatprep.subr.bf16.mxu0 0
      %4484 = vmatpush1.bf16.msra.mxu0 0
      %4485 = vmatprep.subr.bf16.mxu0 0
      %4486 = vmatpush1.bf16.msra.mxu0 0
      %4487 = vmatprep.subr.bf16.mxu0 0
      %4488 = vmatpush1.bf16.msra.mxu0 0
      %4489 = vmatprep.subr.bf16.mxu0 0
      %4490 = vmatpush1.bf16.msra.mxu0 0
      %4491 = vmatprep.subr.bf16.mxu0 0
      %4492 = vmatpush1.bf16.msra.mxu0 0
      %4493 = vmatprep.subr.bf16.mxu0 0
      %4494 = vmatpush1.bf16.msra.mxu0 0
      %4495 = vmatprep.subr.bf16.mxu0 0
      %4496 = vmatpush1.bf16.msra.mxu0 0
      %4497 = vmatprep.subr.bf16.mxu0 0
      %4498 = vmatpush1.bf16.msra.mxu0 0
      %4499 = vmatprep.subr.bf16.mxu0 0
      %4500 = vmatpush1.bf16.msra.mxu0 0
      %4501 = vmatprep.subr.bf16.mxu0 0
      %4502 = vmatpush1.bf16.msra.mxu0 0
      %4503 = vmatprep.subr.bf16.mxu0 0
      %4504 = vmatpush1.bf16.msra.mxu0 0
      %4505 = vmatprep.subr.bf16.mxu0 0
      %4506 = vmatpush1.bf16.msra.mxu0 0
      %4507 = vmatprep.mubr.bf16.mxu0 0
      %4508 = vmatmul.mubr.bf16.gmra.mrb[0].mxu0 %v4461
      %v4509 = vpop.f32.mrb[0].mxu0
      %v4510 = vadd.f32 %v4425, %v4509
      %v4511 = vpop.f32.mrb[0].mxu0
      %v4512 = vadd.f32 %v4425, %v4511
      %v4513 = vpop.f32.mrb[0].mxu0
      %v4514 = vadd.f32 %v4430, %v4513
      %v4515 = vpop.f32.mrb[0].mxu0
      %v4516 = vadd.f32 %v4430, %v4515
      %4517 = vmatprep.mubr.bf16.mxu0 0
      %4518 = vmatmul.mubr.bf16.gmra.mrb[0].mxu0 %v4464
      %v4519 = vpop.f32.mrb[0].mxu0
      %v4520 = vadd.f32 %v4435, %v4519
      %v4521 = vpop.f32.mrb[0].mxu0
      %v4522 = vadd.f32 %v4435, %v4521
      %v4523 = vpop.f32.mrb[0].mxu0
      %v4524 = vadd.f32 %v4440, %v4523
      %v4525 = vpop.f32.mrb[0].mxu0
      %v4526 = vadd.f32 %v4440, %v4525
      %4527 = vmatprep.mubr.bf16.mxu0 0
      %4528 = vmatmul.mubr.bf16.gmra.mrb[0].mxu0 %v4467
      %v4529 = vpop.f32.mrb[0].mxu0
      %v4530 = vadd.f32 %v4445, %v4529
      %v4531 = vpop.f32.mrb[0].mxu0
      %v4532 = vadd.f32 %v4445, %v4531
      %v4533 = vpop.f32.mrb[0].mxu0
      %v4534 = vpop.f32.mrb[0].mxu0
      %4535 = vdwg.mxu0
      %v4536 = vmax.f32 %v4510, 0.0
      %v4537 = vmax.f32 %v4512, 0.0
      %v4538 = vmax.f32 %v4514, 0.0
      %v4539 = vmax.f32 %v4516, 0.0
      %v4540 = vmax.f32 %v4520, 0.0
      %v4541 = vmax.f32 %v4522, 0.0
      %v4542 = vmax.f32 %v4524, 0.0
      %v4543 = vmax.f32 %v4526, 0.0
      %v4544 = vmax.f32 %v4530, 0.0
      %v4545 = vmax.f32 %v4532, 0.0
      %v4546 = vld [vmem:[%s2522 + $0x70] sm:$0xf]
      %v4547 = vld [vmem:[%s2522 + $0x74] sm:$0xf]
      %v4548 = vld [vmem:[%s2522 + $0x78] sm:$0xf]
      %v4549 = vld [vmem:[%s2522 + $0x7c] sm:$0xf]
      %v4550 = vld [vmem:[%s2522 + $0x80] sm:$0xf]
      %v4551 = vpack.c.bf16 %v4538, %v4536
      %v4552 = vpack.c.bf16 %v4539, %v4537
      %v4553 = vpack.c.bf16 %v4542, %v4540
      %v4554 = vpack.c.bf16 %v4543, %v4541
      %v4555 = vpack.c.bf16 %v4544, %v4544
      %v4556 = vpack.c.bf16 %v4545, %v4545
      %v4557 = vld [vmem:[%s2538 + $0xc8] sm:$0xff]
      %v4558 = vld [vmem:[%s2538 + $0xd0] sm:$0xff]
      %v4559 = vld [vmem:[%s2538 + $0xd8] sm:$0xff]
      %v4560 = vld [vmem:[%s2538 + $0xe0] sm:$0xff]
      %v4561 = vld [vmem:[%s2538 + $0xe8] sm:$0xff]
      %4563 = vset.pattern.permute.xlu0 0
      %4564 = vperm.xlu0 %4563, %v4557
      %v4565 = vpop.permute.xlu0 %4564
      %4568 = vset.pattern.permute.xlu0 0
      %4569 = vperm.xlu0 %4568, %v4558
      %v4570 = vpop.permute.xlu0 %4569
      %4573 = vset.pattern.permute.xlu0 0
      %4574 = vperm.xlu0 %4573, %v4559
      %v4575 = vpop.permute.xlu0 %4574
      %4578 = vset.pattern.permute.xlu0 0
      %4579 = vperm.xlu0 %4578, %v4560
      %v4580 = vpop.permute.xlu0 %4579
      %4583 = vset.pattern.permute.xlu0 0
      %4584 = vperm.xlu0 %4583, %v4561
      %v4585 = vpop.permute.xlu0 %4584
      %v4592 = vunpack.c.l.b16 %v4546
      %v4593 = vunpack.c.l.b16 %v4547
      %v4594 = vunpack.c.l.b16 %v4548
      %v4595 = vunpack.c.l.b16 %v4549
      %v4596 = vunpack.c.l.b16 %v4550
      %v4597 = vpack.c.b16 %v4593, %v4592
      %v4598 = vpack.c.b16 %v4595, %v4594
      %v4599 = vpack.c.b16 %v4596, %v4596
      %v4601 = vsel %vm331, %v4597, 0
      %v4604 = vsel %vm331, %v4598, 0
      %v4607 = vsel %vm331, %v4599, 0
      %v4610 = vsel %vm356, %v4555, 0
      %v4613 = vsel %vm356, %v4556, 0
      %4615 = vmatprep.subr.bf16.mxu0 %v4552
      %4616 = vmatpush1.bf16.msra.mxu0 %v4551
      %4617 = vmatprep.subr.bf16.mxu0 %v4554
      %4618 = vmatpush1.bf16.msra.mxu0 %v4553
      %4619 = vmatprep.subr.bf16.mxu0 %v4613
      %4620 = vmatpush1.bf16.msra.mxu0 %v4610
      %4621 = vmatprep.subr.bf16.mxu0 0
      %4622 = vmatpush1.bf16.msra.mxu0 0
      %4623 = vmatprep.subr.bf16.mxu0 0
      %4624 = vmatpush1.bf16.msra.mxu0 0
      %4625 = vmatprep.subr.bf16.mxu0 0
      %4626 = vmatpush1.bf16.msra.mxu0 0
      %4627 = vmatprep.subr.bf16.mxu0 0
      %4628 = vmatpush1.bf16.msra.mxu0 0
      %4629 = vmatprep.subr.bf16.mxu0 0
      %4630 = vmatpush1.bf16.msra.mxu0 0
      %4631 = vmatprep.subr.bf16.mxu0 0
      %4632 = vmatpush1.bf16.msra.mxu0 0
      %4633 = vmatprep.subr.bf16.mxu0 0
      %4634 = vmatpush1.bf16.msra.mxu0 0
      %4635 = vmatprep.subr.bf16.mxu0 0
      %4636 = vmatpush1.bf16.msra.mxu0 0
      %4637 = vmatprep.subr.bf16.mxu0 0
      %4638 = vmatpush1.bf16.msra.mxu0 0
      %4639 = vmatprep.subr.bf16.mxu0 0
      %4640 = vmatpush1.bf16.msra.mxu0 0
      %4641 = vmatprep.subr.bf16.mxu0 0
      %4642 = vmatpush1.bf16.msra.mxu0 0
      %4643 = vmatprep.subr.bf16.mxu0 0
      %4644 = vmatpush1.bf16.msra.mxu0 0
      %4645 = vmatprep.subr.bf16.mxu0 0
      %4646 = vmatpush1.bf16.msra.mxu0 0
      %4647 = vmatprep.mubr.bf16.mxu0 0
      %4648 = vmatmul.mubr.bf16.gmra.mrb[0].mxu0 %v4601
      %v4649 = vpop.f32.mrb[0].mxu0
      %v4650 = vadd.f32 %v4565, %v4649
      %v4651 = vpop.f32.mrb[0].mxu0
      %v4652 = vadd.f32 %v4565, %v4651
      %v4653 = vpop.f32.mrb[0].mxu0
      %v4654 = vadd.f32 %v4570, %v4653
      %v4655 = vpop.f32.mrb[0].mxu0
      %v4656 = vadd.f32 %v4570, %v4655
      %4657 = vmatprep.mubr.bf16.mxu0 0
      %4658 = vmatmul.mubr.bf16.gmra.mrb[0].mxu0 %v4604
      %v4659 = vpop.f32.mrb[0].mxu0
      %v4660 = vadd.f32 %v4575, %v4659
      %v4661 = vpop.f32.mrb[0].mxu0
      %v4662 = vadd.f32 %v4575, %v4661
      %v4663 = vpop.f32.mrb[0].mxu0
      %v4664 = vadd.f32 %v4580, %v4663
      %v4665 = vpop.f32.mrb[0].mxu0
      %v4666 = vadd.f32 %v4580, %v4665
      %4667 = vmatprep.mubr.bf16.mxu0 0
      %4668 = vmatmul.mubr.bf16.gmra.mrb[0].mxu0 %v4607
      %v4669 = vpop.f32.mrb[0].mxu0
      %v4670 = vadd.f32 %v4585, %v4669
      %v4671 = vpop.f32.mrb[0].mxu0
      %v4672 = vadd.f32 %v4585, %v4671
      %v4673 = vpop.f32.mrb[0].mxu0
      %v4674 = vpop.f32.mrb[0].mxu0
      %4675 = vdwg.mxu0
      %v4676 = vadd.f32 %v4396, %v4650
      %v4677 = vadd.f32 %v4397, %v4652
      %v4678 = vadd.f32 %v4398, %v4654
      %v4679 = vadd.f32 %v4399, %v4656
      %v4680 = vadd.f32 %v4400, %v4660
      %v4681 = vadd.f32 %v4401, %v4662
      %v4682 = vadd.f32 %v4402, %v4664
      %v4683 = vadd.f32 %v4403, %v4666
      %v4684 = vadd.f32 %v4404, %v4670
      %v4685 = vadd.f32 %v4405, %v4672
      %v4686 = vld [vmem:[%s2538 + $0x140] sm:$0xff]
      %v4687 = vld [vmem:[%s2538 + $0x148] sm:$0xff]
      %v4688 = vld [vmem:[%s2538 + $0x150] sm:$0xff]
      %v4689 = vld [vmem:[%s2538 + $0x158] sm:$0xff]
      %v4690 = vld [vmem:[%s2538 + $0x160] sm:$0xff]
      %v4691 = vld [vmem:[%s2538 + $0x168] sm:$0xff]
      %v4692 = vld [vmem:[%s2538 + $0x170] sm:$0xff]
      %v4693 = vld [vmem:[%s2538 + $0x178] sm:$0xff]
      %v4694 = vld [vmem:[%s2538 + $0x180] sm:$0xff]
      %v4695 = vld [vmem:[%s2538 + $0x188] sm:$0xff]
      %v4696 = vadd.f32 %v4676, %v4678
      %v4697 = vadd.f32 %v4696, %v4680
      %v4698 = vadd.f32 %v4697, %v4682
      %v4699 = vadd.f32 %v4698, %v4684
      %v4700 = vrot.slane %v4699, 4
      %v4701 = vadd.f32 %v4699, %v4700
      %v4702 = vrot.slane %v4701, 2
      %v4703 = vadd.f32 %v4701, %v4702
      %v4704 = vrot.slane %v4703, 1
      %v4705 = vadd.f32 %v4703, %v4704
      %v4706 = vadd.f32 %v4677, %v4679
      %v4707 = vadd.f32 %v4706, %v4681
      %v4708 = vadd.f32 %v4707, %v4683
      %v4709 = vadd.f32 %v4708, %v4685
      %v4710 = vrot.slane %v4709, 4
      %v4711 = vadd.f32 %v4709, %v4710
      %v4712 = vrot.slane %v4711, 2
      %v4713 = vadd.f32 %v4711, %v4712
      %v4714 = vrot.slane %v4713, 1
      %v4715 = vadd.f32 %v4713, %v4714
      %v4716 = vmul.f32 %v4705, %v1949
      %v4717 = vmul.f32 %v4715, %v1949
      %v4718 = vsub.f32 %v4676, %v4716
      %v4719 = vsub.f32 %v4677, %v4717
      %v4720 = vsub.f32 %v4678, %v4716
      %v4721 = vsub.f32 %v4679, %v4717
      %v4722 = vsub.f32 %v4680, %v4716
      %v4723 = vsub.f32 %v4681, %v4717
      %v4724 = vsub.f32 %v4682, %v4716
      %v4725 = vsub.f32 %v4683, %v4717
      %v4726 = vsub.f32 %v4684, %v4716
      %v4727 = vsub.f32 %v4685, %v4717
      %v4728 = vmul.f32 %v4718, %v4718
      %v4729 = vmul.f32 %v4719, %v4719
      %v4730 = vmul.f32 %v4720, %v4720
      %v4731 = vmul.f32 %v4721, %v4721
      %v4732 = vmul.f32 %v4722, %v4722
      %v4733 = vmul.f32 %v4723, %v4723
      %v4734 = vmul.f32 %v4724, %v4724
      %v4735 = vmul.f32 %v4725, %v4725
      %v4736 = vmul.f32 %v4726, %v4726
      %v4737 = vmul.f32 %v4727, %v4727
      %v4738 = vadd.f32 %v4728, %v4730
      %v4739 = vadd.f32 %v4738, %v4732
      %v4740 = vadd.f32 %v4739, %v4734
      %v4741 = vadd.f32 %v4740, %v4736
      %v4742 = vrot.slane %v4741, 4
      %v4743 = vadd.f32 %v4741, %v4742
      %v4744 = vrot.slane %v4743, 2
      %v4745 = vadd.f32 %v4743, %v4744
      %v4746 = vrot.slane %v4745, 1
      %v4747 = vadd.f32 %v4745, %v4746
      %v4748 = vadd.f32 %v4729, %v4731
      %v4749 = vadd.f32 %v4748, %v4733
      %v4750 = vadd.f32 %v4749, %v4735
      %v4751 = vadd.f32 %v4750, %v4737
      %v4752 = vrot.slane %v4751, 4
      %v4753 = vadd.f32 %v4751, %v4752
      %v4754 = vrot.slane %v4753, 2
      %v4755 = vadd.f32 %v4753, %v4754
      %v4756 = vrot.slane %v4755, 1
      %v4757 = vadd.f32 %v4755, %v4756
      %v4758 = vmul.f32 %v4747, %v1949
      %v4759 = vmul.f32 %v4757, %v1949
      %v4760 = vadd.f32 %v4758, 1e-05
      %v4761 = vadd.f32 %v4759, 1e-05
      %v4762 = vrsqrt.pop %v4760
      %v4763 = vrsqrt.pop %v4761
      %v4764 = vmul.f32 %v4718, %v4762
      %v4765 = vmul.f32 %v4719, %v4763
      %v4766 = vmul.f32 %v4720, %v4762
      %v4767 = vmul.f32 %v4721, %v4763
      %v4768 = vmul.f32 %v4722, %v4762
      %v4769 = vmul.f32 %v4723, %v4763
      %v4770 = vmul.f32 %v4724, %v4762
      %v4771 = vmul.f32 %v4725, %v4763
      %v4772 = vmul.f32 %v4726, %v4762
      %v4773 = vmul.f32 %v4727, %v4763
      %4775 = vset.pattern.permute.xlu0 0
      %4776 = vperm.xlu0 %4775, %v4686
      %v4777 = vpop.permute.xlu0 %4776
      %4780 = vset.pattern.permute.xlu0 0
      %4781 = vperm.xlu0 %4780, %v4687
      %v4782 = vpop.permute.xlu0 %4781
      %4785 = vset.pattern.permute.xlu0 0
      %4786 = vperm.xlu0 %4785, %v4688
      %v4787 = vpop.permute.xlu0 %4786
      %4790 = vset.pattern.permute.xlu0 0
      %4791 = vperm.xlu0 %4790, %v4689
      %v4792 = vpop.permute.xlu0 %4791
      %4795 = vset.pattern.permute.xlu0 0
      %4796 = vperm.xlu0 %4795, %v4690
      %v4797 = vpop.permute.xlu0 %4796
      %v4799 = vmul.f32 %v4764, %v4777
      %v4800 = vmul.f32 %v4765, %v4777
      %v4801 = vmul.f32 %v4766, %v4782
      %v4802 = vmul.f32 %v4767, %v4782
      %v4803 = vmul.f32 %v4768, %v4787
      %v4804 = vmul.f32 %v4769, %v4787
      %v4805 = vmul.f32 %v4770, %v4792
      %v4806 = vmul.f32 %v4771, %v4792
      %v4807 = vmul.f32 %v4772, %v4797
      %v4808 = vmul.f32 %v4773, %v4797
      %4810 = vset.pattern.permute.xlu0 0
      %4811 = vperm.xlu0 %4810, %v4691
      %v4812 = vpop.permute.xlu0 %4811
      %4815 = vset.pattern.permute.xlu0 0
      %4816 = vperm.xlu0 %4815, %v4692
      %v4817 = vpop.permute.xlu0 %4816
      %4820 = vset.pattern.permute.xlu0 0
      %4821 = vperm.xlu0 %4820, %v4693
      %v4822 = vpop.permute.xlu0 %4821
      %4825 = vset.pattern.permute.xlu0 0
      %4826 = vperm.xlu0 %4825, %v4694
      %v4827 = vpop.permute.xlu0 %4826
      %4830 = vset.pattern.permute.xlu0 0
      %4831 = vperm.xlu0 %4830, %v4695
      %v4832 = vpop.permute.xlu0 %4831
      %v4834 = vadd.f32 %v4799, %v4812
      %v4835 = vadd.f32 %v4800, %v4812
      %v4836 = vadd.f32 %v4801, %v4817
      %v4837 = vadd.f32 %v4802, %v4817
      %v4838 = vadd.f32 %v4803, %v4822
      %v4839 = vadd.f32 %v4804, %v4822
      %v4840 = vadd.f32 %v4805, %v4827
      %v4841 = vadd.f32 %v4806, %v4827
      %v4842 = vadd.f32 %v4807, %v4832
      %v4843 = vadd.f32 %v4808, %v4832
      %4844 = vrot.lane.b32.xlu0 %v4834, 32
      %v4845 = vpop.permute.xlu0 %4844
      %4846 = vrot.lane.b32.xlu0 %v4836, 32
      %v4847 = vpop.permute.xlu0 %4846
      %4848 = vrot.lane.b32.xlu0 %v4838, 32
      %v4849 = vpop.permute.xlu0 %4848
      %4850 = vrot.lane.b32.xlu0 %v4840, 32
      %v4851 = vpop.permute.xlu0 %4850
      %4852 = vrot.lane.b32.xlu0 %v4842, 32
      %v4853 = vpop.permute.xlu0 %4852
      %4854 = vrot.lane.b32.xlu0 %v4835, 32
      %v4855 = vpop.permute.xlu0 %4854
      %4856 = vrot.lane.b32.xlu0 %v4837, 32
      %v4857 = vpop.permute.xlu0 %4856
      %4858 = vrot.lane.b32.xlu0 %v4839, 32
      %v4859 = vpop.permute.xlu0 %4858
      %4860 = vrot.lane.b32.xlu0 %v4841, 32
      %v4861 = vpop.permute.xlu0 %4860
      %4862 = vrot.lane.b32.xlu0 %v4843, 32
      %v4863 = vpop.permute.xlu0 %4862
      %v4864 = vsel %vm566, %v4855, %v4845
      %v4865 = vsel %vm566, %v4857, %v4847
      %v4866 = vsel %vm566, %v4859, %v4849
      %v4867 = vsel %vm566, %v4861, %v4851
      %v4868 = vsel %vm566, %v4863, %v4853
      %v4869 = vadd.f32 %v4834, %v4864
      %v4870 = vadd.f32 %v4836, %v4865
      %v4871 = vadd.f32 %v4838, %v4866
      %v4872 = vadd.f32 %v4840, %v4867
      %v4873 = vadd.f32 %v4842, %v4868
      %4874 = vrot.lane.b32.xlu0 %v4834, 64
      %v4875 = vpop.permute.xlu0 %4874
      %4876 = vrot.lane.b32.xlu0 %v4836, 64
      %v4877 = vpop.permute.xlu0 %4876
      %4878 = vrot.lane.b32.xlu0 %v4838, 64
      %v4879 = vpop.permute.xlu0 %4878
      %4880 = vrot.lane.b32.xlu0 %v4840, 64
      %v4881 = vpop.permute.xlu0 %4880
      %4882 = vrot.lane.b32.xlu0 %v4842, 64
      %v4883 = vpop.permute.xlu0 %4882
      %4884 = vrot.lane.b32.xlu0 %v4835, 64
      %v4885 = vpop.permute.xlu0 %4884
      %4886 = vrot.lane.b32.xlu0 %v4837, 64
      %v4887 = vpop.permute.xlu0 %4886
      %4888 = vrot.lane.b32.xlu0 %v4839, 64
      %v4889 = vpop.permute.xlu0 %4888
      %4890 = vrot.lane.b32.xlu0 %v4841, 64
      %v4891 = vpop.permute.xlu0 %4890
      %4892 = vrot.lane.b32.xlu0 %v4843, 64
      %v4893 = vpop.permute.xlu0 %4892
      %v4894 = vsel %vm667, %v4885, %v4875
      %v4895 = vsel %vm667, %v4887, %v4877
      %v4896 = vsel %vm667, %v4889, %v4879
      %v4897 = vsel %vm667, %v4891, %v4881
      %v4898 = vsel %vm667, %v4893, %v4883
      %v4899 = vadd.f32 %v4869, %v4894
      %v4900 = vadd.f32 %v4870, %v4895
      %v4901 = vadd.f32 %v4871, %v4896
      %v4902 = vadd.f32 %v4872, %v4897
      %v4903 = vadd.f32 %v4873, %v4898
      %4904 = vrot.lane.b32.xlu0 %v4834, 96
      %v4905 = vpop.permute.xlu0 %4904
      %4906 = vrot.lane.b32.xlu0 %v4836, 96
      %v4907 = vpop.permute.xlu0 %4906
      %4908 = vrot.lane.b32.xlu0 %v4838, 96
      %v4909 = vpop.permute.xlu0 %4908
      %4910 = vrot.lane.b32.xlu0 %v4840, 96
      %v4911 = vpop.permute.xlu0 %4910
      %4912 = vrot.lane.b32.xlu0 %v4842, 96
      %v4913 = vpop.permute.xlu0 %4912
      %4914 = vrot.lane.b32.xlu0 %v4835, 96
      %v4915 = vpop.permute.xlu0 %4914
      %4916 = vrot.lane.b32.xlu0 %v4837, 96
      %v4917 = vpop.permute.xlu0 %4916
      %4918 = vrot.lane.b32.xlu0 %v4839, 96
      %v4919 = vpop.permute.xlu0 %4918
      %4920 = vrot.lane.b32.xlu0 %v4841, 96
      %v4921 = vpop.permute.xlu0 %4920
      %4922 = vrot.lane.b32.xlu0 %v4843, 96
      %v4923 = vpop.permute.xlu0 %4922
      %v4924 = vsel %vm768, %v4915, %v4905
      %v4925 = vsel %vm768, %v4917, %v4907
      %v4926 = vsel %vm768, %v4919, %v4909
      %v4927 = vsel %vm768, %v4921, %v4911
      %v4928 = vsel %vm768, %v4923, %v4913
      %v4929 = vadd.f32 %v4899, %v4924
      %v4930 = vadd.f32 %v4900, %v4925
      %v4931 = vadd.f32 %v4901, %v4926
      %v4932 = vadd.f32 %v4902, %v4927
      %v4933 = vadd.f32 %v4903, %v4928
      %v4934 = vadd.f32 %v4929, %v4835
      %v4935 = vadd.f32 %v4930, %v4837
      %v4936 = vadd.f32 %v4931, %v4839
      %v4937 = vadd.f32 %v4932, %v4841
      %v4938 = vadd.f32 %v4933, %v4843
      %v4939 = vsel %vm566, %v4845, %v4855
      %v4940 = vsel %vm566, %v4847, %v4857
      %v4941 = vsel %vm566, %v4849, %v4859
      %v4942 = vsel %vm566, %v4851, %v4861
      %v4943 = vsel %vm566, %v4853, %v4863
      %v4944 = vadd.f32 %v4934, %v4939
      %v4945 = vadd.f32 %v4935, %v4940
      %v4946 = vadd.f32 %v4936, %v4941
      %v4947 = vadd.f32 %v4937, %v4942
      %v4948 = vadd.f32 %v4938, %v4943
      %v4949 = vsel %vm667, %v4875, %v4885
      %v4950 = vsel %vm667, %v4877, %v4887
      %v4951 = vsel %vm667, %v4879, %v4889
      %v4952 = vsel %vm667, %v4881, %v4891
      %v4953 = vsel %vm667, %v4883, %v4893
      %v4954 = vadd.f32 %v4944, %v4949
      %v4955 = vadd.f32 %v4945, %v4950
      %v4956 = vadd.f32 %v4946, %v4951
      %v4957 = vadd.f32 %v4947, %v4952
      %v4958 = vadd.f32 %v4948, %v4953
      %v4959 = vsel %vm768, %v4905, %v4915
      %v4960 = vsel %vm768, %v4907, %v4917
      %v4961 = vsel %vm768, %v4909, %v4919
      %v4962 = vsel %vm768, %v4911, %v4921
      %v4963 = vsel %vm768, %v4913, %v4923
      %v4964 = vadd.f32 %v4954, %v4959
      %v4965 = vadd.f32 %v4955, %v4960
      %v4966 = vadd.f32 %v4956, %v4961
      %v4967 = vadd.f32 %v4957, %v4962
      %v4968 = vadd.f32 %v4958, %v4963
      %v4969 = vmul.f32 %v4964, 0.125
      %v4970 = vmul.f32 %v4965, 0.125
      %v4971 = vmul.f32 %v4966, 0.125
      %v4972 = vmul.f32 %v4967, 0.125
      %v4973 = vmul.f32 %v4968, 0.125
      %v4974 = vld [vmem:[%s1 + $0x88] sm:$0xf]
      %v4975 = vld [vmem:[%s1 + $0x8c] sm:$0xf]
      %v4976 = vld [vmem:[%s1 + $0x90] sm:$0xf]
      %v4977 = vld [vmem:[%s1 + $0x94] sm:$0xf]
      %v4978 = vld [vmem:[%s1 + $0x98] sm:$0xf]
      %v4979 = vpack.c.bf16 %v4970, %v4969
      %v4980 = vpack.c.bf16 %v4972, %v4971
      %v4981 = vpack.c.bf16 %v4973, %v4973
      %v4982 = vld [vmem:[%s2 + $0x190] sm:$0xff]
      %v4983 = vld [vmem:[%s2 + $0x198] sm:$0xff]
      %v4984 = vld [vmem:[%s2 + $0x1a0] sm:$0xff]
      %v4985 = vld [vmem:[%s2 + $0x1a8] sm:$0xff]
      %v4986 = vld [vmem:[%s2 + $0x1b0] sm:$0xff]
      %4988 = vset.pattern.permute.xlu0 0
      %4989 = vperm.xlu0 %4988, %v4982
      %v4990 = vpop.permute.xlu0 %4989
      %4993 = vset.pattern.permute.xlu0 0
      %4994 = vperm.xlu0 %4993, %v4983
      %v4995 = vpop.permute.xlu0 %4994
      %4998 = vset.pattern.permute.xlu0 0
      %4999 = vperm.xlu0 %4998, %v4984
      %v5000 = vpop.permute.xlu0 %4999
      %5003 = vset.pattern.permute.xlu0 0
      %5004 = vperm.xlu0 %5003, %v4985
      %v5005 = vpop.permute.xlu0 %5004
      %5008 = vset.pattern.permute.xlu0 0
      %5009 = vperm.xlu0 %5008, %v4986
      %v5010 = vpop.permute.xlu0 %5009
      %v5017 = vunpack.c.l.b16 %v4974
      %v5018 = vunpack.c.l.b16 %v4975
      %v5019 = vunpack.c.l.b16 %v4976
      %v5020 = vunpack.c.l.b16 %v4977
      %v5021 = vunpack.c.l.b16 %v4978
      %v5022 = vpack.c.b16 %v5018, %v5017
      %v5023 = vpack.c.b16 %v5020, %v5019
      %v5024 = vpack.c.b16 %v5021, %v5021
      %v5026 = vsel %vm331, %v5022, 0
      %v5029 = vsel %vm331, %v5023, 0
      %v5032 = vsel %vm331, %v5024, 0
      %v5035 = vsel %vm356, %v4981, 0
      %5037 = vmatprep.subr.bf16.mxu0 0
      %5038 = vmatpush1.bf16.msra.mxu0 %v4979
      %5039 = vmatprep.subr.bf16.mxu0 0
      %5040 = vmatpush1.bf16.msra.mxu0 %v4980
      %5041 = vmatprep.subr.bf16.mxu0 0
      %5042 = vmatpush1.bf16.msra.mxu0 %v5035
      %5043 = vmatprep.subr.bf16.mxu0 0
      %5044 = vmatpush1.bf16.msra.mxu0 0
      %5045 = vmatprep.subr.bf16.mxu0 0
      %5046 = vmatpush1.bf16.msra.mxu0 0
      %5047 = vmatprep.subr.bf16.mxu0 0
      %5048 = vmatpush1.bf16.msra.mxu0 0
      %5049 = vmatprep.subr.bf16.mxu0 0
      %5050 = vmatpush1.bf16.msra.mxu0 0
      %5051 = vmatprep.subr.bf16.mxu0 0
      %5052 = vmatpush1.bf16.msra.mxu0 0
      %5053 = vmatprep.subr.bf16.mxu0 0
      %5054 = vmatpush1.bf16.msra.mxu0 0
      %5055 = vmatprep.subr.bf16.mxu0 0
      %5056 = vmatpush1.bf16.msra.mxu0 0
      %5057 = vmatprep.subr.bf16.mxu0 0
      %5058 = vmatpush1.bf16.msra.mxu0 0
      %5059 = vmatprep.subr.bf16.mxu0 0
      %5060 = vmatpush1.bf16.msra.mxu0 0
      %5061 = vmatprep.subr.bf16.mxu0 0
      %5062 = vmatpush1.bf16.msra.mxu0 0
      %5063 = vmatprep.subr.bf16.mxu0 0
      %5064 = vmatpush1.bf16.msra.mxu0 0
      %5065 = vmatprep.subr.bf16.mxu0 0
      %5066 = vmatpush1.bf16.msra.mxu0 0
      %5067 = vmatprep.subr.bf16.mxu0 0
      %5068 = vmatpush1.bf16.msra.mxu0 0
      %5069 = vmatprep.mubr.bf16.mxu0 0
      %5070 = vmatmul.mubr.bf16.gmra.mrb[0].mxu0 %v5026
      %v5071 = vpop.f32.mrb[0].mxu0
      %v5072 = vadd.f32 %v4990, %v5071
      %v5073 = vpop.f32.mrb[0].mxu0
      %v5074 = vpop.f32.mrb[0].mxu0
      %v5075 = vadd.f32 %v4995, %v5074
      %v5076 = vpop.f32.mrb[0].mxu0
      %5077 = vmatprep.mubr.bf16.mxu0 0
      %5078 = vmatmul.mubr.bf16.gmra.mrb[0].mxu0 %v5029
      %v5079 = vpop.f32.mrb[0].mxu0
      %v5080 = vadd.f32 %v5000, %v5079
      %v5081 = vpop.f32.mrb[0].mxu0
      %v5082 = vpop.f32.mrb[0].mxu0
      %v5083 = vadd.f32 %v5005, %v5082
      %v5084 = vpop.f32.mrb[0].mxu0
      %5085 = vmatprep.mubr.bf16.mxu0 0
      %5086 = vmatmul.mubr.bf16.gmra.mrb[0].mxu0 %v5032
      %v5087 = vpop.f32.mrb[0].mxu0
      %v5088 = vadd.f32 %v5010, %v5087
      %v5089 = vpop.f32.mrb[0].mxu0
      %v5090 = vpop.f32.mrb[0].mxu0
      %v5091 = vpop.f32.mrb[0].mxu0
      %5092 = vdwg.mxu0
      %vm5093 = vcmask 261120
      %5094 = vst.msk [vmem:[%s170] sm:$0xff] %vm5093, %v5072
      %5095 = vst.msk [vmem:[%s170 + $0x8] sm:$0xff] %vm5093, %v5075
      %5096 = vst.msk [vmem:[%s170 + $0x10] sm:$0xff] %vm5093, %v5080
      %5097 = vst.msk [vmem:[%s170 + $0x18] sm:$0xff] %vm5093, %v5083
      %5098 = vst.msk [vmem:[%s170 + $0x20] sm:$0xff] %vm5093, %v5088
      %p5099 = scmp.lt.s32.totalorder %s14, 1
      %s5100 = scalar_select %p5099, %s14, 1
      %s5101 = smul.addr %s5100, 5
      %s5102 = smul.addr %s5101, 8
      %s5103 = scalar_lea.vmem %s3, %s5102
      // Predicated region
      $region33: #{trajectory_synthesizer_att.1} parent=31 // pred_check
        %p5104 = pneg %p100
      $region34: #{trajectory_synthesizer_att.1} parent=31 // pred_check_branch
        %5106 = sbr.rel (%p5104) target = $region36
      $region35: #{trajectory_synthesizer_att.1} parent=31 // pred_region
        _
      $region36: #{trajectory_synthesizer_att.1} parent=31 // pred_fallthru
        _
    $region32: #{trajectory_synthesizer_att.1} parent=5 // pred_fallthru
      _
    %p5107 = scmp.le.s32.totalorder 2, %s9
    // Predicated region
    $region37: #{trajectory_synthesizer_att.1} parent=5 // pred_check
      %p5108 = pneg %p5107
    $region38: #{trajectory_synthesizer_att.1} parent=5 // pred_check_branch
      %5110 = sbr.rel (%p5108) target = $region40
    $region39: #{trajectory_synthesizer_att.1} parent=5 // pred_region
      %s5111 = ssub.s32 %s9, 2
      // Predicated region
      $region41: #{trajectory_synthesizer_att.1} parent=39 // pred_check
        %p5112 = pneg %p106
      $region42: #{trajectory_synthesizer_att.1} parent=39 // pred_check_branch
        %5114 = sbr.rel (%p5112) target = $region44
      $region43: #{trajectory_synthesizer_att.1} parent=39 // pred_region
        %p5115 = scmp.lt.s32.totalorder %s15, 1
        %s5116 = scalar_select %p5115, %s15, 1
        %s5117 = smul.addr %s5116, 5
        %s5118 = smul.addr %s5117, 8
        %s5119 = scalar_lea.vmem %s3, %s5118
      $region44: #{trajectory_synthesizer_att.1} parent=39 // pred_fallthru
        _
    $region40: #{trajectory_synthesizer_att.1} parent=5 // pred_fallthru
      _
  $region6: #{trajectory_synthesizer_att.1} parent=0 // loop_footer
    %s13 = sadd.s32 1, %s9
  $region7: #{trajectory_synthesizer_att.1} parent=0 // loop_footer_branch
    %8 = sbr.rel target = $region3
  $region8: #{trajectory_synthesizer_att.1} parent=0 // loop_exit
    _

</llo_original>
